<compile_context>
chip_gen: v7x
topology: tpu7x:2x2x1
jax: 0.10.0
libtpu: 0.0.40
codegen_flags: <defaults>
</compile_context>

<pallas_src>
import math

import jax
import jax.numpy as jnp
from jax.experimental import pallas as pl
from jax.experimental.pallas import tpu as pltpu


def _round_up(x, m):
    return ((x + m - 1) // m) * m


def _vmem_padded_bytes(shape, dtype):
    """Bytes an array occupies in VMEM ((sublane, 128-lane) tile padding)."""
    itemsize = jnp.dtype(dtype).itemsize
    if len(shape) == 0:
        rows, cols = 1, 1
    elif len(shape) == 1:
        rows, cols = 1, shape[0]
    else:
        rows, cols = math.prod(shape[:-1]), shape[-1]
    sublane = 8 * max(1, 4 // itemsize)          # 8 for f32, 16 for bf16
    return _round_up(rows, sublane) * _round_up(cols, 128) * itemsize


def _elementwise_dtype():
    """bf16 VPU/EUP exists on v6e/v7x; v5e and older do elementwise math in f32."""
    try:
        kind = jax.devices()[0].device_kind.lower()
    except Exception:
        return jnp.float32
    if any(tag in kind for tag in ("v2", "v3", "v4", "v5")):
        return jnp.float32
    return jnp.bfloat16


def _choose_tiling(m, tm_max):
    """Pick (tm, m_pad): tm a multiple of 128 that divides m_pad, >=2 grid steps when possible."""
    tm_max = max(128, (tm_max // 128) * 128)
    m_min = _round_up(max(m, 1), 128)
    if m_min == 128:                      # tiny batch: single 128-row tile
        return 128, 128
    if m_min <= 2 * tm_max:               # medium batch: exactly 2 steps (one per v7x TC)
        m_pad = _round_up(m_min, 256)
        return m_pad // 2, m_pad
    m_pad = _round_up(m_min, tm_max)      # large batch: tm_max-row tiles
    return tm_max, m_pad


def _make_mlp_kernel(num_layers, ew_dtype):
    """Kernel for a num_layers-deep MLP in feature-major layout: Linear->ELU ... Linear->ReLU."""

    def kernel(x_ref, *refs):
        o_ref = refs[-1]
        h = x_ref[...]                                        # (c_in, tm), MXU dtype
        for li in range(num_layers):
            w = refs[2 * li][...]                             # (c_out, c_in), MXU dtype
            b = refs[2 * li + 1][...]                         # (c_out, 1),   ew_dtype
            acc = jnp.dot(w, h.astype(w.dtype),
                          preferred_element_type=jnp.float32)  # (c_out, tm) f32 accumulation
            h = acc.astype(ew_dtype) + b
            if li < num_layers - 1:
                # ELU(alpha=1): x if x > 0 else exp(x) - 1.  No clamp needed: the discarded
                # branch is +inf for large x (never NaN), so the where keeps it safe.
                h = jnp.where(h > 0, h, jnp.exp(h) - 1.0)
            else:
                h = jnp.maximum(h, 0.0)                       # default final act: ReLU
        o_ref[...] = h.astype(o_ref.dtype)                    # (out_dim, tm): lane-dense store

    return kernel


def mlp_forward(x, weights, biases, *, tm=1024, use_bf16=True):
    """Fused MLP forward.

    x:        (..., in_dim) float32
    weights:  list of (c_out, c_in) arrays (native nn.Linear layout)
    biases:   list of (c_out,) arrays
    Returns   (..., out_dim) float32
    """
    in_dim = weights[0].shape[1]
    out_dim = weights[-1].shape[0]
    lead_shape = x.shape[:-1]

    mxu_dtype = jnp.bfloat16 if use_bf16 else jnp.float32
    ew_dtype = _elementwise_dtype() if use_bf16 else jnp.float32

    # Feature-major (lane-dense) input: (in_dim, M); cast to the MXU dtype once here.
    x2d = x.reshape(-1, in_dim).T.astype(mxu_dtype)
    m = x2d.shape[1]
    tm_eff, m_pad = _choose_tiling(m, tm)
    if m_pad != m:
        x2d = jnp.pad(x2d, ((0, 0), (0, m_pad - m)))

    ws = [w.astype(mxu_dtype) for w in weights]
    bs = [b.reshape(-1, 1).astype(ew_dtype) for b in biases]

    # Whole-array, grid-invariant blocks: weights/biases stay resident in VMEM.
    # TODO(synk): for MLP configs whose total weights exceed ~16 MiB, tile over c_in/c_out
    # (and single-buffer the invariant blocks) instead of keeping them fully resident.
    def full(arr):
        return pl.BlockSpec(arr.shape, lambda i: (0, 0))

    wb_args, wb_specs = [], []
    for w, b in zip(ws, bs):
        wb_args += [w, b]
        wb_specs += [full(w), full(b)]

    # Explicit VMEM budget from the actual (lane-padded) buffer sizes + headroom.
    widest = max(w.shape[0] for w in ws)
    vmem = 2 * (_vmem_padded_bytes((in_dim, tm_eff), mxu_dtype)
                + _vmem_padded_bytes((out_dim, tm_eff), jnp.float32))
    vmem += 2 * sum(_vmem_padded_bytes(a.shape, a.dtype) for a in wb_args)
    vmem += 6 * _vmem_padded_bytes((widest, tm_eff), jnp.float32)   # compiler temporaries
    vmem_limit = int(min(max(vmem + (4 << 20), 32 << 20), 64 << 20))

    out2d = pl.pallas_call(
        _make_mlp_kernel(len(ws), ew_dtype),
        out_shape=jax.ShapeDtypeStruct((out_dim, m_pad), jnp.float32),
        grid_spec=pltpu.PrefetchScalarGridSpec(
            num_scalar_prefetch=0,
            grid=(m_pad // tm_eff,),
            in_specs=[pl.BlockSpec((in_dim, tm_eff), lambda i: (0, i))] + wb_specs,
            out_specs=pl.BlockSpec((out_dim, tm_eff), lambda i: (0, i)),
        ),
        compiler_params=pltpu.CompilerParams(
            dimension_semantics=("parallel",),
            vmem_limit_bytes=vmem_limit),
    )(x2d, *wb_args)

    out = out2d[:, :m].T                       # (M, out_dim), strip row padding
    return out.reshape(*lead_shape, out_dim)


def init_params(key, size):
    """Deterministic params matching nn.Linear default init; weights in (c_out, c_in) layout."""
    ws, bs = [], []
    keys = jax.random.split(key, 2 * (len(size) - 1))
    for i in range(len(size) - 1):
        cin, cout = size[i], size[i + 1]
        bound = 1.0 / float(cin) ** 0.5
        ws.append(jax.random.uniform(keys[2 * i], (cout, cin), jnp.float32, -bound, bound))
        bs.append(jax.random.uniform(keys[2 * i + 1], (cout,), jnp.float32, -bound, bound))
    return ws, bs


def reference_forward(x, weights, biases):
    """Pure-JAX f32 reference of the same forward (Linear->ELU ... Linear->ReLU)."""
    h = x.reshape(-1, weights[0].shape[1]).astype(jnp.float32)
    n = len(weights)
    for i, (w, b) in enumerate(zip(weights, biases)):
        h = h @ w.T + b
        if i < n - 1:
            h = jnp.where(h > 0.0, h, jnp.expm1(h))      # ELU
        else:
            h = jax.nn.relu(h)                           # default final act: ReLU
    return h.reshape(*x.shape[:-1], weights[-1].shape[0])


if __name__ == "__main__":
    # TODO(synk): the module accepts an arbitrary `act` nn.Module; only the default ReLU is implemented.
    size = [2, 1024, 1]

    key = jax.random.PRNGKey(0)
    pkey, xkey = jax.random.split(key)
    ws, bs = init_params(pkey, size)

    # batch=37 exercises the tiny-batch single-tile path (row padding);
    # batch=300 exercises padding + a 2-step row grid (one tile per v7x TensorCore).
    for batch in (37, 300):
        x = jax.random.normal(jax.random.fold_in(xkey, batch), (batch, size[0]), jnp.float32)
        out = jax.block_until_ready(mlp_forward(x, ws, bs))
        ref = jax.block_until_ready(reference_forward(x, ws, bs))
        assert out.shape == (batch, size[-1])
        # bf16 MXU operands (and bf16 elementwise on v6e/v7x) vs the f32 reference.
        assert jnp.allclose(out, ref, atol=3e-2, rtol=3e-2), f"mismatch vs reference (batch={batch})"

    print("KERNEL_OK")
</pallas_src>

<mosaic_0001>
module attributes {stable_mosaic.version = 11 : i64} {
  func.func @kernel(%arg0: i32, %arg1: memref<2x128xbf16, #tpu.memory_space<vmem>>, %arg2: memref<1024x2xbf16, #tpu.memory_space<vmem>>, %arg3: memref<1024x1xbf16, #tpu.memory_space<vmem>>, %arg4: memref<1x1024xbf16, #tpu.memory_space<vmem>>, %arg5: memref<1x1xbf16, #tpu.memory_space<vmem>>, %arg6: memref<1x128xf32, #tpu.memory_space<vmem>>) attributes {dimension_semantics = [#tpu.dimension_semantics<parallel>], iteration_bounds = array<i64: 1>, scalar_prefetch = 0 : i64, scratch_operands = 0 : i64, tpu.core_type = #tpu.core_type<tc>, window_params = [{transform_indices = @transform_0, window_bounds = array<i64: 2, 128>}, {pipeline_mode = #tpu.pipeline_mode<synchronous>, transform_indices = @transform_1, window_bounds = array<i64: 1024, 2>}, {pipeline_mode = #tpu.pipeline_mode<synchronous>, transform_indices = @transform_2, window_bounds = array<i64: 1024, 1>}, {pipeline_mode = #tpu.pipeline_mode<synchronous>, transform_indices = @transform_3, window_bounds = array<i64: 1, 1024>}, {pipeline_mode = #tpu.pipeline_mode<synchronous>, transform_indices = @transform_4, window_bounds = array<i64: 1, 1>}, {transform_indices = @transform_5, window_bounds = array<i64: 1, 128>}]} {
    %c0 = arith.constant 0 : index
    %c0_0 = arith.constant 0 : index
    %0 = vector.load %arg1[%c0, %c0_0] : memref<2x128xbf16, #tpu.memory_space<vmem>>, vector<2x128xbf16>
    %c0_1 = arith.constant 0 : index
    %c0_2 = arith.constant 0 : index
    %1 = vector.load %arg2[%c0_1, %c0_2] : memref<1024x2xbf16, #tpu.memory_space<vmem>>, vector<1024x2xbf16>
    %c0_3 = arith.constant 0 : index
    %c0_4 = arith.constant 0 : index
    %2 = vector.load %arg3[%c0_3, %c0_4] : memref<1024x1xbf16, #tpu.memory_space<vmem>>, vector<1024x1xbf16>
    %cst = arith.constant dense<0.000000e+00> : vector<1024x128xf32>
    %3 = tpu.matmul %1, %0, %cst {dimension_numbers = #tpu.dot_dimension_numbers<[1], [0], [0], [1], [0, 0, 1, 1], [], []>} : vector<1024x2xbf16>, vector<2x128xbf16>, vector<1024x128xf32> -> vector<1024x128xf32>
    %4 = arith.truncf %3 : vector<1024x128xf32> to vector<1024x128xbf16>
    %5 = vector.broadcast %2 : vector<1024x1xbf16> to vector<1024x128xbf16>
    %6 = arith.addf %4, %5 : vector<1024x128xbf16>
    %cst_5 = arith.constant 0.000000e+00 : bf16
    %7 = vector.broadcast %cst_5 : bf16 to vector<1024x128xbf16>
    %8 = arith.cmpf ogt, %6, %7 : vector<1024x128xbf16>
    %9 = math.exp %6 : vector<1024x128xbf16>
    %cst_6 = arith.constant 1.000000e+00 : bf16
    %10 = vector.broadcast %cst_6 : bf16 to vector<1024x128xbf16>
    %11 = arith.subf %9, %10 : vector<1024x128xbf16>
    %12 = arith.select %8, %6, %11 : vector<1024x128xi1>, vector<1024x128xbf16>
    %c0_7 = arith.constant 0 : index
    %c0_8 = arith.constant 0 : index
    %13 = vector.load %arg4[%c0_7, %c0_8] : memref<1x1024xbf16, #tpu.memory_space<vmem>>, vector<1x1024xbf16>
    %c0_9 = arith.constant 0 : index
    %c0_10 = arith.constant 0 : index
    %14 = vector.load %arg5[%c0_9, %c0_10] : memref<1x1xbf16, #tpu.memory_space<vmem>>, vector<1x1xbf16>
    %cst_11 = arith.constant dense<0.000000e+00> : vector<1x128xf32>
    %15 = tpu.matmul %13, %12, %cst_11 {dimension_numbers = #tpu.dot_dimension_numbers<[1], [0], [0], [1], [0, 0, 1, 1], [], []>} : vector<1x1024xbf16>, vector<1024x128xbf16>, vector<1x128xf32> -> vector<1x128xf32>
    %16 = arith.truncf %15 : vector<1x128xf32> to vector<1x128xbf16>
    %17 = vector.broadcast %14 : vector<1x1xbf16> to vector<1x128xbf16>
    %18 = arith.addf %16, %17 : vector<1x128xbf16>
    %cst_12 = arith.constant 0.000000e+00 : bf16
    %19 = vector.broadcast %cst_12 : bf16 to vector<1x128xbf16>
    %20 = arith.maximumf %18, %19 : vector<1x128xbf16>
    %21 = arith.extf %20 : vector<1x128xbf16> to vector<1x128xf32>
    %c0_13 = arith.constant 0 : index
    %c0_14 = arith.constant 0 : index
    %22 = vector.load %arg6[%c0_13, %c0_14] : memref<1x128xf32, #tpu.memory_space<vmem>>, vector<1x128xf32>
    tpu.vector_store %arg6[%c0_13, %c0_14], %21 {strides = array<i32>} : memref<1x128xf32, #tpu.memory_space<vmem>>, vector<1x128xf32>,
    return
  }
  func.func @transform_0(%arg0: i32) -> (i32, i32) {
    %c0_i32 = arith.constant 0 : i32
    %c0_i32_0 = arith.constant 0 : i32
    return %c0_i32, %arg0 : i32, i32
  }
  func.func @transform_1(%arg0: i32) -> (i32, i32) {
    %c0_i32 = arith.constant 0 : i32
    %c0_i32_0 = arith.constant 0 : i32
    %c0_i32_1 = arith.constant 0 : i32
    return %c0_i32, %c0_i32_0 : i32, i32
  }
  func.func @transform_2(%arg0: i32) -> (i32, i32) {
    %c0_i32 = arith.constant 0 : i32
    %c0_i32_0 = arith.constant 0 : i32
    %c0_i32_1 = arith.constant 0 : i32
    return %c0_i32, %c0_i32_0 : i32, i32
  }
  func.func @transform_3(%arg0: i32) -> (i32, i32) {
    %c0_i32 = arith.constant 0 : i32
    %c0_i32_0 = arith.constant 0 : i32
    %c0_i32_1 = arith.constant 0 : i32
    return %c0_i32, %c0_i32_0 : i32, i32
  }
  func.func @transform_4(%arg0: i32) -> (i32, i32) {
    %c0_i32 = arith.constant 0 : i32
    %c0_i32_0 = arith.constant 0 : i32
    %c0_i32_1 = arith.constant 0 : i32
    return %c0_i32, %c0_i32_0 : i32, i32
  }
  func.func @transform_5(%arg0: i32) -> (i32, i32) {
    %c0_i32 = arith.constant 0 : i32
    %c0_i32_0 = arith.constant 0 : i32
    return %c0_i32, %arg0 : i32, i32
  }
}

</mosaic_0001>

<llo_original>
// kernel: tpu_custom_call.1
$region0: #{tpu_custom_call.1}
  #allocation0 [shape = 'u32[]', space=smem, size = 0x4, offset = 0x4, fixed_abs, tag = 'smem constant byte address 0x4 - core index']
  #allocation1 [shape = 'u32[144,128]{1,0:T(1,128)}', space=vmem, size = 0x12000, scoped, tag = 'internal scratch']
  #allocation2 [shape = 'bf16[1,1]{1,0:T(2,128)S(1)}', space=vmem, size = 0x200, scoped, tag = 'scoped memory for tpu_custom_call.1']
  %s0 = inlined_call_operand.vmem [shape: bf16[2,128], index: 0, kind: input, shape index: {}]
  %s1 = inlined_call_operand.vmem [shape: bf16[1024,2], index: 1, kind: input, shape index: {}]
  %s2 = inlined_call_operand.vmem [shape: bf16[1024,1], index: 2, kind: input, shape index: {}]
  %s3 = inlined_call_operand.vmem [shape: bf16[1,1024], index: 3, kind: input, shape index: {}]
  %s4 = inlined_call_operand.<no memory space> [shape: bf16[1,1], index: 4, kind: input, shape index: {}]
  %s5 = inlined_call_operand.hbm [shape: f32[1,128], index: 5, kind: output, shape index: {}]
  %s6 = sld [smem:[#allocation0]]
  $region30: #{tpu_custom_call.1} parent=0
    _
  %s8 = ssub.s32 1, %s6
  %s9 = scalar_select 0, %s8, %s6
  %v10 = vstv %s4
  %11 = vst [vmem:[#allocation2] sm:$0x1] %v10
  $region1: #{tpu_custom_call.1} parent=0
    #allocation3 [shape = 'u8[512]{0}', space=vmem, size = 0x400, scoped, tag = 'output window, operand 0, single buffered']
    #allocation4 [shape = 's32[1]{0}', space=sflag, size = 0x4, scoped, tag = 'scoped memory for tpu_custom_call.1']
    %12 = vsyncpa [#allocation4], 0
    // Predicated region
    $region2: #{tpu_custom_call.1} parent=1 // pred_check
      _
    $region3: #{tpu_custom_call.1} parent=1 // pred_check_branch
      %14 = sbr.rel (0) target = $region5
    $region4: #{tpu_custom_call.1} parent=1 // pred_region
      _
    $region5: #{tpu_custom_call.1} parent=1 // pred_fallthru
      _
    // Predicated region
    $region6: #{tpu_custom_call.1} parent=1 // pred_check
      _
    $region7: #{tpu_custom_call.1} parent=1 // pred_check_branch
      %16 = sbr.rel (0) target = $region9
    $region8: #{tpu_custom_call.1} parent=1 // pred_region
      _
    $region9: #{tpu_custom_call.1} parent=1 // pred_fallthru
      _
    // Predicated region
    $region10: #{tpu_custom_call.1} parent=1 // pred_check
      _
    $region11: #{tpu_custom_call.1} parent=1 // pred_check_branch
      %18 = sbr.rel (0) target = $region13
    $region12: #{tpu_custom_call.1} parent=1 // pred_region
      _
    $region13: #{tpu_custom_call.1} parent=1 // pred_fallthru
      _
    // Predicated region
    $region14: #{tpu_custom_call.1} parent=1 // pred_check
      _
    $region15: #{tpu_custom_call.1} parent=1 // pred_check_branch
      %20 = sbr.rel (0) target = $region17
    $region16: #{tpu_custom_call.1} parent=1 // pred_region
      _
    $region17: #{tpu_custom_call.1} parent=1 // pred_fallthru
      _
    // Predicated region
    $region18: #{tpu_custom_call.1} parent=1 // pred_check
      _
    $region19: #{tpu_custom_call.1} parent=1 // pred_check_branch
      %22 = sbr.rel (0) target = $region21
    $region20: #{tpu_custom_call.1} parent=1 // pred_region
      _
    $region21: #{tpu_custom_call.1} parent=1 // pred_fallthru
      _
    %v25 = vld [vmem:[%s0] sm:$0x1]
    %v26 = vld [vmem:[%s1] sm:$0xf]
    %v27 = vld [vmem:[%s1 + $0x4] sm:$0xf]
    %v28 = vld [vmem:[%s1 + $0x8] sm:$0xf]
    %v29 = vld [vmem:[%s1 + $0xc] sm:$0xf]
    %v30 = vld [vmem:[%s1 + $0x10] sm:$0xf]
    %v31 = vld [vmem:[%s1 + $0x14] sm:$0xf]
    %v32 = vld [vmem:[%s1 + $0x18] sm:$0xf]
    %v33 = vld [vmem:[%s1 + $0x1c] sm:$0xf]
    %v34 = vld [vmem:[%s1 + $0x20] sm:$0xf]
    %v35 = vld [vmem:[%s1 + $0x24] sm:$0xf]
    %v36 = vld [vmem:[%s1 + $0x28] sm:$0xf]
    %v37 = vld [vmem:[%s1 + $0x2c] sm:$0xf]
    %v38 = vld [vmem:[%s1 + $0x30] sm:$0xf]
    %v39 = vld [vmem:[%s1 + $0x34] sm:$0xf]
    %v40 = vld [vmem:[%s1 + $0x38] sm:$0xf]
    %v41 = vld [vmem:[%s1 + $0x3c] sm:$0xf]
    %v42 = vld [vmem:[%s1 + $0x40] sm:$0xf]
    %v43 = vld [vmem:[%s1 + $0x44] sm:$0xf]
    %v44 = vld [vmem:[%s1 + $0x48] sm:$0xf]
    %v45 = vld [vmem:[%s1 + $0x4c] sm:$0xf]
    %v46 = vld [vmem:[%s1 + $0x50] sm:$0xf]
    %v47 = vld [vmem:[%s1 + $0x54] sm:$0xf]
    %v48 = vld [vmem:[%s1 + $0x58] sm:$0xf]
    %v49 = vld [vmem:[%s1 + $0x5c] sm:$0xf]
    %v50 = vld [vmem:[%s1 + $0x60] sm:$0xf]
    %v51 = vld [vmem:[%s1 + $0x64] sm:$0xf]
    %v52 = vld [vmem:[%s1 + $0x68] sm:$0xf]
    %v53 = vld [vmem:[%s1 + $0x6c] sm:$0xf]
    %v54 = vld [vmem:[%s1 + $0x70] sm:$0xf]
    %v55 = vld [vmem:[%s1 + $0x74] sm:$0xf]
    %v56 = vld [vmem:[%s1 + $0x78] sm:$0xf]
    %v57 = vld [vmem:[%s1 + $0x7c] sm:$0xf]
    %v58 = vld [vmem:[%s1 + $0x80] sm:$0xf]
    %v59 = vld [vmem:[%s1 + $0x84] sm:$0xf]
    %v60 = vld [vmem:[%s1 + $0x88] sm:$0xf]
    %v61 = vld [vmem:[%s1 + $0x8c] sm:$0xf]
    %v62 = vld [vmem:[%s1 + $0x90] sm:$0xf]
    %v63 = vld [vmem:[%s1 + $0x94] sm:$0xf]
    %v64 = vld [vmem:[%s1 + $0x98] sm:$0xf]
    %v65 = vld [vmem:[%s1 + $0x9c] sm:$0xf]
    %v66 = vld [vmem:[%s1 + $0xa0] sm:$0xf]
    %v67 = vld [vmem:[%s1 + $0xa4] sm:$0xf]
    %v68 = vld [vmem:[%s1 + $0xa8] sm:$0xf]
    %v69 = vld [vmem:[%s1 + $0xac] sm:$0xf]
    %v70 = vld [vmem:[%s1 + $0xb0] sm:$0xf]
    %v71 = vld [vmem:[%s1 + $0xb4] sm:$0xf]
    %v72 = vld [vmem:[%s1 + $0xb8] sm:$0xf]
    %v73 = vld [vmem:[%s1 + $0xbc] sm:$0xf]
    %v74 = vld [vmem:[%s1 + $0xc0] sm:$0xf]
    %v75 = vld [vmem:[%s1 + $0xc4] sm:$0xf]
    %v76 = vld [vmem:[%s1 + $0xc8] sm:$0xf]
    %v77 = vld [vmem:[%s1 + $0xcc] sm:$0xf]
    %v78 = vld [vmem:[%s1 + $0xd0] sm:$0xf]
    %v79 = vld [vmem:[%s1 + $0xd4] sm:$0xf]
    %v80 = vld [vmem:[%s1 + $0xd8] sm:$0xf]
    %v81 = vld [vmem:[%s1 + $0xdc] sm:$0xf]
    %v82 = vld [vmem:[%s1 + $0xe0] sm:$0xf]
    %v83 = vld [vmem:[%s1 + $0xe4] sm:$0xf]
    %v84 = vld [vmem:[%s1 + $0xe8] sm:$0xf]
    %v85 = vld [vmem:[%s1 + $0xec] sm:$0xf]
    %v86 = vld [vmem:[%s1 + $0xf0] sm:$0xf]
    %v87 = vld [vmem:[%s1 + $0xf4] sm:$0xf]
    %v88 = vld [vmem:[%s1 + $0xf8] sm:$0xf]
    %v89 = vld [vmem:[%s1 + $0xfc] sm:$0xf]
    %v90 = vld [vmem:[%s1 + $0x100] sm:$0xf]
    %v91 = vld [vmem:[%s1 + $0x104] sm:$0xf]
    %v92 = vld [vmem:[%s1 + $0x108] sm:$0xf]
    %v93 = vld [vmem:[%s1 + $0x10c] sm:$0xf]
    %v94 = vld [vmem:[%s1 + $0x110] sm:$0xf]
    %v95 = vld [vmem:[%s1 + $0x114] sm:$0xf]
    %v96 = vld [vmem:[%s1 + $0x118] sm:$0xf]
    %v97 = vld [vmem:[%s1 + $0x11c] sm:$0xf]
    %v98 = vld [vmem:[%s1 + $0x120] sm:$0xf]
    %v99 = vld [vmem:[%s1 + $0x124] sm:$0xf]
    %v100 = vld [vmem:[%s1 + $0x128] sm:$0xf]
    %v101 = vld [vmem:[%s1 + $0x12c] sm:$0xf]
    %v102 = vld [vmem:[%s1 + $0x130] sm:$0xf]
    %v103 = vld [vmem:[%s1 + $0x134] sm:$0xf]
    %v104 = vld [vmem:[%s1 + $0x138] sm:$0xf]
    %v105 = vld [vmem:[%s1 + $0x13c] sm:$0xf]
    %v106 = vld [vmem:[%s1 + $0x140] sm:$0xf]
    %v107 = vld [vmem:[%s1 + $0x144] sm:$0xf]
    %v108 = vld [vmem:[%s1 + $0x148] sm:$0xf]
    %v109 = vld [vmem:[%s1 + $0x14c] sm:$0xf]
    %v110 = vld [vmem:[%s1 + $0x150] sm:$0xf]
    %v111 = vld [vmem:[%s1 + $0x154] sm:$0xf]
    %v112 = vld [vmem:[%s1 + $0x158] sm:$0xf]
    %v113 = vld [vmem:[%s1 + $0x15c] sm:$0xf]
    %v114 = vld [vmem:[%s1 + $0x160] sm:$0xf]
    %v115 = vld [vmem:[%s1 + $0x164] sm:$0xf]
    %v116 = vld [vmem:[%s1 + $0x168] sm:$0xf]
    %v117 = vld [vmem:[%s1 + $0x16c] sm:$0xf]
    %v118 = vld [vmem:[%s1 + $0x170] sm:$0xf]
    %v119 = vld [vmem:[%s1 + $0x174] sm:$0xf]
    %v120 = vld [vmem:[%s1 + $0x178] sm:$0xf]
    %v121 = vld [vmem:[%s1 + $0x17c] sm:$0xf]
    %v122 = vld [vmem:[%s1 + $0x180] sm:$0xf]
    %v123 = vld [vmem:[%s1 + $0x184] sm:$0xf]
    %v124 = vld [vmem:[%s1 + $0x188] sm:$0xf]
    %v125 = vld [vmem:[%s1 + $0x18c] sm:$0xf]
    %v126 = vld [vmem:[%s1 + $0x190] sm:$0xf]
    %v127 = vld [vmem:[%s1 + $0x194] sm:$0xf]
    %v128 = vld [vmem:[%s1 + $0x198] sm:$0xf]
    %v129 = vld [vmem:[%s1 + $0x19c] sm:$0xf]
    %v130 = vld [vmem:[%s1 + $0x1a0] sm:$0xf]
    %v131 = vld [vmem:[%s1 + $0x1a4] sm:$0xf]
    %v132 = vld [vmem:[%s1 + $0x1a8] sm:$0xf]
    %v133 = vld [vmem:[%s1 + $0x1ac] sm:$0xf]
    %v134 = vld [vmem:[%s1 + $0x1b0] sm:$0xf]
    %v135 = vld [vmem:[%s1 + $0x1b4] sm:$0xf]
    %v136 = vld [vmem:[%s1 + $0x1b8] sm:$0xf]
    %v137 = vld [vmem:[%s1 + $0x1bc] sm:$0xf]
    %v138 = vld [vmem:[%s1 + $0x1c0] sm:$0xf]
    %v139 = vld [vmem:[%s1 + $0x1c4] sm:$0xf]
    %v140 = vld [vmem:[%s1 + $0x1c8] sm:$0xf]
    %v141 = vld [vmem:[%s1 + $0x1cc] sm:$0xf]
    %v142 = vld [vmem:[%s1 + $0x1d0] sm:$0xf]
    %v143 = vld [vmem:[%s1 + $0x1d4] sm:$0xf]
    %v144 = vld [vmem:[%s1 + $0x1d8] sm:$0xf]
    %v145 = vld [vmem:[%s1 + $0x1dc] sm:$0xf]
    %v146 = vld [vmem:[%s1 + $0x1e0] sm:$0xf]
    %v147 = vld [vmem:[%s1 + $0x1e4] sm:$0xf]
    %v148 = vld [vmem:[%s1 + $0x1e8] sm:$0xf]
    %v149 = vld [vmem:[%s1 + $0x1ec] sm:$0xf]
    %v150 = vld [vmem:[%s1 + $0x1f0] sm:$0xf]
    %v151 = vld [vmem:[%s1 + $0x1f4] sm:$0xf]
    %v152 = vld [vmem:[%s1 + $0x1f8] sm:$0xf]
    %v153 = vld [vmem:[%s1 + $0x1fc] sm:$0xf]
    %v154 = vld [vmem:[%s2] sm:$0xf]
    %v155 = vld [vmem:[%s2 + $0x4] sm:$0xf]
    %v156 = vld [vmem:[%s2 + $0x8] sm:$0xf]
    %v157 = vld [vmem:[%s2 + $0xc] sm:$0xf]
    %v158 = vld [vmem:[%s2 + $0x10] sm:$0xf]
    %v159 = vld [vmem:[%s2 + $0x14] sm:$0xf]
    %v160 = vld [vmem:[%s2 + $0x18] sm:$0xf]
    %v161 = vld [vmem:[%s2 + $0x1c] sm:$0xf]
    %v162 = vld [vmem:[%s2 + $0x20] sm:$0xf]
    %v163 = vld [vmem:[%s2 + $0x24] sm:$0xf]
    %v164 = vld [vmem:[%s2 + $0x28] sm:$0xf]
    %v165 = vld [vmem:[%s2 + $0x2c] sm:$0xf]
    %v166 = vld [vmem:[%s2 + $0x30] sm:$0xf]
    %v167 = vld [vmem:[%s2 + $0x34] sm:$0xf]
    %v168 = vld [vmem:[%s2 + $0x38] sm:$0xf]
    %v169 = vld [vmem:[%s2 + $0x3c] sm:$0xf]
    %v170 = vld [vmem:[%s2 + $0x40] sm:$0xf]
    %v171 = vld [vmem:[%s2 + $0x44] sm:$0xf]
    %v172 = vld [vmem:[%s2 + $0x48] sm:$0xf]
    %v173 = vld [vmem:[%s2 + $0x4c] sm:$0xf]
    %v174 = vld [vmem:[%s2 + $0x50] sm:$0xf]
    %v175 = vld [vmem:[%s2 + $0x54] sm:$0xf]
    %v176 = vld [vmem:[%s2 + $0x58] sm:$0xf]
    %v177 = vld [vmem:[%s2 + $0x5c] sm:$0xf]
    %v178 = vld [vmem:[%s2 + $0x60] sm:$0xf]
    %v179 = vld [vmem:[%s2 + $0x64] sm:$0xf]
    %v180 = vld [vmem:[%s2 + $0x68] sm:$0xf]
    %v181 = vld [vmem:[%s2 + $0x6c] sm:$0xf]
    %v182 = vld [vmem:[%s2 + $0x70] sm:$0xf]
    %v183 = vld [vmem:[%s2 + $0x74] sm:$0xf]
    %v184 = vld [vmem:[%s2 + $0x78] sm:$0xf]
    %v185 = vld [vmem:[%s2 + $0x7c] sm:$0xf]
    %v186 = vld [vmem:[%s2 + $0x80] sm:$0xf]
    %v187 = vld [vmem:[%s2 + $0x84] sm:$0xf]
    %v188 = vld [vmem:[%s2 + $0x88] sm:$0xf]
    %v189 = vld [vmem:[%s2 + $0x8c] sm:$0xf]
    %v190 = vld [vmem:[%s2 + $0x90] sm:$0xf]
    %v191 = vld [vmem:[%s2 + $0x94] sm:$0xf]
    %v192 = vld [vmem:[%s2 + $0x98] sm:$0xf]
    %v193 = vld [vmem:[%s2 + $0x9c] sm:$0xf]
    %v194 = vld [vmem:[%s2 + $0xa0] sm:$0xf]
    %v195 = vld [vmem:[%s2 + $0xa4] sm:$0xf]
    %v196 = vld [vmem:[%s2 + $0xa8] sm:$0xf]
    %v197 = vld [vmem:[%s2 + $0xac] sm:$0xf]
    %v198 = vld [vmem:[%s2 + $0xb0] sm:$0xf]
    %v199 = vld [vmem:[%s2 + $0xb4] sm:$0xf]
    %v200 = vld [vmem:[%s2 + $0xb8] sm:$0xf]
    %v201 = vld [vmem:[%s2 + $0xbc] sm:$0xf]
    %v202 = vld [vmem:[%s2 + $0xc0] sm:$0xf]
    %v203 = vld [vmem:[%s2 + $0xc4] sm:$0xf]
    %v204 = vld [vmem:[%s2 + $0xc8] sm:$0xf]
    %v205 = vld [vmem:[%s2 + $0xcc] sm:$0xf]
    %v206 = vld [vmem:[%s2 + $0xd0] sm:$0xf]
    %v207 = vld [vmem:[%s2 + $0xd4] sm:$0xf]
    %v208 = vld [vmem:[%s2 + $0xd8] sm:$0xf]
    %v209 = vld [vmem:[%s2 + $0xdc] sm:$0xf]
    %v210 = vld [vmem:[%s2 + $0xe0] sm:$0xf]
    %v211 = vld [vmem:[%s2 + $0xe4] sm:$0xf]
    %v212 = vld [vmem:[%s2 + $0xe8] sm:$0xf]
    %v213 = vld [vmem:[%s2 + $0xec] sm:$0xf]
    %v214 = vld [vmem:[%s2 + $0xf0] sm:$0xf]
    %v215 = vld [vmem:[%s2 + $0xf4] sm:$0xf]
    %v216 = vld [vmem:[%s2 + $0xf8] sm:$0xf]
    %v217 = vld [vmem:[%s2 + $0xfc] sm:$0xf]
    %v218 = vld [vmem:[%s2 + $0x100] sm:$0xf]
    %v219 = vld [vmem:[%s2 + $0x104] sm:$0xf]
    %v220 = vld [vmem:[%s2 + $0x108] sm:$0xf]
    %v221 = vld [vmem:[%s2 + $0x10c] sm:$0xf]
    %v222 = vld [vmem:[%s2 + $0x110] sm:$0xf]
    %v223 = vld [vmem:[%s2 + $0x114] sm:$0xf]
    %v224 = vld [vmem:[%s2 + $0x118] sm:$0xf]
    %v225 = vld [vmem:[%s2 + $0x11c] sm:$0xf]
    %v226 = vld [vmem:[%s2 + $0x120] sm:$0xf]
    %v227 = vld [vmem:[%s2 + $0x124] sm:$0xf]
    %v228 = vld [vmem:[%s2 + $0x128] sm:$0xf]
    %v229 = vld [vmem:[%s2 + $0x12c] sm:$0xf]
    %v230 = vld [vmem:[%s2 + $0x130] sm:$0xf]
    %v231 = vld [vmem:[%s2 + $0x134] sm:$0xf]
    %v232 = vld [vmem:[%s2 + $0x138] sm:$0xf]
    %v233 = vld [vmem:[%s2 + $0x13c] sm:$0xf]
    %v234 = vld [vmem:[%s2 + $0x140] sm:$0xf]
    %v235 = vld [vmem:[%s2 + $0x144] sm:$0xf]
    %v236 = vld [vmem:[%s2 + $0x148] sm:$0xf]
    %v237 = vld [vmem:[%s2 + $0x14c] sm:$0xf]
    %v238 = vld [vmem:[%s2 + $0x150] sm:$0xf]
    %v239 = vld [vmem:[%s2 + $0x154] sm:$0xf]
    %v240 = vld [vmem:[%s2 + $0x158] sm:$0xf]
    %v241 = vld [vmem:[%s2 + $0x15c] sm:$0xf]
    %v242 = vld [vmem:[%s2 + $0x160] sm:$0xf]
    %v243 = vld [vmem:[%s2 + $0x164] sm:$0xf]
    %v244 = vld [vmem:[%s2 + $0x168] sm:$0xf]
    %v245 = vld [vmem:[%s2 + $0x16c] sm:$0xf]
    %v246 = vld [vmem:[%s2 + $0x170] sm:$0xf]
    %v247 = vld [vmem:[%s2 + $0x174] sm:$0xf]
    %v248 = vld [vmem:[%s2 + $0x178] sm:$0xf]
    %v249 = vld [vmem:[%s2 + $0x17c] sm:$0xf]
    %v250 = vld [vmem:[%s2 + $0x180] sm:$0xf]
    %v251 = vld [vmem:[%s2 + $0x184] sm:$0xf]
    %v252 = vld [vmem:[%s2 + $0x188] sm:$0xf]
    %v253 = vld [vmem:[%s2 + $0x18c] sm:$0xf]
    %v254 = vld [vmem:[%s2 + $0x190] sm:$0xf]
    %v255 = vld [vmem:[%s2 + $0x194] sm:$0xf]
    %v256 = vld [vmem:[%s2 + $0x198] sm:$0xf]
    %v257 = vld [vmem:[%s2 + $0x19c] sm:$0xf]
    %v258 = vld [vmem:[%s2 + $0x1a0] sm:$0xf]
    %v259 = vld [vmem:[%s2 + $0x1a4] sm:$0xf]
    %v260 = vld [vmem:[%s2 + $0x1a8] sm:$0xf]
    %v261 = vld [vmem:[%s2 + $0x1ac] sm:$0xf]
    %v262 = vld [vmem:[%s2 + $0x1b0] sm:$0xf]
    %v263 = vld [vmem:[%s2 + $0x1b4] sm:$0xf]
    %v264 = vld [vmem:[%s2 + $0x1b8] sm:$0xf]
    %v265 = vld [vmem:[%s2 + $0x1bc] sm:$0xf]
    %v266 = vld [vmem:[%s2 + $0x1c0] sm:$0xf]
    %v267 = vld [vmem:[%s2 + $0x1c4] sm:$0xf]
    %v268 = vld [vmem:[%s2 + $0x1c8] sm:$0xf]
    %v269 = vld [vmem:[%s2 + $0x1cc] sm:$0xf]
    %v270 = vld [vmem:[%s2 + $0x1d0] sm:$0xf]
    %v271 = vld [vmem:[%s2 + $0x1d4] sm:$0xf]
    %v272 = vld [vmem:[%s2 + $0x1d8] sm:$0xf]
    %v273 = vld [vmem:[%s2 + $0x1dc] sm:$0xf]
    %v274 = vld [vmem:[%s2 + $0x1e0] sm:$0xf]
    %v275 = vld [vmem:[%s2 + $0x1e4] sm:$0xf]
    %v276 = vld [vmem:[%s2 + $0x1e8] sm:$0xf]
    %v277 = vld [vmem:[%s2 + $0x1ec] sm:$0xf]
    %v278 = vld [vmem:[%s2 + $0x1f0] sm:$0xf]
    %v279 = vld [vmem:[%s2 + $0x1f4] sm:$0xf]
    %v280 = vld [vmem:[%s2 + $0x1f8] sm:$0xf]
    %v281 = vld [vmem:[%s2 + $0x1fc] sm:$0xf]
    %v410 = vunpack.c.l.b16 %v26
    %v411 = vunpack.c.l.b16 %v27
    %v412 = vunpack.c.l.b16 %v28
    %v413 = vunpack.c.l.b16 %v29
    %v414 = vunpack.c.l.b16 %v30
    %v415 = vunpack.c.l.b16 %v31
    %v416 = vunpack.c.l.b16 %v32
    %v417 = vunpack.c.l.b16 %v33
    %v418 = vunpack.c.l.b16 %v34
    %v419 = vunpack.c.l.b16 %v35
    %v420 = vunpack.c.l.b16 %v36
    %v421 = vunpack.c.l.b16 %v37
    %v422 = vunpack.c.l.b16 %v38
    %v423 = vunpack.c.l.b16 %v39
    %v424 = vunpack.c.l.b16 %v40
    %v425 = vunpack.c.l.b16 %v41
    %v426 = vunpack.c.l.b16 %v42
    %v427 = vunpack.c.l.b16 %v43
    %v428 = vunpack.c.l.b16 %v44
    %v429 = vunpack.c.l.b16 %v45
    %v430 = vunpack.c.l.b16 %v46
    %v431 = vunpack.c.l.b16 %v47
    %v432 = vunpack.c.l.b16 %v48
    %v433 = vunpack.c.l.b16 %v49
    %v434 = vunpack.c.l.b16 %v50
    %v435 = vunpack.c.l.b16 %v51
    %v436 = vunpack.c.l.b16 %v52
    %v437 = vunpack.c.l.b16 %v53
    %v438 = vunpack.c.l.b16 %v54
    %v439 = vunpack.c.l.b16 %v55
    %v440 = vunpack.c.l.b16 %v56
    %v441 = vunpack.c.l.b16 %v57
    %v442 = vunpack.c.l.b16 %v58
    %v443 = vunpack.c.l.b16 %v59
    %v444 = vunpack.c.l.b16 %v60
    %v445 = vunpack.c.l.b16 %v61
    %v446 = vunpack.c.l.b16 %v62
    %v447 = vunpack.c.l.b16 %v63
    %v448 = vunpack.c.l.b16 %v64
    %v449 = vunpack.c.l.b16 %v65
    %v450 = vunpack.c.l.b16 %v66
    %v451 = vunpack.c.l.b16 %v67
    %v452 = vunpack.c.l.b16 %v68
    %v453 = vunpack.c.l.b16 %v69
    %v454 = vunpack.c.l.b16 %v70
    %v455 = vunpack.c.l.b16 %v71
    %v456 = vunpack.c.l.b16 %v72
    %v457 = vunpack.c.l.b16 %v73
    %v458 = vunpack.c.l.b16 %v74
    %v459 = vunpack.c.l.b16 %v75
    %v460 = vunpack.c.l.b16 %v76
    %v461 = vunpack.c.l.b16 %v77
    %v462 = vunpack.c.l.b16 %v78
    %v463 = vunpack.c.l.b16 %v79
    %v464 = vunpack.c.l.b16 %v80
    %v465 = vunpack.c.l.b16 %v81
    %v466 = vunpack.c.l.b16 %v82
    %v467 = vunpack.c.l.b16 %v83
    %v468 = vunpack.c.l.b16 %v84
    %v469 = vunpack.c.l.b16 %v85
    %v470 = vunpack.c.l.b16 %v86
    %v471 = vunpack.c.l.b16 %v87
    %v472 = vunpack.c.l.b16 %v88
    %v473 = vunpack.c.l.b16 %v89
    %v474 = vunpack.c.l.b16 %v90
    %v475 = vunpack.c.l.b16 %v91
    %v476 = vunpack.c.l.b16 %v92
    %v477 = vunpack.c.l.b16 %v93
    %v478 = vunpack.c.l.b16 %v94
    %v479 = vunpack.c.l.b16 %v95
    %v480 = vunpack.c.l.b16 %v96
    %v481 = vunpack.c.l.b16 %v97
    %v482 = vunpack.c.l.b16 %v98
    %v483 = vunpack.c.l.b16 %v99
    %v484 = vunpack.c.l.b16 %v100
    %v485 = vunpack.c.l.b16 %v101
    %v486 = vunpack.c.l.b16 %v102
    %v487 = vunpack.c.l.b16 %v103
    %v488 = vunpack.c.l.b16 %v104
    %v489 = vunpack.c.l.b16 %v105
    %v490 = vunpack.c.l.b16 %v106
    %v491 = vunpack.c.l.b16 %v107
    %v492 = vunpack.c.l.b16 %v108
    %v493 = vunpack.c.l.b16 %v109
    %v494 = vunpack.c.l.b16 %v110
    %v495 = vunpack.c.l.b16 %v111
    %v496 = vunpack.c.l.b16 %v112
    %v497 = vunpack.c.l.b16 %v113
    %v498 = vunpack.c.l.b16 %v114
    %v499 = vunpack.c.l.b16 %v115
    %v500 = vunpack.c.l.b16 %v116
    %v501 = vunpack.c.l.b16 %v117
    %v502 = vunpack.c.l.b16 %v118
    %v503 = vunpack.c.l.b16 %v119
    %v504 = vunpack.c.l.b16 %v120
    %v505 = vunpack.c.l.b16 %v121
    %v506 = vunpack.c.l.b16 %v122
    %v507 = vunpack.c.l.b16 %v123
    %v508 = vunpack.c.l.b16 %v124
    %v509 = vunpack.c.l.b16 %v125
    %v510 = vunpack.c.l.b16 %v126
    %v511 = vunpack.c.l.b16 %v127
    %v512 = vunpack.c.l.b16 %v128
    %v513 = vunpack.c.l.b16 %v129
    %v514 = vunpack.c.l.b16 %v130
    %v515 = vunpack.c.l.b16 %v131
    %v516 = vunpack.c.l.b16 %v132
    %v517 = vunpack.c.l.b16 %v133
    %v518 = vunpack.c.l.b16 %v134
    %v519 = vunpack.c.l.b16 %v135
    %v520 = vunpack.c.l.b16 %v136
    %v521 = vunpack.c.l.b16 %v137
    %v522 = vunpack.c.l.b16 %v138
    %v523 = vunpack.c.l.b16 %v139
    %v524 = vunpack.c.l.b16 %v140
    %v525 = vunpack.c.l.b16 %v141
    %v526 = vunpack.c.l.b16 %v142
    %v527 = vunpack.c.l.b16 %v143
    %v528 = vunpack.c.l.b16 %v144
    %v529 = vunpack.c.l.b16 %v145
    %v530 = vunpack.c.l.b16 %v146
    %v531 = vunpack.c.l.b16 %v147
    %v532 = vunpack.c.l.b16 %v148
    %v533 = vunpack.c.l.b16 %v149
    %v534 = vunpack.c.l.b16 %v150
    %v535 = vunpack.c.l.b16 %v151
    %v536 = vunpack.c.l.b16 %v152
    %v537 = vunpack.c.l.b16 %v153
    %v538 = vpack.c.b16 %v411, %v410
    %v539 = vpack.c.b16 %v413, %v412
    %v540 = vpack.c.b16 %v415, %v414
    %v541 = vpack.c.b16 %v417, %v416
    %v542 = vpack.c.b16 %v419, %v418
    %v543 = vpack.c.b16 %v421, %v420
    %v544 = vpack.c.b16 %v423, %v422
    %v545 = vpack.c.b16 %v425, %v424
    %v546 = vpack.c.b16 %v427, %v426
    %v547 = vpack.c.b16 %v429, %v428
    %v548 = vpack.c.b16 %v431, %v430
    %v549 = vpack.c.b16 %v433, %v432
    %v550 = vpack.c.b16 %v435, %v434
    %v551 = vpack.c.b16 %v437, %v436
    %v552 = vpack.c.b16 %v439, %v438
    %v553 = vpack.c.b16 %v441, %v440
    %v554 = vpack.c.b16 %v443, %v442
    %v555 = vpack.c.b16 %v445, %v444
    %v556 = vpack.c.b16 %v447, %v446
    %v557 = vpack.c.b16 %v449, %v448
    %v558 = vpack.c.b16 %v451, %v450
    %v559 = vpack.c.b16 %v453, %v452
    %v560 = vpack.c.b16 %v455, %v454
    %v561 = vpack.c.b16 %v457, %v456
    %v562 = vpack.c.b16 %v459, %v458
    %v563 = vpack.c.b16 %v461, %v460
    %v564 = vpack.c.b16 %v463, %v462
    %v565 = vpack.c.b16 %v465, %v464
    %v566 = vpack.c.b16 %v467, %v466
    %v567 = vpack.c.b16 %v469, %v468
    %v568 = vpack.c.b16 %v471, %v470
    %v569 = vpack.c.b16 %v473, %v472
    %v570 = vpack.c.b16 %v475, %v474
    %v571 = vpack.c.b16 %v477, %v476
    %v572 = vpack.c.b16 %v479, %v478
    %v573 = vpack.c.b16 %v481, %v480
    %v574 = vpack.c.b16 %v483, %v482
    %v575 = vpack.c.b16 %v485, %v484
    %v576 = vpack.c.b16 %v487, %v486
    %v577 = vpack.c.b16 %v489, %v488
    %v578 = vpack.c.b16 %v491, %v490
    %v579 = vpack.c.b16 %v493, %v492
    %v580 = vpack.c.b16 %v495, %v494
    %v581 = vpack.c.b16 %v497, %v496
    %v582 = vpack.c.b16 %v499, %v498
    %v583 = vpack.c.b16 %v501, %v500
    %v584 = vpack.c.b16 %v503, %v502
    %v585 = vpack.c.b16 %v505, %v504
    %v586 = vpack.c.b16 %v507, %v506
    %v587 = vpack.c.b16 %v509, %v508
    %v588 = vpack.c.b16 %v511, %v510
    %v589 = vpack.c.b16 %v513, %v512
    %v590 = vpack.c.b16 %v515, %v514
    %v591 = vpack.c.b16 %v517, %v516
    %v592 = vpack.c.b16 %v519, %v518
    %v593 = vpack.c.b16 %v521, %v520
    %v594 = vpack.c.b16 %v523, %v522
    %v595 = vpack.c.b16 %v525, %v524
    %v596 = vpack.c.b16 %v527, %v526
    %v597 = vpack.c.b16 %v529, %v528
    %v598 = vpack.c.b16 %v531, %v530
    %v599 = vpack.c.b16 %v533, %v532
    %v600 = vpack.c.b16 %v535, %v534
    %v601 = vpack.c.b16 %v537, %v536
    %vm602 = vcmask 15360
    %v604 = vsel %vm602, %v538, 0
    %v607 = vsel %vm602, %v539, 0
    %v610 = vsel %vm602, %v540, 0
    %v613 = vsel %vm602, %v541, 0
    %v616 = vsel %vm602, %v542, 0
    %v619 = vsel %vm602, %v543, 0
    %v622 = vsel %vm602, %v544, 0
    %v625 = vsel %vm602, %v545, 0
    %v628 = vsel %vm602, %v546, 0
    %v631 = vsel %vm602, %v547, 0
    %v634 = vsel %vm602, %v548, 0
    %v637 = vsel %vm602, %v549, 0
    %v640 = vsel %vm602, %v550, 0
    %v643 = vsel %vm602, %v551, 0
    %v646 = vsel %vm602, %v552, 0
    %v649 = vsel %vm602, %v553, 0
    %v652 = vsel %vm602, %v554, 0
    %v655 = vsel %vm602, %v555, 0
    %v658 = vsel %vm602, %v556, 0
    %v661 = vsel %vm602, %v557, 0
    %v664 = vsel %vm602, %v558, 0
    %v667 = vsel %vm602, %v559, 0
    %v670 = vsel %vm602, %v560, 0
    %v673 = vsel %vm602, %v561, 0
    %v676 = vsel %vm602, %v562, 0
    %v679 = vsel %vm602, %v563, 0
    %v682 = vsel %vm602, %v564, 0
    %v685 = vsel %vm602, %v565, 0
    %v688 = vsel %vm602, %v566, 0
    %v691 = vsel %vm602, %v567, 0
    %v694 = vsel %vm602, %v568, 0
    %v697 = vsel %vm602, %v569, 0
    %v700 = vsel %vm602, %v570, 0
    %v703 = vsel %vm602, %v571, 0
    %v706 = vsel %vm602, %v572, 0
    %v709 = vsel %vm602, %v573, 0
    %v712 = vsel %vm602, %v574, 0
    %v715 = vsel %vm602, %v575, 0
    %v718 = vsel %vm602, %v576, 0
    %v721 = vsel %vm602, %v577, 0
    %v724 = vsel %vm602, %v578, 0
    %v727 = vsel %vm602, %v579, 0
    %v730 = vsel %vm602, %v580, 0
    %v733 = vsel %vm602, %v581, 0
    %v736 = vsel %vm602, %v582, 0
    %v739 = vsel %vm602, %v583, 0
    %v742 = vsel %vm602, %v584, 0
    %v745 = vsel %vm602, %v585, 0
    %v748 = vsel %vm602, %v586, 0
    %v751 = vsel %vm602, %v587, 0
    %v754 = vsel %vm602, %v588, 0
    %v757 = vsel %vm602, %v589, 0
    %v760 = vsel %vm602, %v590, 0
    %v763 = vsel %vm602, %v591, 0
    %v766 = vsel %vm602, %v592, 0
    %v769 = vsel %vm602, %v593, 0
    %v772 = vsel %vm602, %v594, 0
    %v775 = vsel %vm602, %v595, 0
    %v778 = vsel %vm602, %v596, 0
    %v781 = vsel %vm602, %v597, 0
    %v784 = vsel %vm602, %v598, 0
    %v787 = vsel %vm602, %v599, 0
    %v790 = vsel %vm602, %v600, 0
    %v793 = vsel %vm602, %v601, 0
    %vm795 = vcmask 1040384
    %v797 = vsel %vm795, %v25, 0
    %799 = vmatprep.subr.bf16.mxu0 0
    %800 = vmatpush1.bf16.msra.mxu0 %v797
    %801 = vmatprep.subr.bf16.mxu0 0
    %802 = vmatpush1.bf16.msra.mxu0 0
    %803 = vmatprep.subr.bf16.mxu0 0
    %804 = vmatpush1.bf16.msra.mxu0 0
    %805 = vmatprep.subr.bf16.mxu0 0
    %806 = vmatpush1.bf16.msra.mxu0 0
    %807 = vmatprep.subr.bf16.mxu0 0
    %808 = vmatpush1.bf16.msra.mxu0 0
    %809 = vmatprep.subr.bf16.mxu0 0
    %810 = vmatpush1.bf16.msra.mxu0 0
    %811 = vmatprep.subr.bf16.mxu0 0
    %812 = vmatpush1.bf16.msra.mxu0 0
    %813 = vmatprep.subr.bf16.mxu0 0
    %814 = vmatpush1.bf16.msra.mxu0 0
    %815 = vmatprep.subr.bf16.mxu0 0
    %816 = vmatpush1.bf16.msra.mxu0 0
    %817 = vmatprep.subr.bf16.mxu0 0
    %818 = vmatpush1.bf16.msra.mxu0 0
    %819 = vmatprep.subr.bf16.mxu0 0
    %820 = vmatpush1.bf16.msra.mxu0 0
    %821 = vmatprep.subr.bf16.mxu0 0
    %822 = vmatpush1.bf16.msra.mxu0 0
    %823 = vmatprep.subr.bf16.mxu0 0
    %824 = vmatpush1.bf16.msra.mxu0 0
    %825 = vmatprep.subr.bf16.mxu0 0
    %826 = vmatpush1.bf16.msra.mxu0 0
    %827 = vmatprep.subr.bf16.mxu0 0
    %828 = vmatpush1.bf16.msra.mxu0 0
    %829 = vmatprep.subr.bf16.mxu0 0
    %830 = vmatpush1.bf16.msra.mxu0 0
    %831 = vmatprep.mubr.bf16.mxu0 0
    %832 = vmatmul.mubr.bf16.gmra.mrb[0].mxu0 %v604
    %v833 = vpop.f32.mrb[0].mxu0
    %v834 = vadd.f32 0.0, %v833
    %v835 = vpop.f32.mrb[0].mxu0
    %v836 = vpop.f32.mrb[0].mxu0
    %v837 = vadd.f32 0.0, %v836
    %v838 = vpop.f32.mrb[0].mxu0
    %839 = vmatprep.mubr.bf16.mxu0 0
    %840 = vmatmul.mubr.bf16.gmra.mrb[0].mxu0 %v607
    %v841 = vpop.f32.mrb[0].mxu0
    %v842 = vadd.f32 0.0, %v841
    %v843 = vpop.f32.mrb[0].mxu0
    %v844 = vpop.f32.mrb[0].mxu0
    %v845 = vadd.f32 0.0, %v844
    %v846 = vpop.f32.mrb[0].mxu0
    %847 = vmatprep.mubr.bf16.mxu0 0
    %848 = vmatmul.mubr.bf16.gmra.mrb[0].mxu0 %v610
    %v849 = vpop.f32.mrb[0].mxu0
    %v850 = vadd.f32 0.0, %v849
    %v851 = vpop.f32.mrb[0].mxu0
    %v852 = vpop.f32.mrb[0].mxu0
    %v853 = vadd.f32 0.0, %v852
    %v854 = vpop.f32.mrb[0].mxu0
    %855 = vmatprep.mubr.bf16.mxu0 0
    %856 = vmatmul.mubr.bf16.gmra.mrb[0].mxu0 %v613
    %v857 = vpop.f32.mrb[0].mxu0
    %v858 = vadd.f32 0.0, %v857
    %v859 = vpop.f32.mrb[0].mxu0
    %v860 = vpop.f32.mrb[0].mxu0
    %v861 = vadd.f32 0.0, %v860
    %v862 = vpop.f32.mrb[0].mxu0
    %863 = vmatprep.mubr.bf16.mxu0 0
    %864 = vmatmul.mubr.bf16.gmra.mrb[0].mxu0 %v616
    %v865 = vpop.f32.mrb[0].mxu0
    %v866 = vadd.f32 0.0, %v865
    %v867 = vpop.f32.mrb[0].mxu0
    %v868 = vpop.f32.mrb[0].mxu0
    %v869 = vadd.f32 0.0, %v868
    %v870 = vpop.f32.mrb[0].mxu0
    %871 = vmatprep.mubr.bf16.mxu0 0
    %872 = vmatmul.mubr.bf16.gmra.mrb[0].mxu0 %v619
    %v873 = vpop.f32.mrb[0].mxu0
    %v874 = vadd.f32 0.0, %v873
    %v875 = vpop.f32.mrb[0].mxu0
    %v876 = vpop.f32.mrb[0].mxu0
    %v877 = vadd.f32 0.0, %v876
    %v878 = vpop.f32.mrb[0].mxu0
    %879 = vmatprep.mubr.bf16.mxu0 0
    %880 = vmatmul.mubr.bf16.gmra.mrb[0].mxu0 %v622
    %v881 = vpop.f32.mrb[0].mxu0
    %v882 = vadd.f32 0.0, %v881
    %v883 = vpop.f32.mrb[0].mxu0
    %v884 = vpop.f32.mrb[0].mxu0
    %v885 = vadd.f32 0.0, %v884
    %v886 = vpop.f32.mrb[0].mxu0
    %887 = vmatprep.mubr.bf16.mxu0 0
    %888 = vmatmul.mubr.bf16.gmra.mrb[0].mxu0 %v625
    %v889 = vpop.f32.mrb[0].mxu0
    %v890 = vadd.f32 0.0, %v889
    %v891 = vpop.f32.mrb[0].mxu0
    %v892 = vpop.f32.mrb[0].mxu0
    %v893 = vadd.f32 0.0, %v892
    %v894 = vpop.f32.mrb[0].mxu0
    %895 = vmatprep.mubr.bf16.mxu0 0
    %896 = vmatmul.mubr.bf16.gmra.mrb[0].mxu0 %v628
    %v897 = vpop.f32.mrb[0].mxu0
    %v898 = vadd.f32 0.0, %v897
    %v899 = vpop.f32.mrb[0].mxu0
    %v900 = vpop.f32.mrb[0].mxu0
    %v901 = vadd.f32 0.0, %v900
    %v902 = vpop.f32.mrb[0].mxu0
    %903 = vmatprep.mubr.bf16.mxu0 0
    %904 = vmatmul.mubr.bf16.gmra.mrb[0].mxu0 %v631
    %v905 = vpop.f32.mrb[0].mxu0
    %v906 = vadd.f32 0.0, %v905
    %v907 = vpop.f32.mrb[0].mxu0
    %v908 = vpop.f32.mrb[0].mxu0
    %v909 = vadd.f32 0.0, %v908
    %v910 = vpop.f32.mrb[0].mxu0
    %911 = vmatprep.mubr.bf16.mxu0 0
    %912 = vmatmul.mubr.bf16.gmra.mrb[0].mxu0 %v634
    %v913 = vpop.f32.mrb[0].mxu0
    %v914 = vadd.f32 0.0, %v913
    %v915 = vpop.f32.mrb[0].mxu0
    %v916 = vpop.f32.mrb[0].mxu0
    %v917 = vadd.f32 0.0, %v916
    %v918 = vpop.f32.mrb[0].mxu0
    %919 = vmatprep.mubr.bf16.mxu0 0
    %920 = vmatmul.mubr.bf16.gmra.mrb[0].mxu0 %v637
    %v921 = vpop.f32.mrb[0].mxu0
    %v922 = vadd.f32 0.0, %v921
    %v923 = vpop.f32.mrb[0].mxu0
    %v924 = vpop.f32.mrb[0].mxu0
    %v925 = vadd.f32 0.0, %v924
    %v926 = vpop.f32.mrb[0].mxu0
    %927 = vmatprep.mubr.bf16.mxu0 0
    %928 = vmatmul.mubr.bf16.gmra.mrb[0].mxu0 %v640
    %v929 = vpop.f32.mrb[0].mxu0
    %v930 = vadd.f32 0.0, %v929
    %v931 = vpop.f32.mrb[0].mxu0
    %v932 = vpop.f32.mrb[0].mxu0
    %v933 = vadd.f32 0.0, %v932
    %v934 = vpop.f32.mrb[0].mxu0
    %935 = vmatprep.mubr.bf16.mxu0 0
    %936 = vmatmul.mubr.bf16.gmra.mrb[0].mxu0 %v643
    %v937 = vpop.f32.mrb[0].mxu0
    %v938 = vadd.f32 0.0, %v937
    %v939 = vpop.f32.mrb[0].mxu0
    %v940 = vpop.f32.mrb[0].mxu0
    %v941 = vadd.f32 0.0, %v940
    %v942 = vpop.f32.mrb[0].mxu0
    %943 = vmatprep.mubr.bf16.mxu0 0
    %944 = vmatmul.mubr.bf16.gmra.mrb[0].mxu0 %v646
    %v945 = vpop.f32.mrb[0].mxu0
    %v946 = vadd.f32 0.0, %v945
    %v947 = vpop.f32.mrb[0].mxu0
    %v948 = vpop.f32.mrb[0].mxu0
    %v949 = vadd.f32 0.0, %v948
    %v950 = vpop.f32.mrb[0].mxu0
    %951 = vmatprep.mubr.bf16.mxu0 0
    %952 = vmatmul.mubr.bf16.gmra.mrb[0].mxu0 %v649
    %v953 = vpop.f32.mrb[0].mxu0
    %v954 = vadd.f32 0.0, %v953
    %v955 = vpop.f32.mrb[0].mxu0
    %v956 = vpop.f32.mrb[0].mxu0
    %v957 = vadd.f32 0.0, %v956
    %v958 = vpop.f32.mrb[0].mxu0
    %959 = vmatprep.mubr.bf16.mxu0 0
    %960 = vmatmul.mubr.bf16.gmra.mrb[0].mxu0 %v652
    %v961 = vpop.f32.mrb[0].mxu0
    %v962 = vadd.f32 0.0, %v961
    %v963 = vpop.f32.mrb[0].mxu0
    %v964 = vpop.f32.mrb[0].mxu0
    %v965 = vadd.f32 0.0, %v964
    %v966 = vpop.f32.mrb[0].mxu0
    %967 = vmatprep.mubr.bf16.mxu0 0
    %968 = vmatmul.mubr.bf16.gmra.mrb[0].mxu0 %v655
    %v969 = vpop.f32.mrb[0].mxu0
    %v970 = vadd.f32 0.0, %v969
    %v971 = vpop.f32.mrb[0].mxu0
    %v972 = vpop.f32.mrb[0].mxu0
    %v973 = vadd.f32 0.0, %v972
    %v974 = vpop.f32.mrb[0].mxu0
    %975 = vmatprep.mubr.bf16.mxu0 0
    %976 = vmatmul.mubr.bf16.gmra.mrb[0].mxu0 %v658
    %v977 = vpop.f32.mrb[0].mxu0
    %v978 = vadd.f32 0.0, %v977
    %v979 = vpop.f32.mrb[0].mxu0
    %v980 = vpop.f32.mrb[0].mxu0
    %v981 = vadd.f32 0.0, %v980
    %v982 = vpop.f32.mrb[0].mxu0
    %983 = vmatprep.mubr.bf16.mxu0 0
    %984 = vmatmul.mubr.bf16.gmra.mrb[0].mxu0 %v661
    %v985 = vpop.f32.mrb[0].mxu0
    %v986 = vadd.f32 0.0, %v985
    %v987 = vpop.f32.mrb[0].mxu0
    %v988 = vpop.f32.mrb[0].mxu0
    %v989 = vadd.f32 0.0, %v988
    %v990 = vpop.f32.mrb[0].mxu0
    %991 = vmatprep.mubr.bf16.mxu0 0
    %992 = vmatmul.mubr.bf16.gmra.mrb[0].mxu0 %v664
    %v993 = vpop.f32.mrb[0].mxu0
    %v994 = vadd.f32 0.0, %v993
    %v995 = vpop.f32.mrb[0].mxu0
    %v996 = vpop.f32.mrb[0].mxu0
    %v997 = vadd.f32 0.0, %v996
    %v998 = vpop.f32.mrb[0].mxu0
    %999 = vmatprep.mubr.bf16.mxu0 0
    %1000 = vmatmul.mubr.bf16.gmra.mrb[0].mxu0 %v667
    %v1001 = vpop.f32.mrb[0].mxu0
    %v1002 = vadd.f32 0.0, %v1001
    %v1003 = vpop.f32.mrb[0].mxu0
    %v1004 = vpop.f32.mrb[0].mxu0
    %v1005 = vadd.f32 0.0, %v1004
    %v1006 = vpop.f32.mrb[0].mxu0
    %1007 = vmatprep.mubr.bf16.mxu0 0
    %1008 = vmatmul.mubr.bf16.gmra.mrb[0].mxu0 %v670
    %v1009 = vpop.f32.mrb[0].mxu0
    %v1010 = vadd.f32 0.0, %v1009
    %v1011 = vpop.f32.mrb[0].mxu0
    %v1012 = vpop.f32.mrb[0].mxu0
    %v1013 = vadd.f32 0.0, %v1012
    %v1014 = vpop.f32.mrb[0].mxu0
    %1015 = vmatprep.mubr.bf16.mxu0 0
    %1016 = vmatmul.mubr.bf16.gmra.mrb[0].mxu0 %v673
    %v1017 = vpop.f32.mrb[0].mxu0
    %v1018 = vadd.f32 0.0, %v1017
    %v1019 = vpop.f32.mrb[0].mxu0
    %v1020 = vpop.f32.mrb[0].mxu0
    %v1021 = vadd.f32 0.0, %v1020
    %v1022 = vpop.f32.mrb[0].mxu0
    %1023 = vmatprep.mubr.bf16.mxu0 0
    %1024 = vmatmul.mubr.bf16.gmra.mrb[0].mxu0 %v676
    %v1025 = vpop.f32.mrb[0].mxu0
    %v1026 = vadd.f32 0.0, %v1025
    %v1027 = vpop.f32.mrb[0].mxu0
    %v1028 = vpop.f32.mrb[0].mxu0
    %v1029 = vadd.f32 0.0, %v1028
    %v1030 = vpop.f32.mrb[0].mxu0
    %1031 = vmatprep.mubr.bf16.mxu0 0
    %1032 = vmatmul.mubr.bf16.gmra.mrb[0].mxu0 %v679
    %v1033 = vpop.f32.mrb[0].mxu0
    %v1034 = vadd.f32 0.0, %v1033
    %v1035 = vpop.f32.mrb[0].mxu0
    %v1036 = vpop.f32.mrb[0].mxu0
    %v1037 = vadd.f32 0.0, %v1036
    %v1038 = vpop.f32.mrb[0].mxu0
    %1039 = vmatprep.mubr.bf16.mxu0 0
    %1040 = vmatmul.mubr.bf16.gmra.mrb[0].mxu0 %v682
    %v1041 = vpop.f32.mrb[0].mxu0
    %v1042 = vadd.f32 0.0, %v1041
    %v1043 = vpop.f32.mrb[0].mxu0
    %v1044 = vpop.f32.mrb[0].mxu0
    %v1045 = vadd.f32 0.0, %v1044
    %v1046 = vpop.f32.mrb[0].mxu0
    %1047 = vmatprep.mubr.bf16.mxu0 0
    %1048 = vmatmul.mubr.bf16.gmra.mrb[0].mxu0 %v685
    %v1049 = vpop.f32.mrb[0].mxu0
    %v1050 = vadd.f32 0.0, %v1049
    %v1051 = vpop.f32.mrb[0].mxu0
    %v1052 = vpop.f32.mrb[0].mxu0
    %v1053 = vadd.f32 0.0, %v1052
    %v1054 = vpop.f32.mrb[0].mxu0
    %1055 = vmatprep.mubr.bf16.mxu0 0
    %1056 = vmatmul.mubr.bf16.gmra.mrb[0].mxu0 %v688
    %v1057 = vpop.f32.mrb[0].mxu0
    %v1058 = vadd.f32 0.0, %v1057
    %v1059 = vpop.f32.mrb[0].mxu0
    %v1060 = vpop.f32.mrb[0].mxu0
    %v1061 = vadd.f32 0.0, %v1060
    %v1062 = vpop.f32.mrb[0].mxu0
    %1063 = vmatprep.mubr.bf16.mxu0 0
    %1064 = vmatmul.mubr.bf16.gmra.mrb[0].mxu0 %v691
    %v1065 = vpop.f32.mrb[0].mxu0
    %v1066 = vadd.f32 0.0, %v1065
    %v1067 = vpop.f32.mrb[0].mxu0
    %v1068 = vpop.f32.mrb[0].mxu0
    %v1069 = vadd.f32 0.0, %v1068
    %v1070 = vpop.f32.mrb[0].mxu0
    %1071 = vmatprep.mubr.bf16.mxu0 0
    %1072 = vmatmul.mubr.bf16.gmra.mrb[0].mxu0 %v694
    %v1073 = vpop.f32.mrb[0].mxu0
    %v1074 = vadd.f32 0.0, %v1073
    %v1075 = vpop.f32.mrb[0].mxu0
    %v1076 = vpop.f32.mrb[0].mxu0
    %v1077 = vadd.f32 0.0, %v1076
    %v1078 = vpop.f32.mrb[0].mxu0
    %1079 = vmatprep.mubr.bf16.mxu0 0
    %1080 = vmatmul.mubr.bf16.gmra.mrb[0].mxu0 %v697
    %v1081 = vpop.f32.mrb[0].mxu0
    %v1082 = vadd.f32 0.0, %v1081
    %v1083 = vpop.f32.mrb[0].mxu0
    %v1084 = vpop.f32.mrb[0].mxu0
    %v1085 = vadd.f32 0.0, %v1084
    %v1086 = vpop.f32.mrb[0].mxu0
    %1087 = vmatprep.mubr.bf16.mxu0 0
    %1088 = vmatmul.mubr.bf16.gmra.mrb[0].mxu0 %v700
    %v1089 = vpop.f32.mrb[0].mxu0
    %v1090 = vadd.f32 0.0, %v1089
    %v1091 = vpop.f32.mrb[0].mxu0
    %v1092 = vpop.f32.mrb[0].mxu0
    %v1093 = vadd.f32 0.0, %v1092
    %v1094 = vpop.f32.mrb[0].mxu0
    %1095 = vmatprep.mubr.bf16.mxu0 0
    %1096 = vmatmul.mubr.bf16.gmra.mrb[0].mxu0 %v703
    %v1097 = vpop.f32.mrb[0].mxu0
    %v1098 = vadd.f32 0.0, %v1097
    %v1099 = vpop.f32.mrb[0].mxu0
    %v1100 = vpop.f32.mrb[0].mxu0
    %v1101 = vadd.f32 0.0, %v1100
    %v1102 = vpop.f32.mrb[0].mxu0
    %1103 = vmatprep.mubr.bf16.mxu0 0
    %1104 = vmatmul.mubr.bf16.gmra.mrb[0].mxu0 %v706
    %v1105 = vpop.f32.mrb[0].mxu0
    %v1106 = vadd.f32 0.0, %v1105
    %v1107 = vpop.f32.mrb[0].mxu0
    %v1108 = vpop.f32.mrb[0].mxu0
    %v1109 = vadd.f32 0.0, %v1108
    %v1110 = vpop.f32.mrb[0].mxu0
    %1111 = vmatprep.mubr.bf16.mxu0 0
    %1112 = vmatmul.mubr.bf16.gmra.mrb[0].mxu0 %v709
    %v1113 = vpop.f32.mrb[0].mxu0
    %v1114 = vadd.f32 0.0, %v1113
    %v1115 = vpop.f32.mrb[0].mxu0
    %v1116 = vpop.f32.mrb[0].mxu0
    %v1117 = vadd.f32 0.0, %v1116
    %v1118 = vpop.f32.mrb[0].mxu0
    %1119 = vmatprep.mubr.bf16.mxu0 0
    %1120 = vmatmul.mubr.bf16.gmra.mrb[0].mxu0 %v712
    %v1121 = vpop.f32.mrb[0].mxu0
    %v1122 = vadd.f32 0.0, %v1121
    %v1123 = vpop.f32.mrb[0].mxu0
    %v1124 = vpop.f32.mrb[0].mxu0
    %v1125 = vadd.f32 0.0, %v1124
    %v1126 = vpop.f32.mrb[0].mxu0
    %1127 = vmatprep.mubr.bf16.mxu0 0
    %1128 = vmatmul.mubr.bf16.gmra.mrb[0].mxu0 %v715
    %v1129 = vpop.f32.mrb[0].mxu0
    %v1130 = vadd.f32 0.0, %v1129
    %v1131 = vpop.f32.mrb[0].mxu0
    %v1132 = vpop.f32.mrb[0].mxu0
    %v1133 = vadd.f32 0.0, %v1132
    %v1134 = vpop.f32.mrb[0].mxu0
    %1135 = vmatprep.mubr.bf16.mxu0 0
    %1136 = vmatmul.mubr.bf16.gmra.mrb[0].mxu0 %v718
    %v1137 = vpop.f32.mrb[0].mxu0
    %v1138 = vadd.f32 0.0, %v1137
    %v1139 = vpop.f32.mrb[0].mxu0
    %v1140 = vpop.f32.mrb[0].mxu0
    %v1141 = vadd.f32 0.0, %v1140
    %v1142 = vpop.f32.mrb[0].mxu0
    %1143 = vmatprep.mubr.bf16.mxu0 0
    %1144 = vmatmul.mubr.bf16.gmra.mrb[0].mxu0 %v721
    %v1145 = vpop.f32.mrb[0].mxu0
    %v1146 = vadd.f32 0.0, %v1145
    %v1147 = vpop.f32.mrb[0].mxu0
    %v1148 = vpop.f32.mrb[0].mxu0
    %v1149 = vadd.f32 0.0, %v1148
    %v1150 = vpop.f32.mrb[0].mxu0
    %1151 = vmatprep.mubr.bf16.mxu0 0
    %1152 = vmatmul.mubr.bf16.gmra.mrb[0].mxu0 %v724
    %v1153 = vpop.f32.mrb[0].mxu0
    %v1154 = vadd.f32 0.0, %v1153
    %v1155 = vpop.f32.mrb[0].mxu0
    %v1156 = vpop.f32.mrb[0].mxu0
    %v1157 = vadd.f32 0.0, %v1156
    %v1158 = vpop.f32.mrb[0].mxu0
    %1159 = vmatprep.mubr.bf16.mxu0 0
    %1160 = vmatmul.mubr.bf16.gmra.mrb[0].mxu0 %v727
    %v1161 = vpop.f32.mrb[0].mxu0
    %v1162 = vadd.f32 0.0, %v1161
    %v1163 = vpop.f32.mrb[0].mxu0
    %v1164 = vpop.f32.mrb[0].mxu0
    %v1165 = vadd.f32 0.0, %v1164
    %v1166 = vpop.f32.mrb[0].mxu0
    %1167 = vmatprep.mubr.bf16.mxu0 0
    %1168 = vmatmul.mubr.bf16.gmra.mrb[0].mxu0 %v730
    %v1169 = vpop.f32.mrb[0].mxu0
    %v1170 = vadd.f32 0.0, %v1169
    %v1171 = vpop.f32.mrb[0].mxu0
    %v1172 = vpop.f32.mrb[0].mxu0
    %v1173 = vadd.f32 0.0, %v1172
    %v1174 = vpop.f32.mrb[0].mxu0
    %1175 = vmatprep.mubr.bf16.mxu0 0
    %1176 = vmatmul.mubr.bf16.gmra.mrb[0].mxu0 %v733
    %v1177 = vpop.f32.mrb[0].mxu0
    %v1178 = vadd.f32 0.0, %v1177
    %v1179 = vpop.f32.mrb[0].mxu0
    %v1180 = vpop.f32.mrb[0].mxu0
    %v1181 = vadd.f32 0.0, %v1180
    %v1182 = vpop.f32.mrb[0].mxu0
    %1183 = vmatprep.mubr.bf16.mxu0 0
    %1184 = vmatmul.mubr.bf16.gmra.mrb[0].mxu0 %v736
    %v1185 = vpop.f32.mrb[0].mxu0
    %v1186 = vadd.f32 0.0, %v1185
    %v1187 = vpop.f32.mrb[0].mxu0
    %v1188 = vpop.f32.mrb[0].mxu0
    %v1189 = vadd.f32 0.0, %v1188
    %v1190 = vpop.f32.mrb[0].mxu0
    %1191 = vmatprep.mubr.bf16.mxu0 0
    %1192 = vmatmul.mubr.bf16.gmra.mrb[0].mxu0 %v739
    %v1193 = vpop.f32.mrb[0].mxu0
    %v1194 = vadd.f32 0.0, %v1193
    %v1195 = vpop.f32.mrb[0].mxu0
    %v1196 = vpop.f32.mrb[0].mxu0
    %v1197 = vadd.f32 0.0, %v1196
    %v1198 = vpop.f32.mrb[0].mxu0
    %1199 = vmatprep.mubr.bf16.mxu0 0
    %1200 = vmatmul.mubr.bf16.gmra.mrb[0].mxu0 %v742
    %v1201 = vpop.f32.mrb[0].mxu0
    %v1202 = vadd.f32 0.0, %v1201
    %v1203 = vpop.f32.mrb[0].mxu0
    %v1204 = vpop.f32.mrb[0].mxu0
    %v1205 = vadd.f32 0.0, %v1204
    %v1206 = vpop.f32.mrb[0].mxu0
    %1207 = vmatprep.mubr.bf16.mxu0 0
    %1208 = vmatmul.mubr.bf16.gmra.mrb[0].mxu0 %v745
    %v1209 = vpop.f32.mrb[0].mxu0
    %v1210 = vadd.f32 0.0, %v1209
    %v1211 = vpop.f32.mrb[0].mxu0
    %v1212 = vpop.f32.mrb[0].mxu0
    %v1213 = vadd.f32 0.0, %v1212
    %v1214 = vpop.f32.mrb[0].mxu0
    %1215 = vmatprep.mubr.bf16.mxu0 0
    %1216 = vmatmul.mubr.bf16.gmra.mrb[0].mxu0 %v748
    %v1217 = vpop.f32.mrb[0].mxu0
    %v1218 = vadd.f32 0.0, %v1217
    %v1219 = vpop.f32.mrb[0].mxu0
    %v1220 = vpop.f32.mrb[0].mxu0
    %v1221 = vadd.f32 0.0, %v1220
    %v1222 = vpop.f32.mrb[0].mxu0
    %1223 = vmatprep.mubr.bf16.mxu0 0
    %1224 = vmatmul.mubr.bf16.gmra.mrb[0].mxu0 %v751
    %v1225 = vpop.f32.mrb[0].mxu0
    %v1226 = vadd.f32 0.0, %v1225
    %v1227 = vpop.f32.mrb[0].mxu0
    %v1228 = vpop.f32.mrb[0].mxu0
    %v1229 = vadd.f32 0.0, %v1228
    %v1230 = vpop.f32.mrb[0].mxu0
    %1231 = vmatprep.mubr.bf16.mxu0 0
    %1232 = vmatmul.mubr.bf16.gmra.mrb[0].mxu0 %v754
    %v1233 = vpop.f32.mrb[0].mxu0
    %v1234 = vadd.f32 0.0, %v1233
    %v1235 = vpop.f32.mrb[0].mxu0
    %v1236 = vpop.f32.mrb[0].mxu0
    %v1237 = vadd.f32 0.0, %v1236
    %v1238 = vpop.f32.mrb[0].mxu0
    %1239 = vmatprep.mubr.bf16.mxu0 0
    %1240 = vmatmul.mubr.bf16.gmra.mrb[0].mxu0 %v757
    %v1241 = vpop.f32.mrb[0].mxu0
    %v1242 = vadd.f32 0.0, %v1241
    %v1243 = vpop.f32.mrb[0].mxu0
    %v1244 = vpop.f32.mrb[0].mxu0
    %v1245 = vadd.f32 0.0, %v1244
    %v1246 = vpop.f32.mrb[0].mxu0
    %1247 = vmatprep.mubr.bf16.mxu0 0
    %1248 = vmatmul.mubr.bf16.gmra.mrb[0].mxu0 %v760
    %v1249 = vpop.f32.mrb[0].mxu0
    %v1250 = vadd.f32 0.0, %v1249
    %v1251 = vpop.f32.mrb[0].mxu0
    %v1252 = vpop.f32.mrb[0].mxu0
    %v1253 = vadd.f32 0.0, %v1252
    %v1254 = vpop.f32.mrb[0].mxu0
    %1255 = vmatprep.mubr.bf16.mxu0 0
    %1256 = vmatmul.mubr.bf16.gmra.mrb[0].mxu0 %v763
    %v1257 = vpop.f32.mrb[0].mxu0
    %v1258 = vadd.f32 0.0, %v1257
    %v1259 = vpop.f32.mrb[0].mxu0
    %v1260 = vpop.f32.mrb[0].mxu0
    %v1261 = vadd.f32 0.0, %v1260
    %v1262 = vpop.f32.mrb[0].mxu0
    %1263 = vmatprep.mubr.bf16.mxu0 0
    %1264 = vmatmul.mubr.bf16.gmra.mrb[0].mxu0 %v766
    %v1265 = vpop.f32.mrb[0].mxu0
    %v1266 = vadd.f32 0.0, %v1265
    %v1267 = vpop.f32.mrb[0].mxu0
    %v1268 = vpop.f32.mrb[0].mxu0
    %v1269 = vadd.f32 0.0, %v1268
    %v1270 = vpop.f32.mrb[0].mxu0
    %1271 = vmatprep.mubr.bf16.mxu0 0
    %1272 = vmatmul.mubr.bf16.gmra.mrb[0].mxu0 %v769
    %v1273 = vpop.f32.mrb[0].mxu0
    %v1274 = vadd.f32 0.0, %v1273
    %v1275 = vpop.f32.mrb[0].mxu0
    %v1276 = vpop.f32.mrb[0].mxu0
    %v1277 = vadd.f32 0.0, %v1276
    %v1278 = vpop.f32.mrb[0].mxu0
    %1279 = vmatprep.mubr.bf16.mxu0 0
    %1280 = vmatmul.mubr.bf16.gmra.mrb[0].mxu0 %v772
    %v1281 = vpop.f32.mrb[0].mxu0
    %v1282 = vadd.f32 0.0, %v1281
    %v1283 = vpop.f32.mrb[0].mxu0
    %v1284 = vpop.f32.mrb[0].mxu0
    %v1285 = vadd.f32 0.0, %v1284
    %v1286 = vpop.f32.mrb[0].mxu0
    %1287 = vmatprep.mubr.bf16.mxu0 0
    %1288 = vmatmul.mubr.bf16.gmra.mrb[0].mxu0 %v775
    %v1289 = vpop.f32.mrb[0].mxu0
    %v1290 = vadd.f32 0.0, %v1289
    %v1291 = vpop.f32.mrb[0].mxu0
    %v1292 = vpop.f32.mrb[0].mxu0
    %v1293 = vadd.f32 0.0, %v1292
    %v1294 = vpop.f32.mrb[0].mxu0
    %1295 = vmatprep.mubr.bf16.mxu0 0
    %1296 = vmatmul.mubr.bf16.gmra.mrb[0].mxu0 %v778
    %v1297 = vpop.f32.mrb[0].mxu0
    %v1298 = vadd.f32 0.0, %v1297
    %v1299 = vpop.f32.mrb[0].mxu0
    %v1300 = vpop.f32.mrb[0].mxu0
    %v1301 = vadd.f32 0.0, %v1300
    %v1302 = vpop.f32.mrb[0].mxu0
    %1303 = vmatprep.mubr.bf16.mxu0 0
    %1304 = vmatmul.mubr.bf16.gmra.mrb[0].mxu0 %v781
    %v1305 = vpop.f32.mrb[0].mxu0
    %v1306 = vadd.f32 0.0, %v1305
    %v1307 = vpop.f32.mrb[0].mxu0
    %v1308 = vpop.f32.mrb[0].mxu0
    %v1309 = vadd.f32 0.0, %v1308
    %v1310 = vpop.f32.mrb[0].mxu0
    %1311 = vmatprep.mubr.bf16.mxu0 0
    %1312 = vmatmul.mubr.bf16.gmra.mrb[0].mxu0 %v784
    %v1313 = vpop.f32.mrb[0].mxu0
    %v1314 = vadd.f32 0.0, %v1313
    %v1315 = vpop.f32.mrb[0].mxu0
    %v1316 = vpop.f32.mrb[0].mxu0
    %v1317 = vadd.f32 0.0, %v1316
    %v1318 = vpop.f32.mrb[0].mxu0
    %1319 = vmatprep.mubr.bf16.mxu0 0
    %1320 = vmatmul.mubr.bf16.gmra.mrb[0].mxu0 %v787
    %v1321 = vpop.f32.mrb[0].mxu0
    %v1322 = vadd.f32 0.0, %v1321
    %v1323 = vpop.f32.mrb[0].mxu0
    %v1324 = vpop.f32.mrb[0].mxu0
    %v1325 = vadd.f32 0.0, %v1324
    %v1326 = vpop.f32.mrb[0].mxu0
    %1327 = vmatprep.mubr.bf16.mxu0 0
    %1328 = vmatmul.mubr.bf16.gmra.mrb[0].mxu0 %v790
    %v1329 = vpop.f32.mrb[0].mxu0
    %v1330 = vadd.f32 0.0, %v1329
    %v1331 = vpop.f32.mrb[0].mxu0
    %v1332 = vpop.f32.mrb[0].mxu0
    %v1333 = vadd.f32 0.0, %v1332
    %v1334 = vpop.f32.mrb[0].mxu0
    %1335 = vmatprep.mubr.bf16.mxu0 0
    %1336 = vmatmul.mubr.bf16.gmra.mrb[0].mxu0 %v793
    %v1337 = vpop.f32.mrb[0].mxu0
    %v1338 = vadd.f32 0.0, %v1337
    %v1339 = vpop.f32.mrb[0].mxu0
    %v1340 = vpop.f32.mrb[0].mxu0
    %v1341 = vadd.f32 0.0, %v1340
    %v1342 = vpop.f32.mrb[0].mxu0
    %1343 = vdwg.mxu0
    %v1344 = vpack.c.bf16 %v837, %v834
    %v1345 = vpack.c.bf16 %v845, %v842
    %v1346 = vpack.c.bf16 %v853, %v850
    %v1347 = vpack.c.bf16 %v861, %v858
    %v1348 = vpack.c.bf16 %v869, %v866
    %v1349 = vpack.c.bf16 %v877, %v874
    %v1350 = vpack.c.bf16 %v885, %v882
    %v1351 = vpack.c.bf16 %v893, %v890
    %v1352 = vpack.c.bf16 %v901, %v898
    %v1353 = vpack.c.bf16 %v909, %v906
    %v1354 = vpack.c.bf16 %v917, %v914
    %v1355 = vpack.c.bf16 %v925, %v922
    %v1356 = vpack.c.bf16 %v933, %v930
    %v1357 = vpack.c.bf16 %v941, %v938
    %v1358 = vpack.c.bf16 %v949, %v946
    %v1359 = vpack.c.bf16 %v957, %v954
    %v1360 = vpack.c.bf16 %v965, %v962
    %v1361 = vpack.c.bf16 %v973, %v970
    %v1362 = vpack.c.bf16 %v981, %v978
    %v1363 = vpack.c.bf16 %v989, %v986
    %v1364 = vpack.c.bf16 %v997, %v994
    %v1365 = vpack.c.bf16 %v1005, %v1002
    %v1366 = vpack.c.bf16 %v1013, %v1010
    %v1367 = vpack.c.bf16 %v1021, %v1018
    %v1368 = vpack.c.bf16 %v1029, %v1026
    %v1369 = vpack.c.bf16 %v1037, %v1034
    %v1370 = vpack.c.bf16 %v1045, %v1042
    %v1371 = vpack.c.bf16 %v1053, %v1050
    %v1372 = vpack.c.bf16 %v1061, %v1058
    %v1373 = vpack.c.bf16 %v1069, %v1066
    %v1374 = vpack.c.bf16 %v1077, %v1074
    %v1375 = vpack.c.bf16 %v1085, %v1082
    %v1376 = vpack.c.bf16 %v1093, %v1090
    %v1377 = vpack.c.bf16 %v1101, %v1098
    %v1378 = vpack.c.bf16 %v1109, %v1106
    %v1379 = vpack.c.bf16 %v1117, %v1114
    %v1380 = vpack.c.bf16 %v1125, %v1122
    %v1381 = vpack.c.bf16 %v1133, %v1130
    %v1382 = vpack.c.bf16 %v1141, %v1138
    %v1383 = vpack.c.bf16 %v1149, %v1146
    %v1384 = vpack.c.bf16 %v1157, %v1154
    %v1385 = vpack.c.bf16 %v1165, %v1162
    %v1386 = vpack.c.bf16 %v1173, %v1170
    %v1387 = vpack.c.bf16 %v1181, %v1178
    %v1388 = vpack.c.bf16 %v1189, %v1186
    %v1389 = vpack.c.bf16 %v1197, %v1194
    %v1390 = vpack.c.bf16 %v1205, %v1202
    %v1391 = vpack.c.bf16 %v1213, %v1210
    %v1392 = vpack.c.bf16 %v1221, %v1218
    %v1393 = vpack.c.bf16 %v1229, %v1226
    %v1394 = vpack.c.bf16 %v1237, %v1234
    %v1395 = vpack.c.bf16 %v1245, %v1242
    %v1396 = vpack.c.bf16 %v1253, %v1250
    %v1397 = vpack.c.bf16 %v1261, %v1258
    %v1398 = vpack.c.bf16 %v1269, %v1266
    %v1399 = vpack.c.bf16 %v1277, %v1274
    %v1400 = vpack.c.bf16 %v1285, %v1282
    %v1401 = vpack.c.bf16 %v1293, %v1290
    %v1402 = vpack.c.bf16 %v1301, %v1298
    %v1403 = vpack.c.bf16 %v1309, %v1306
    %v1404 = vpack.c.bf16 %v1317, %v1314
    %v1405 = vpack.c.bf16 %v1325, %v1322
    %v1406 = vpack.c.bf16 %v1333, %v1330
    %v1407 = vpack.c.bf16 %v1341, %v1338
    %1409 = vset.pattern.permute.xlu0 0
    %1410 = vperm.xlu0 %1409, %v154
    %v1411 = vpop.permute.xlu0 %1410
    %v1414 = vunpack.c.l.s4 839922192
    %v1415 = vunpack.c.0.s8 %v1414
    %v1416 = vlaneseq
    %v1417 = vshrl.u32 %v1416, 7
    %v1418 = vsub.s32 %v1415, %v1417
    %v1419 = vrot.slane %v1411, %v1418
    %1421 = vset.pattern.permute.xlu0 0
    %1422 = vperm.xlu0 %1421, %v155
    %v1423 = vpop.permute.xlu0 %1422
    %v1426 = vunpack.c.l.s4 839922192
    %v1427 = vunpack.c.0.s8 %v1426
    %v1428 = vlaneseq
    %v1429 = vshrl.u32 %v1428, 7
    %v1430 = vsub.s32 %v1427, %v1429
    %v1431 = vrot.slane %v1423, %v1430
    %1433 = vset.pattern.permute.xlu0 0
    %1434 = vperm.xlu0 %1433, %v156
    %v1435 = vpop.permute.xlu0 %1434
    %v1438 = vunpack.c.l.s4 839922192
    %v1439 = vunpack.c.0.s8 %v1438
    %v1440 = vlaneseq
    %v1441 = vshrl.u32 %v1440, 7
    %v1442 = vsub.s32 %v1439, %v1441
    %v1443 = vrot.slane %v1435, %v1442
    %1445 = vset.pattern.permute.xlu0 0
    %1446 = vperm.xlu0 %1445, %v157
    %v1447 = vpop.permute.xlu0 %1446
    %v1450 = vunpack.c.l.s4 839922192
    %v1451 = vunpack.c.0.s8 %v1450
    %v1452 = vlaneseq
    %v1453 = vshrl.u32 %v1452, 7
    %v1454 = vsub.s32 %v1451, %v1453
    %v1455 = vrot.slane %v1447, %v1454
    %1457 = vset.pattern.permute.xlu0 0
    %1458 = vperm.xlu0 %1457, %v158
    %v1459 = vpop.permute.xlu0 %1458
    %v1462 = vunpack.c.l.s4 839922192
    %v1463 = vunpack.c.0.s8 %v1462
    %v1464 = vlaneseq
    %v1465 = vshrl.u32 %v1464, 7
    %v1466 = vsub.s32 %v1463, %v1465
    %v1467 = vrot.slane %v1459, %v1466
    %1469 = vset.pattern.permute.xlu0 0
    %1470 = vperm.xlu0 %1469, %v159
    %v1471 = vpop.permute.xlu0 %1470
    %v1474 = vunpack.c.l.s4 839922192
    %v1475 = vunpack.c.0.s8 %v1474
    %v1476 = vlaneseq
    %v1477 = vshrl.u32 %v1476, 7
    %v1478 = vsub.s32 %v1475, %v1477
    %v1479 = vrot.slane %v1471, %v1478
    %1481 = vset.pattern.permute.xlu0 0
    %1482 = vperm.xlu0 %1481, %v160
    %v1483 = vpop.permute.xlu0 %1482
    %v1486 = vunpack.c.l.s4 839922192
    %v1487 = vunpack.c.0.s8 %v1486
    %v1488 = vlaneseq
    %v1489 = vshrl.u32 %v1488, 7
    %v1490 = vsub.s32 %v1487, %v1489
    %v1491 = vrot.slane %v1483, %v1490
    %1493 = vset.pattern.permute.xlu0 0
    %1494 = vperm.xlu0 %1493, %v161
    %v1495 = vpop.permute.xlu0 %1494
    %v1498 = vunpack.c.l.s4 839922192
    %v1499 = vunpack.c.0.s8 %v1498
    %v1500 = vlaneseq
    %v1501 = vshrl.u32 %v1500, 7
    %v1502 = vsub.s32 %v1499, %v1501
    %v1503 = vrot.slane %v1495, %v1502
    %1505 = vset.pattern.permute.xlu0 0
    %1506 = vperm.xlu0 %1505, %v162
    %v1507 = vpop.permute.xlu0 %1506
    %v1510 = vunpack.c.l.s4 839922192
    %v1511 = vunpack.c.0.s8 %v1510
    %v1512 = vlaneseq
    %v1513 = vshrl.u32 %v1512, 7
    %v1514 = vsub.s32 %v1511, %v1513
    %v1515 = vrot.slane %v1507, %v1514
    %1517 = vset.pattern.permute.xlu0 0
    %1518 = vperm.xlu0 %1517, %v163
    %v1519 = vpop.permute.xlu0 %1518
    %v1522 = vunpack.c.l.s4 839922192
    %v1523 = vunpack.c.0.s8 %v1522
    %v1524 = vlaneseq
    %v1525 = vshrl.u32 %v1524, 7
    %v1526 = vsub.s32 %v1523, %v1525
    %v1527 = vrot.slane %v1519, %v1526
    %1529 = vset.pattern.permute.xlu0 0
    %1530 = vperm.xlu0 %1529, %v164
    %v1531 = vpop.permute.xlu0 %1530
    %v1534 = vunpack.c.l.s4 839922192
    %v1535 = vunpack.c.0.s8 %v1534
    %v1536 = vlaneseq
    %v1537 = vshrl.u32 %v1536, 7
    %v1538 = vsub.s32 %v1535, %v1537
    %v1539 = vrot.slane %v1531, %v1538
    %1541 = vset.pattern.permute.xlu0 0
    %1542 = vperm.xlu0 %1541, %v165
    %v1543 = vpop.permute.xlu0 %1542
    %v1546 = vunpack.c.l.s4 839922192
    %v1547 = vunpack.c.0.s8 %v1546
    %v1548 = vlaneseq
    %v1549 = vshrl.u32 %v1548, 7
    %v1550 = vsub.s32 %v1547, %v1549
    %v1551 = vrot.slane %v1543, %v1550
    %1553 = vset.pattern.permute.xlu0 0
    %1554 = vperm.xlu0 %1553, %v166
    %v1555 = vpop.permute.xlu0 %1554
    %v1558 = vunpack.c.l.s4 839922192
    %v1559 = vunpack.c.0.s8 %v1558
    %v1560 = vlaneseq
    %v1561 = vshrl.u32 %v1560, 7
    %v1562 = vsub.s32 %v1559, %v1561
    %v1563 = vrot.slane %v1555, %v1562
    %1565 = vset.pattern.permute.xlu0 0
    %1566 = vperm.xlu0 %1565, %v167
    %v1567 = vpop.permute.xlu0 %1566
    %v1570 = vunpack.c.l.s4 839922192
    %v1571 = vunpack.c.0.s8 %v1570
    %v1572 = vlaneseq
    %v1573 = vshrl.u32 %v1572, 7
    %v1574 = vsub.s32 %v1571, %v1573
    %v1575 = vrot.slane %v1567, %v1574
    %1577 = vset.pattern.permute.xlu0 0
    %1578 = vperm.xlu0 %1577, %v168
    %v1579 = vpop.permute.xlu0 %1578
    %v1582 = vunpack.c.l.s4 839922192
    %v1583 = vunpack.c.0.s8 %v1582
    %v1584 = vlaneseq
    %v1585 = vshrl.u32 %v1584, 7
    %v1586 = vsub.s32 %v1583, %v1585
    %v1587 = vrot.slane %v1579, %v1586
    %1589 = vset.pattern.permute.xlu0 0
    %1590 = vperm.xlu0 %1589, %v169
    %v1591 = vpop.permute.xlu0 %1590
    %v1594 = vunpack.c.l.s4 839922192
    %v1595 = vunpack.c.0.s8 %v1594
    %v1596 = vlaneseq
    %v1597 = vshrl.u32 %v1596, 7
    %v1598 = vsub.s32 %v1595, %v1597
    %v1599 = vrot.slane %v1591, %v1598
    %1601 = vset.pattern.permute.xlu0 0
    %1602 = vperm.xlu0 %1601, %v170
    %v1603 = vpop.permute.xlu0 %1602
    %v1606 = vunpack.c.l.s4 839922192
    %v1607 = vunpack.c.0.s8 %v1606
    %v1608 = vlaneseq
    %v1609 = vshrl.u32 %v1608, 7
    %v1610 = vsub.s32 %v1607, %v1609
    %v1611 = vrot.slane %v1603, %v1610
    %1613 = vset.pattern.permute.xlu0 0
    %1614 = vperm.xlu0 %1613, %v171
    %v1615 = vpop.permute.xlu0 %1614
    %v1618 = vunpack.c.l.s4 839922192
    %v1619 = vunpack.c.0.s8 %v1618
    %v1620 = vlaneseq
    %v1621 = vshrl.u32 %v1620, 7
    %v1622 = vsub.s32 %v1619, %v1621
    %v1623 = vrot.slane %v1615, %v1622
    %1625 = vset.pattern.permute.xlu0 0
    %1626 = vperm.xlu0 %1625, %v172
    %v1627 = vpop.permute.xlu0 %1626
    %v1630 = vunpack.c.l.s4 839922192
    %v1631 = vunpack.c.0.s8 %v1630
    %v1632 = vlaneseq
    %v1633 = vshrl.u32 %v1632, 7
    %v1634 = vsub.s32 %v1631, %v1633
    %v1635 = vrot.slane %v1627, %v1634
    %1637 = vset.pattern.permute.xlu0 0
    %1638 = vperm.xlu0 %1637, %v173
    %v1639 = vpop.permute.xlu0 %1638
    %v1642 = vunpack.c.l.s4 839922192
    %v1643 = vunpack.c.0.s8 %v1642
    %v1644 = vlaneseq
    %v1645 = vshrl.u32 %v1644, 7
    %v1646 = vsub.s32 %v1643, %v1645
    %v1647 = vrot.slane %v1639, %v1646
    %1649 = vset.pattern.permute.xlu0 0
    %1650 = vperm.xlu0 %1649, %v174
    %v1651 = vpop.permute.xlu0 %1650
    %v1654 = vunpack.c.l.s4 839922192
    %v1655 = vunpack.c.0.s8 %v1654
    %v1656 = vlaneseq
    %v1657 = vshrl.u32 %v1656, 7
    %v1658 = vsub.s32 %v1655, %v1657
    %v1659 = vrot.slane %v1651, %v1658
    %1661 = vset.pattern.permute.xlu0 0
    %1662 = vperm.xlu0 %1661, %v175
    %v1663 = vpop.permute.xlu0 %1662
    %v1666 = vunpack.c.l.s4 839922192
    %v1667 = vunpack.c.0.s8 %v1666
    %v1668 = vlaneseq
    %v1669 = vshrl.u32 %v1668, 7
    %v1670 = vsub.s32 %v1667, %v1669
    %v1671 = vrot.slane %v1663, %v1670
    %1673 = vset.pattern.permute.xlu0 0
    %1674 = vperm.xlu0 %1673, %v176
    %v1675 = vpop.permute.xlu0 %1674
    %v1678 = vunpack.c.l.s4 839922192
    %v1679 = vunpack.c.0.s8 %v1678
    %v1680 = vlaneseq
    %v1681 = vshrl.u32 %v1680, 7
    %v1682 = vsub.s32 %v1679, %v1681
    %v1683 = vrot.slane %v1675, %v1682
    %1685 = vset.pattern.permute.xlu0 0
    %1686 = vperm.xlu0 %1685, %v177
    %v1687 = vpop.permute.xlu0 %1686
    %v1690 = vunpack.c.l.s4 839922192
    %v1691 = vunpack.c.0.s8 %v1690
    %v1692 = vlaneseq
    %v1693 = vshrl.u32 %v1692, 7
    %v1694 = vsub.s32 %v1691, %v1693
    %v1695 = vrot.slane %v1687, %v1694
    %1697 = vset.pattern.permute.xlu0 0
    %1698 = vperm.xlu0 %1697, %v178
    %v1699 = vpop.permute.xlu0 %1698
    %v1702 = vunpack.c.l.s4 839922192
    %v1703 = vunpack.c.0.s8 %v1702
    %v1704 = vlaneseq
    %v1705 = vshrl.u32 %v1704, 7
    %v1706 = vsub.s32 %v1703, %v1705
    %v1707 = vrot.slane %v1699, %v1706
    %1709 = vset.pattern.permute.xlu0 0
    %1710 = vperm.xlu0 %1709, %v179
    %v1711 = vpop.permute.xlu0 %1710
    %v1714 = vunpack.c.l.s4 839922192
    %v1715 = vunpack.c.0.s8 %v1714
    %v1716 = vlaneseq
    %v1717 = vshrl.u32 %v1716, 7
    %v1718 = vsub.s32 %v1715, %v1717
    %v1719 = vrot.slane %v1711, %v1718
    %1721 = vset.pattern.permute.xlu0 0
    %1722 = vperm.xlu0 %1721, %v180
    %v1723 = vpop.permute.xlu0 %1722
    %v1726 = vunpack.c.l.s4 839922192
    %v1727 = vunpack.c.0.s8 %v1726
    %v1728 = vlaneseq
    %v1729 = vshrl.u32 %v1728, 7
    %v1730 = vsub.s32 %v1727, %v1729
    %v1731 = vrot.slane %v1723, %v1730
    %1733 = vset.pattern.permute.xlu0 0
    %1734 = vperm.xlu0 %1733, %v181
    %v1735 = vpop.permute.xlu0 %1734
    %v1738 = vunpack.c.l.s4 839922192
    %v1739 = vunpack.c.0.s8 %v1738
    %v1740 = vlaneseq
    %v1741 = vshrl.u32 %v1740, 7
    %v1742 = vsub.s32 %v1739, %v1741
    %v1743 = vrot.slane %v1735, %v1742
    %1745 = vset.pattern.permute.xlu0 0
    %1746 = vperm.xlu0 %1745, %v182
    %v1747 = vpop.permute.xlu0 %1746
    %v1750 = vunpack.c.l.s4 839922192
    %v1751 = vunpack.c.0.s8 %v1750
    %v1752 = vlaneseq
    %v1753 = vshrl.u32 %v1752, 7
    %v1754 = vsub.s32 %v1751, %v1753
    %v1755 = vrot.slane %v1747, %v1754
    %1757 = vset.pattern.permute.xlu0 0
    %1758 = vperm.xlu0 %1757, %v183
    %v1759 = vpop.permute.xlu0 %1758
    %v1762 = vunpack.c.l.s4 839922192
    %v1763 = vunpack.c.0.s8 %v1762
    %v1764 = vlaneseq
    %v1765 = vshrl.u32 %v1764, 7
    %v1766 = vsub.s32 %v1763, %v1765
    %v1767 = vrot.slane %v1759, %v1766
    %1769 = vset.pattern.permute.xlu0 0
    %1770 = vperm.xlu0 %1769, %v184
    %v1771 = vpop.permute.xlu0 %1770
    %v1774 = vunpack.c.l.s4 839922192
    %v1775 = vunpack.c.0.s8 %v1774
    %v1776 = vlaneseq
    %v1777 = vshrl.u32 %v1776, 7
    %v1778 = vsub.s32 %v1775, %v1777
    %v1779 = vrot.slane %v1771, %v1778
    %1781 = vset.pattern.permute.xlu0 0
    %1782 = vperm.xlu0 %1781, %v185
    %v1783 = vpop.permute.xlu0 %1782
    %v1786 = vunpack.c.l.s4 839922192
    %v1787 = vunpack.c.0.s8 %v1786
    %v1788 = vlaneseq
    %v1789 = vshrl.u32 %v1788, 7
    %v1790 = vsub.s32 %v1787, %v1789
    %v1791 = vrot.slane %v1783, %v1790
    %1793 = vset.pattern.permute.xlu0 0
    %1794 = vperm.xlu0 %1793, %v186
    %v1795 = vpop.permute.xlu0 %1794
    %v1798 = vunpack.c.l.s4 839922192
    %v1799 = vunpack.c.0.s8 %v1798
    %v1800 = vlaneseq
    %v1801 = vshrl.u32 %v1800, 7
    %v1802 = vsub.s32 %v1799, %v1801
    %v1803 = vrot.slane %v1795, %v1802
    %1805 = vset.pattern.permute.xlu0 0
    %1806 = vperm.xlu0 %1805, %v187
    %v1807 = vpop.permute.xlu0 %1806
    %v1810 = vunpack.c.l.s4 839922192
    %v1811 = vunpack.c.0.s8 %v1810
    %v1812 = vlaneseq
    %v1813 = vshrl.u32 %v1812, 7
    %v1814 = vsub.s32 %v1811, %v1813
    %v1815 = vrot.slane %v1807, %v1814
    %1817 = vset.pattern.permute.xlu0 0
    %1818 = vperm.xlu0 %1817, %v188
    %v1819 = vpop.permute.xlu0 %1818
    %v1822 = vunpack.c.l.s4 839922192
    %v1823 = vunpack.c.0.s8 %v1822
    %v1824 = vlaneseq
    %v1825 = vshrl.u32 %v1824, 7
    %v1826 = vsub.s32 %v1823, %v1825
    %v1827 = vrot.slane %v1819, %v1826
    %1829 = vset.pattern.permute.xlu0 0
    %1830 = vperm.xlu0 %1829, %v189
    %v1831 = vpop.permute.xlu0 %1830
    %v1834 = vunpack.c.l.s4 839922192
    %v1835 = vunpack.c.0.s8 %v1834
    %v1836 = vlaneseq
    %v1837 = vshrl.u32 %v1836, 7
    %v1838 = vsub.s32 %v1835, %v1837
    %v1839 = vrot.slane %v1831, %v1838
    %1841 = vset.pattern.permute.xlu0 0
    %1842 = vperm.xlu0 %1841, %v190
    %v1843 = vpop.permute.xlu0 %1842
    %v1846 = vunpack.c.l.s4 839922192
    %v1847 = vunpack.c.0.s8 %v1846
    %v1848 = vlaneseq
    %v1849 = vshrl.u32 %v1848, 7
    %v1850 = vsub.s32 %v1847, %v1849
    %v1851 = vrot.slane %v1843, %v1850
    %1853 = vset.pattern.permute.xlu0 0
    %1854 = vperm.xlu0 %1853, %v191
    %v1855 = vpop.permute.xlu0 %1854
    %v1858 = vunpack.c.l.s4 839922192
    %v1859 = vunpack.c.0.s8 %v1858
    %v1860 = vlaneseq
    %v1861 = vshrl.u32 %v1860, 7
    %v1862 = vsub.s32 %v1859, %v1861
    %v1863 = vrot.slane %v1855, %v1862
    %1865 = vset.pattern.permute.xlu0 0
    %1866 = vperm.xlu0 %1865, %v192
    %v1867 = vpop.permute.xlu0 %1866
    %v1870 = vunpack.c.l.s4 839922192
    %v1871 = vunpack.c.0.s8 %v1870
    %v1872 = vlaneseq
    %v1873 = vshrl.u32 %v1872, 7
    %v1874 = vsub.s32 %v1871, %v1873
    %v1875 = vrot.slane %v1867, %v1874
    %1877 = vset.pattern.permute.xlu0 0
    %1878 = vperm.xlu0 %1877, %v193
    %v1879 = vpop.permute.xlu0 %1878
    %v1882 = vunpack.c.l.s4 839922192
    %v1883 = vunpack.c.0.s8 %v1882
    %v1884 = vlaneseq
    %v1885 = vshrl.u32 %v1884, 7
    %v1886 = vsub.s32 %v1883, %v1885
    %v1887 = vrot.slane %v1879, %v1886
    %1889 = vset.pattern.permute.xlu0 0
    %1890 = vperm.xlu0 %1889, %v194
    %v1891 = vpop.permute.xlu0 %1890
    %v1894 = vunpack.c.l.s4 839922192
    %v1895 = vunpack.c.0.s8 %v1894
    %v1896 = vlaneseq
    %v1897 = vshrl.u32 %v1896, 7
    %v1898 = vsub.s32 %v1895, %v1897
    %v1899 = vrot.slane %v1891, %v1898
    %1901 = vset.pattern.permute.xlu0 0
    %1902 = vperm.xlu0 %1901, %v195
    %v1903 = vpop.permute.xlu0 %1902
    %v1906 = vunpack.c.l.s4 839922192
    %v1907 = vunpack.c.0.s8 %v1906
    %v1908 = vlaneseq
    %v1909 = vshrl.u32 %v1908, 7
    %v1910 = vsub.s32 %v1907, %v1909
    %v1911 = vrot.slane %v1903, %v1910
    %1913 = vset.pattern.permute.xlu0 0
    %1914 = vperm.xlu0 %1913, %v196
    %v1915 = vpop.permute.xlu0 %1914
    %v1918 = vunpack.c.l.s4 839922192
    %v1919 = vunpack.c.0.s8 %v1918
    %v1920 = vlaneseq
    %v1921 = vshrl.u32 %v1920, 7
    %v1922 = vsub.s32 %v1919, %v1921
    %v1923 = vrot.slane %v1915, %v1922
    %1925 = vset.pattern.permute.xlu0 0
    %1926 = vperm.xlu0 %1925, %v197
    %v1927 = vpop.permute.xlu0 %1926
    %v1930 = vunpack.c.l.s4 839922192
    %v1931 = vunpack.c.0.s8 %v1930
    %v1932 = vlaneseq
    %v1933 = vshrl.u32 %v1932, 7
    %v1934 = vsub.s32 %v1931, %v1933
    %v1935 = vrot.slane %v1927, %v1934
    %1937 = vset.pattern.permute.xlu0 0
    %1938 = vperm.xlu0 %1937, %v198
    %v1939 = vpop.permute.xlu0 %1938
    %v1942 = vunpack.c.l.s4 839922192
    %v1943 = vunpack.c.0.s8 %v1942
    %v1944 = vlaneseq
    %v1945 = vshrl.u32 %v1944, 7
    %v1946 = vsub.s32 %v1943, %v1945
    %v1947 = vrot.slane %v1939, %v1946
    %1949 = vset.pattern.permute.xlu0 0
    %1950 = vperm.xlu0 %1949, %v199
    %v1951 = vpop.permute.xlu0 %1950
    %v1954 = vunpack.c.l.s4 839922192
    %v1955 = vunpack.c.0.s8 %v1954
    %v1956 = vlaneseq
    %v1957 = vshrl.u32 %v1956, 7
    %v1958 = vsub.s32 %v1955, %v1957
    %v1959 = vrot.slane %v1951, %v1958
    %1961 = vset.pattern.permute.xlu0 0
    %1962 = vperm.xlu0 %1961, %v200
    %v1963 = vpop.permute.xlu0 %1962
    %v1966 = vunpack.c.l.s4 839922192
    %v1967 = vunpack.c.0.s8 %v1966
    %v1968 = vlaneseq
    %v1969 = vshrl.u32 %v1968, 7
    %v1970 = vsub.s32 %v1967, %v1969
    %v1971 = vrot.slane %v1963, %v1970
    %1973 = vset.pattern.permute.xlu0 0
    %1974 = vperm.xlu0 %1973, %v201
    %v1975 = vpop.permute.xlu0 %1974
    %v1978 = vunpack.c.l.s4 839922192
    %v1979 = vunpack.c.0.s8 %v1978
    %v1980 = vlaneseq
    %v1981 = vshrl.u32 %v1980, 7
    %v1982 = vsub.s32 %v1979, %v1981
    %v1983 = vrot.slane %v1975, %v1982
    %1985 = vset.pattern.permute.xlu0 0
    %1986 = vperm.xlu0 %1985, %v202
    %v1987 = vpop.permute.xlu0 %1986
    %v1990 = vunpack.c.l.s4 839922192
    %v1991 = vunpack.c.0.s8 %v1990
    %v1992 = vlaneseq
    %v1993 = vshrl.u32 %v1992, 7
    %v1994 = vsub.s32 %v1991, %v1993
    %v1995 = vrot.slane %v1987, %v1994
    %1997 = vset.pattern.permute.xlu0 0
    %1998 = vperm.xlu0 %1997, %v203
    %v1999 = vpop.permute.xlu0 %1998
    %v2002 = vunpack.c.l.s4 839922192
    %v2003 = vunpack.c.0.s8 %v2002
    %v2004 = vlaneseq
    %v2005 = vshrl.u32 %v2004, 7
    %v2006 = vsub.s32 %v2003, %v2005
    %v2007 = vrot.slane %v1999, %v2006
    %2009 = vset.pattern.permute.xlu0 0
    %2010 = vperm.xlu0 %2009, %v204
    %v2011 = vpop.permute.xlu0 %2010
    %v2014 = vunpack.c.l.s4 839922192
    %v2015 = vunpack.c.0.s8 %v2014
    %v2016 = vlaneseq
    %v2017 = vshrl.u32 %v2016, 7
    %v2018 = vsub.s32 %v2015, %v2017
    %v2019 = vrot.slane %v2011, %v2018
    %2021 = vset.pattern.permute.xlu0 0
    %2022 = vperm.xlu0 %2021, %v205
    %v2023 = vpop.permute.xlu0 %2022
    %v2026 = vunpack.c.l.s4 839922192
    %v2027 = vunpack.c.0.s8 %v2026
    %v2028 = vlaneseq
    %v2029 = vshrl.u32 %v2028, 7
    %v2030 = vsub.s32 %v2027, %v2029
    %v2031 = vrot.slane %v2023, %v2030
    %2033 = vset.pattern.permute.xlu0 0
    %2034 = vperm.xlu0 %2033, %v206
    %v2035 = vpop.permute.xlu0 %2034
    %v2038 = vunpack.c.l.s4 839922192
    %v2039 = vunpack.c.0.s8 %v2038
    %v2040 = vlaneseq
    %v2041 = vshrl.u32 %v2040, 7
    %v2042 = vsub.s32 %v2039, %v2041
    %v2043 = vrot.slane %v2035, %v2042
    %2045 = vset.pattern.permute.xlu0 0
    %2046 = vperm.xlu0 %2045, %v207
    %v2047 = vpop.permute.xlu0 %2046
    %v2050 = vunpack.c.l.s4 839922192
    %v2051 = vunpack.c.0.s8 %v2050
    %v2052 = vlaneseq
    %v2053 = vshrl.u32 %v2052, 7
    %v2054 = vsub.s32 %v2051, %v2053
    %v2055 = vrot.slane %v2047, %v2054
    %2057 = vset.pattern.permute.xlu0 0
    %2058 = vperm.xlu0 %2057, %v208
    %v2059 = vpop.permute.xlu0 %2058
    %v2062 = vunpack.c.l.s4 839922192
    %v2063 = vunpack.c.0.s8 %v2062
    %v2064 = vlaneseq
    %v2065 = vshrl.u32 %v2064, 7
    %v2066 = vsub.s32 %v2063, %v2065
    %v2067 = vrot.slane %v2059, %v2066
    %2069 = vset.pattern.permute.xlu0 0
    %2070 = vperm.xlu0 %2069, %v209
    %v2071 = vpop.permute.xlu0 %2070
    %v2074 = vunpack.c.l.s4 839922192
    %v2075 = vunpack.c.0.s8 %v2074
    %v2076 = vlaneseq
    %v2077 = vshrl.u32 %v2076, 7
    %v2078 = vsub.s32 %v2075, %v2077
    %v2079 = vrot.slane %v2071, %v2078
    %2081 = vset.pattern.permute.xlu0 0
    %2082 = vperm.xlu0 %2081, %v210
    %v2083 = vpop.permute.xlu0 %2082
    %v2086 = vunpack.c.l.s4 839922192
    %v2087 = vunpack.c.0.s8 %v2086
    %v2088 = vlaneseq
    %v2089 = vshrl.u32 %v2088, 7
    %v2090 = vsub.s32 %v2087, %v2089
    %v2091 = vrot.slane %v2083, %v2090
    %2093 = vset.pattern.permute.xlu0 0
    %2094 = vperm.xlu0 %2093, %v211
    %v2095 = vpop.permute.xlu0 %2094
    %v2098 = vunpack.c.l.s4 839922192
    %v2099 = vunpack.c.0.s8 %v2098
    %v2100 = vlaneseq
    %v2101 = vshrl.u32 %v2100, 7
    %v2102 = vsub.s32 %v2099, %v2101
    %v2103 = vrot.slane %v2095, %v2102
    %2105 = vset.pattern.permute.xlu0 0
    %2106 = vperm.xlu0 %2105, %v212
    %v2107 = vpop.permute.xlu0 %2106
    %v2110 = vunpack.c.l.s4 839922192
    %v2111 = vunpack.c.0.s8 %v2110
    %v2112 = vlaneseq
    %v2113 = vshrl.u32 %v2112, 7
    %v2114 = vsub.s32 %v2111, %v2113
    %v2115 = vrot.slane %v2107, %v2114
    %2117 = vset.pattern.permute.xlu0 0
    %2118 = vperm.xlu0 %2117, %v213
    %v2119 = vpop.permute.xlu0 %2118
    %v2122 = vunpack.c.l.s4 839922192
    %v2123 = vunpack.c.0.s8 %v2122
    %v2124 = vlaneseq
    %v2125 = vshrl.u32 %v2124, 7
    %v2126 = vsub.s32 %v2123, %v2125
    %v2127 = vrot.slane %v2119, %v2126
    %2129 = vset.pattern.permute.xlu0 0
    %2130 = vperm.xlu0 %2129, %v214
    %v2131 = vpop.permute.xlu0 %2130
    %v2134 = vunpack.c.l.s4 839922192
    %v2135 = vunpack.c.0.s8 %v2134
    %v2136 = vlaneseq
    %v2137 = vshrl.u32 %v2136, 7
    %v2138 = vsub.s32 %v2135, %v2137
    %v2139 = vrot.slane %v2131, %v2138
    %2141 = vset.pattern.permute.xlu0 0
    %2142 = vperm.xlu0 %2141, %v215
    %v2143 = vpop.permute.xlu0 %2142
    %v2146 = vunpack.c.l.s4 839922192
    %v2147 = vunpack.c.0.s8 %v2146
    %v2148 = vlaneseq
    %v2149 = vshrl.u32 %v2148, 7
    %v2150 = vsub.s32 %v2147, %v2149
    %v2151 = vrot.slane %v2143, %v2150
    %2153 = vset.pattern.permute.xlu0 0
    %2154 = vperm.xlu0 %2153, %v216
    %v2155 = vpop.permute.xlu0 %2154
    %v2158 = vunpack.c.l.s4 839922192
    %v2159 = vunpack.c.0.s8 %v2158
    %v2160 = vlaneseq
    %v2161 = vshrl.u32 %v2160, 7
    %v2162 = vsub.s32 %v2159, %v2161
    %v2163 = vrot.slane %v2155, %v2162
    %2165 = vset.pattern.permute.xlu0 0
    %2166 = vperm.xlu0 %2165, %v217
    %v2167 = vpop.permute.xlu0 %2166
    %v2170 = vunpack.c.l.s4 839922192
    %v2171 = vunpack.c.0.s8 %v2170
    %v2172 = vlaneseq
    %v2173 = vshrl.u32 %v2172, 7
    %v2174 = vsub.s32 %v2171, %v2173
    %v2175 = vrot.slane %v2167, %v2174
    %2177 = vset.pattern.permute.xlu0 0
    %2178 = vperm.xlu0 %2177, %v218
    %v2179 = vpop.permute.xlu0 %2178
    %v2182 = vunpack.c.l.s4 839922192
    %v2183 = vunpack.c.0.s8 %v2182
    %v2184 = vlaneseq
    %v2185 = vshrl.u32 %v2184, 7
    %v2186 = vsub.s32 %v2183, %v2185
    %v2187 = vrot.slane %v2179, %v2186
    %2189 = vset.pattern.permute.xlu0 0
    %2190 = vperm.xlu0 %2189, %v219
    %v2191 = vpop.permute.xlu0 %2190
    %v2194 = vunpack.c.l.s4 839922192
    %v2195 = vunpack.c.0.s8 %v2194
    %v2196 = vlaneseq
    %v2197 = vshrl.u32 %v2196, 7
    %v2198 = vsub.s32 %v2195, %v2197
    %v2199 = vrot.slane %v2191, %v2198
    %2201 = vset.pattern.permute.xlu0 0
    %2202 = vperm.xlu0 %2201, %v220
    %v2203 = vpop.permute.xlu0 %2202
    %v2206 = vunpack.c.l.s4 839922192
    %v2207 = vunpack.c.0.s8 %v2206
    %v2208 = vlaneseq
    %v2209 = vshrl.u32 %v2208, 7
    %v2210 = vsub.s32 %v2207, %v2209
    %v2211 = vrot.slane %v2203, %v2210
    %2213 = vset.pattern.permute.xlu0 0
    %2214 = vperm.xlu0 %2213, %v221
    %v2215 = vpop.permute.xlu0 %2214
    %v2218 = vunpack.c.l.s4 839922192
    %v2219 = vunpack.c.0.s8 %v2218
    %v2220 = vlaneseq
    %v2221 = vshrl.u32 %v2220, 7
    %v2222 = vsub.s32 %v2219, %v2221
    %v2223 = vrot.slane %v2215, %v2222
    %2225 = vset.pattern.permute.xlu0 0
    %2226 = vperm.xlu0 %2225, %v222
    %v2227 = vpop.permute.xlu0 %2226
    %v2230 = vunpack.c.l.s4 839922192
    %v2231 = vunpack.c.0.s8 %v2230
    %v2232 = vlaneseq
    %v2233 = vshrl.u32 %v2232, 7
    %v2234 = vsub.s32 %v2231, %v2233
    %v2235 = vrot.slane %v2227, %v2234
    %2237 = vset.pattern.permute.xlu0 0
    %2238 = vperm.xlu0 %2237, %v223
    %v2239 = vpop.permute.xlu0 %2238
    %v2242 = vunpack.c.l.s4 839922192
    %v2243 = vunpack.c.0.s8 %v2242
    %v2244 = vlaneseq
    %v2245 = vshrl.u32 %v2244, 7
    %v2246 = vsub.s32 %v2243, %v2245
    %v2247 = vrot.slane %v2239, %v2246
    %2249 = vset.pattern.permute.xlu0 0
    %2250 = vperm.xlu0 %2249, %v224
    %v2251 = vpop.permute.xlu0 %2250
    %v2254 = vunpack.c.l.s4 839922192
    %v2255 = vunpack.c.0.s8 %v2254
    %v2256 = vlaneseq
    %v2257 = vshrl.u32 %v2256, 7
    %v2258 = vsub.s32 %v2255, %v2257
    %v2259 = vrot.slane %v2251, %v2258
    %2261 = vset.pattern.permute.xlu0 0
    %2262 = vperm.xlu0 %2261, %v225
    %v2263 = vpop.permute.xlu0 %2262
    %v2266 = vunpack.c.l.s4 839922192
    %v2267 = vunpack.c.0.s8 %v2266
    %v2268 = vlaneseq
    %v2269 = vshrl.u32 %v2268, 7
    %v2270 = vsub.s32 %v2267, %v2269
    %v2271 = vrot.slane %v2263, %v2270
    %2273 = vset.pattern.permute.xlu0 0
    %2274 = vperm.xlu0 %2273, %v226
    %v2275 = vpop.permute.xlu0 %2274
    %v2278 = vunpack.c.l.s4 839922192
    %v2279 = vunpack.c.0.s8 %v2278
    %v2280 = vlaneseq
    %v2281 = vshrl.u32 %v2280, 7
    %v2282 = vsub.s32 %v2279, %v2281
    %v2283 = vrot.slane %v2275, %v2282
    %2285 = vset.pattern.permute.xlu0 0
    %2286 = vperm.xlu0 %2285, %v227
    %v2287 = vpop.permute.xlu0 %2286
    %v2290 = vunpack.c.l.s4 839922192
    %v2291 = vunpack.c.0.s8 %v2290
    %v2292 = vlaneseq
    %v2293 = vshrl.u32 %v2292, 7
    %v2294 = vsub.s32 %v2291, %v2293
    %v2295 = vrot.slane %v2287, %v2294
    %2297 = vset.pattern.permute.xlu0 0
    %2298 = vperm.xlu0 %2297, %v228
    %v2299 = vpop.permute.xlu0 %2298
    %v2302 = vunpack.c.l.s4 839922192
    %v2303 = vunpack.c.0.s8 %v2302
    %v2304 = vlaneseq
    %v2305 = vshrl.u32 %v2304, 7
    %v2306 = vsub.s32 %v2303, %v2305
    %v2307 = vrot.slane %v2299, %v2306
    %2309 = vset.pattern.permute.xlu0 0
    %2310 = vperm.xlu0 %2309, %v229
    %v2311 = vpop.permute.xlu0 %2310
    %v2314 = vunpack.c.l.s4 839922192
    %v2315 = vunpack.c.0.s8 %v2314
    %v2316 = vlaneseq
    %v2317 = vshrl.u32 %v2316, 7
    %v2318 = vsub.s32 %v2315, %v2317
    %v2319 = vrot.slane %v2311, %v2318
    %2321 = vset.pattern.permute.xlu0 0
    %2322 = vperm.xlu0 %2321, %v230
    %v2323 = vpop.permute.xlu0 %2322
    %v2326 = vunpack.c.l.s4 839922192
    %v2327 = vunpack.c.0.s8 %v2326
    %v2328 = vlaneseq
    %v2329 = vshrl.u32 %v2328, 7
    %v2330 = vsub.s32 %v2327, %v2329
    %v2331 = vrot.slane %v2323, %v2330
    %2333 = vset.pattern.permute.xlu0 0
    %2334 = vperm.xlu0 %2333, %v231
    %v2335 = vpop.permute.xlu0 %2334
    %v2338 = vunpack.c.l.s4 839922192
    %v2339 = vunpack.c.0.s8 %v2338
    %v2340 = vlaneseq
    %v2341 = vshrl.u32 %v2340, 7
    %v2342 = vsub.s32 %v2339, %v2341
    %v2343 = vrot.slane %v2335, %v2342
    %2345 = vset.pattern.permute.xlu0 0
    %2346 = vperm.xlu0 %2345, %v232
    %v2347 = vpop.permute.xlu0 %2346
    %v2350 = vunpack.c.l.s4 839922192
    %v2351 = vunpack.c.0.s8 %v2350
    %v2352 = vlaneseq
    %v2353 = vshrl.u32 %v2352, 7
    %v2354 = vsub.s32 %v2351, %v2353
    %v2355 = vrot.slane %v2347, %v2354
    %2357 = vset.pattern.permute.xlu0 0
    %2358 = vperm.xlu0 %2357, %v233
    %v2359 = vpop.permute.xlu0 %2358
    %v2362 = vunpack.c.l.s4 839922192
    %v2363 = vunpack.c.0.s8 %v2362
    %v2364 = vlaneseq
    %v2365 = vshrl.u32 %v2364, 7
    %v2366 = vsub.s32 %v2363, %v2365
    %v2367 = vrot.slane %v2359, %v2366
    %2369 = vset.pattern.permute.xlu0 0
    %2370 = vperm.xlu0 %2369, %v234
    %v2371 = vpop.permute.xlu0 %2370
    %v2374 = vunpack.c.l.s4 839922192
    %v2375 = vunpack.c.0.s8 %v2374
    %v2376 = vlaneseq
    %v2377 = vshrl.u32 %v2376, 7
    %v2378 = vsub.s32 %v2375, %v2377
    %v2379 = vrot.slane %v2371, %v2378
    %2381 = vset.pattern.permute.xlu0 0
    %2382 = vperm.xlu0 %2381, %v235
    %v2383 = vpop.permute.xlu0 %2382
    %v2386 = vunpack.c.l.s4 839922192
    %v2387 = vunpack.c.0.s8 %v2386
    %v2388 = vlaneseq
    %v2389 = vshrl.u32 %v2388, 7
    %v2390 = vsub.s32 %v2387, %v2389
    %v2391 = vrot.slane %v2383, %v2390
    %2393 = vset.pattern.permute.xlu0 0
    %2394 = vperm.xlu0 %2393, %v236
    %v2395 = vpop.permute.xlu0 %2394
    %v2398 = vunpack.c.l.s4 839922192
    %v2399 = vunpack.c.0.s8 %v2398
    %v2400 = vlaneseq
    %v2401 = vshrl.u32 %v2400, 7
    %v2402 = vsub.s32 %v2399, %v2401
    %v2403 = vrot.slane %v2395, %v2402
    %2405 = vset.pattern.permute.xlu0 0
    %2406 = vperm.xlu0 %2405, %v237
    %v2407 = vpop.permute.xlu0 %2406
    %v2410 = vunpack.c.l.s4 839922192
    %v2411 = vunpack.c.0.s8 %v2410
    %v2412 = vlaneseq
    %v2413 = vshrl.u32 %v2412, 7
    %v2414 = vsub.s32 %v2411, %v2413
    %v2415 = vrot.slane %v2407, %v2414
    %2417 = vset.pattern.permute.xlu0 0
    %2418 = vperm.xlu0 %2417, %v238
    %v2419 = vpop.permute.xlu0 %2418
    %v2422 = vunpack.c.l.s4 839922192
    %v2423 = vunpack.c.0.s8 %v2422
    %v2424 = vlaneseq
    %v2425 = vshrl.u32 %v2424, 7
    %v2426 = vsub.s32 %v2423, %v2425
    %v2427 = vrot.slane %v2419, %v2426
    %2429 = vset.pattern.permute.xlu0 0
    %2430 = vperm.xlu0 %2429, %v239
    %v2431 = vpop.permute.xlu0 %2430
    %v2434 = vunpack.c.l.s4 839922192
    %v2435 = vunpack.c.0.s8 %v2434
    %v2436 = vlaneseq
    %v2437 = vshrl.u32 %v2436, 7
    %v2438 = vsub.s32 %v2435, %v2437
    %v2439 = vrot.slane %v2431, %v2438
    %2441 = vset.pattern.permute.xlu0 0
    %2442 = vperm.xlu0 %2441, %v240
    %v2443 = vpop.permute.xlu0 %2442
    %v2446 = vunpack.c.l.s4 839922192
    %v2447 = vunpack.c.0.s8 %v2446
    %v2448 = vlaneseq
    %v2449 = vshrl.u32 %v2448, 7
    %v2450 = vsub.s32 %v2447, %v2449
    %v2451 = vrot.slane %v2443, %v2450
    %2453 = vset.pattern.permute.xlu0 0
    %2454 = vperm.xlu0 %2453, %v241
    %v2455 = vpop.permute.xlu0 %2454
    %v2458 = vunpack.c.l.s4 839922192
    %v2459 = vunpack.c.0.s8 %v2458
    %v2460 = vlaneseq
    %v2461 = vshrl.u32 %v2460, 7
    %v2462 = vsub.s32 %v2459, %v2461
    %v2463 = vrot.slane %v2455, %v2462
    %2465 = vset.pattern.permute.xlu0 0
    %2466 = vperm.xlu0 %2465, %v242
    %v2467 = vpop.permute.xlu0 %2466
    %v2470 = vunpack.c.l.s4 839922192
    %v2471 = vunpack.c.0.s8 %v2470
    %v2472 = vlaneseq
    %v2473 = vshrl.u32 %v2472, 7
    %v2474 = vsub.s32 %v2471, %v2473
    %v2475 = vrot.slane %v2467, %v2474
    %2477 = vset.pattern.permute.xlu0 0
    %2478 = vperm.xlu0 %2477, %v243
    %v2479 = vpop.permute.xlu0 %2478
    %v2482 = vunpack.c.l.s4 839922192
    %v2483 = vunpack.c.0.s8 %v2482
    %v2484 = vlaneseq
    %v2485 = vshrl.u32 %v2484, 7
    %v2486 = vsub.s32 %v2483, %v2485
    %v2487 = vrot.slane %v2479, %v2486
    %2489 = vset.pattern.permute.xlu0 0
    %2490 = vperm.xlu0 %2489, %v244
    %v2491 = vpop.permute.xlu0 %2490
    %v2494 = vunpack.c.l.s4 839922192
    %v2495 = vunpack.c.0.s8 %v2494
    %v2496 = vlaneseq
    %v2497 = vshrl.u32 %v2496, 7
    %v2498 = vsub.s32 %v2495, %v2497
    %v2499 = vrot.slane %v2491, %v2498
    %2501 = vset.pattern.permute.xlu0 0
    %2502 = vperm.xlu0 %2501, %v245
    %v2503 = vpop.permute.xlu0 %2502
    %v2506 = vunpack.c.l.s4 839922192
    %v2507 = vunpack.c.0.s8 %v2506
    %v2508 = vlaneseq
    %v2509 = vshrl.u32 %v2508, 7
    %v2510 = vsub.s32 %v2507, %v2509
    %v2511 = vrot.slane %v2503, %v2510
    %2513 = vset.pattern.permute.xlu0 0
    %2514 = vperm.xlu0 %2513, %v246
    %v2515 = vpop.permute.xlu0 %2514
    %v2518 = vunpack.c.l.s4 839922192
    %v2519 = vunpack.c.0.s8 %v2518
    %v2520 = vlaneseq
    %v2521 = vshrl.u32 %v2520, 7
    %v2522 = vsub.s32 %v2519, %v2521
    %v2523 = vrot.slane %v2515, %v2522
    %2525 = vset.pattern.permute.xlu0 0
    %2526 = vperm.xlu0 %2525, %v247
    %v2527 = vpop.permute.xlu0 %2526
    %v2530 = vunpack.c.l.s4 839922192
    %v2531 = vunpack.c.0.s8 %v2530
    %v2532 = vlaneseq
    %v2533 = vshrl.u32 %v2532, 7
    %v2534 = vsub.s32 %v2531, %v2533
    %v2535 = vrot.slane %v2527, %v2534
    %2537 = vset.pattern.permute.xlu0 0
    %2538 = vperm.xlu0 %2537, %v248
    %v2539 = vpop.permute.xlu0 %2538
    %v2542 = vunpack.c.l.s4 839922192
    %v2543 = vunpack.c.0.s8 %v2542
    %v2544 = vlaneseq
    %v2545 = vshrl.u32 %v2544, 7
    %v2546 = vsub.s32 %v2543, %v2545
    %v2547 = vrot.slane %v2539, %v2546
    %2549 = vset.pattern.permute.xlu0 0
    %2550 = vperm.xlu0 %2549, %v249
    %v2551 = vpop.permute.xlu0 %2550
    %v2554 = vunpack.c.l.s4 839922192
    %v2555 = vunpack.c.0.s8 %v2554
    %v2556 = vlaneseq
    %v2557 = vshrl.u32 %v2556, 7
    %v2558 = vsub.s32 %v2555, %v2557
    %v2559 = vrot.slane %v2551, %v2558
    %2561 = vset.pattern.permute.xlu0 0
    %2562 = vperm.xlu0 %2561, %v250
    %v2563 = vpop.permute.xlu0 %2562
    %v2566 = vunpack.c.l.s4 839922192
    %v2567 = vunpack.c.0.s8 %v2566
    %v2568 = vlaneseq
    %v2569 = vshrl.u32 %v2568, 7
    %v2570 = vsub.s32 %v2567, %v2569
    %v2571 = vrot.slane %v2563, %v2570
    %2573 = vset.pattern.permute.xlu0 0
    %2574 = vperm.xlu0 %2573, %v251
    %v2575 = vpop.permute.xlu0 %2574
    %v2578 = vunpack.c.l.s4 839922192
    %v2579 = vunpack.c.0.s8 %v2578
    %v2580 = vlaneseq
    %v2581 = vshrl.u32 %v2580, 7
    %v2582 = vsub.s32 %v2579, %v2581
    %v2583 = vrot.slane %v2575, %v2582
    %2585 = vset.pattern.permute.xlu0 0
    %2586 = vperm.xlu0 %2585, %v252
    %v2587 = vpop.permute.xlu0 %2586
    %v2590 = vunpack.c.l.s4 839922192
    %v2591 = vunpack.c.0.s8 %v2590
    %v2592 = vlaneseq
    %v2593 = vshrl.u32 %v2592, 7
    %v2594 = vsub.s32 %v2591, %v2593
    %v2595 = vrot.slane %v2587, %v2594
    %2597 = vset.pattern.permute.xlu0 0
    %2598 = vperm.xlu0 %2597, %v253
    %v2599 = vpop.permute.xlu0 %2598
    %v2602 = vunpack.c.l.s4 839922192
    %v2603 = vunpack.c.0.s8 %v2602
    %v2604 = vlaneseq
    %v2605 = vshrl.u32 %v2604, 7
    %v2606 = vsub.s32 %v2603, %v2605
    %v2607 = vrot.slane %v2599, %v2606
    %2609 = vset.pattern.permute.xlu0 0
    %2610 = vperm.xlu0 %2609, %v254
    %v2611 = vpop.permute.xlu0 %2610
    %v2614 = vunpack.c.l.s4 839922192
    %v2615 = vunpack.c.0.s8 %v2614
    %v2616 = vlaneseq
    %v2617 = vshrl.u32 %v2616, 7
    %v2618 = vsub.s32 %v2615, %v2617
    %v2619 = vrot.slane %v2611, %v2618
    %2621 = vset.pattern.permute.xlu0 0
    %2622 = vperm.xlu0 %2621, %v255
    %v2623 = vpop.permute.xlu0 %2622
    %v2626 = vunpack.c.l.s4 839922192
    %v2627 = vunpack.c.0.s8 %v2626
    %v2628 = vlaneseq
    %v2629 = vshrl.u32 %v2628, 7
    %v2630 = vsub.s32 %v2627, %v2629
    %v2631 = vrot.slane %v2623, %v2630
    %2633 = vset.pattern.permute.xlu0 0
    %2634 = vperm.xlu0 %2633, %v256
    %v2635 = vpop.permute.xlu0 %2634
    %v2638 = vunpack.c.l.s4 839922192
    %v2639 = vunpack.c.0.s8 %v2638
    %v2640 = vlaneseq
    %v2641 = vshrl.u32 %v2640, 7
    %v2642 = vsub.s32 %v2639, %v2641
    %v2643 = vrot.slane %v2635, %v2642
    %2645 = vset.pattern.permute.xlu0 0
    %2646 = vperm.xlu0 %2645, %v257
    %v2647 = vpop.permute.xlu0 %2646
    %v2650 = vunpack.c.l.s4 839922192
    %v2651 = vunpack.c.0.s8 %v2650
    %v2652 = vlaneseq
    %v2653 = vshrl.u32 %v2652, 7
    %v2654 = vsub.s32 %v2651, %v2653
    %v2655 = vrot.slane %v2647, %v2654
    %2657 = vset.pattern.permute.xlu0 0
    %2658 = vperm.xlu0 %2657, %v258
    %v2659 = vpop.permute.xlu0 %2658
    %v2662 = vunpack.c.l.s4 839922192
    %v2663 = vunpack.c.0.s8 %v2662
    %v2664 = vlaneseq
    %v2665 = vshrl.u32 %v2664, 7
    %v2666 = vsub.s32 %v2663, %v2665
    %v2667 = vrot.slane %v2659, %v2666
    %2669 = vset.pattern.permute.xlu0 0
    %2670 = vperm.xlu0 %2669, %v259
    %v2671 = vpop.permute.xlu0 %2670
    %v2674 = vunpack.c.l.s4 839922192
    %v2675 = vunpack.c.0.s8 %v2674
    %v2676 = vlaneseq
    %v2677 = vshrl.u32 %v2676, 7
    %v2678 = vsub.s32 %v2675, %v2677
    %v2679 = vrot.slane %v2671, %v2678
    %2681 = vset.pattern.permute.xlu0 0
    %2682 = vperm.xlu0 %2681, %v260
    %v2683 = vpop.permute.xlu0 %2682
    %v2686 = vunpack.c.l.s4 839922192
    %v2687 = vunpack.c.0.s8 %v2686
    %v2688 = vlaneseq
    %v2689 = vshrl.u32 %v2688, 7
    %v2690 = vsub.s32 %v2687, %v2689
    %v2691 = vrot.slane %v2683, %v2690
    %2693 = vset.pattern.permute.xlu0 0
    %2694 = vperm.xlu0 %2693, %v261
    %v2695 = vpop.permute.xlu0 %2694
    %v2698 = vunpack.c.l.s4 839922192
    %v2699 = vunpack.c.0.s8 %v2698
    %v2700 = vlaneseq
    %v2701 = vshrl.u32 %v2700, 7
    %v2702 = vsub.s32 %v2699, %v2701
    %v2703 = vrot.slane %v2695, %v2702
    %2705 = vset.pattern.permute.xlu0 0
    %2706 = vperm.xlu0 %2705, %v262
    %v2707 = vpop.permute.xlu0 %2706
    %v2710 = vunpack.c.l.s4 839922192
    %v2711 = vunpack.c.0.s8 %v2710
    %v2712 = vlaneseq
    %v2713 = vshrl.u32 %v2712, 7
    %v2714 = vsub.s32 %v2711, %v2713
    %v2715 = vrot.slane %v2707, %v2714
    %2717 = vset.pattern.permute.xlu0 0
    %2718 = vperm.xlu0 %2717, %v263
    %v2719 = vpop.permute.xlu0 %2718
    %v2722 = vunpack.c.l.s4 839922192
    %v2723 = vunpack.c.0.s8 %v2722
    %v2724 = vlaneseq
    %v2725 = vshrl.u32 %v2724, 7
    %v2726 = vsub.s32 %v2723, %v2725
    %v2727 = vrot.slane %v2719, %v2726
    %2729 = vset.pattern.permute.xlu0 0
    %2730 = vperm.xlu0 %2729, %v264
    %v2731 = vpop.permute.xlu0 %2730
    %v2734 = vunpack.c.l.s4 839922192
    %v2735 = vunpack.c.0.s8 %v2734
    %v2736 = vlaneseq
    %v2737 = vshrl.u32 %v2736, 7
    %v2738 = vsub.s32 %v2735, %v2737
    %v2739 = vrot.slane %v2731, %v2738
    %2741 = vset.pattern.permute.xlu0 0
    %2742 = vperm.xlu0 %2741, %v265
    %v2743 = vpop.permute.xlu0 %2742
    %v2746 = vunpack.c.l.s4 839922192
    %v2747 = vunpack.c.0.s8 %v2746
    %v2748 = vlaneseq
    %v2749 = vshrl.u32 %v2748, 7
    %v2750 = vsub.s32 %v2747, %v2749
    %v2751 = vrot.slane %v2743, %v2750
    %2753 = vset.pattern.permute.xlu0 0
    %2754 = vperm.xlu0 %2753, %v266
    %v2755 = vpop.permute.xlu0 %2754
    %v2758 = vunpack.c.l.s4 839922192
    %v2759 = vunpack.c.0.s8 %v2758
    %v2760 = vlaneseq
    %v2761 = vshrl.u32 %v2760, 7
    %v2762 = vsub.s32 %v2759, %v2761
    %v2763 = vrot.slane %v2755, %v2762
    %2765 = vset.pattern.permute.xlu0 0
    %2766 = vperm.xlu0 %2765, %v267
    %v2767 = vpop.permute.xlu0 %2766
    %v2770 = vunpack.c.l.s4 839922192
    %v2771 = vunpack.c.0.s8 %v2770
    %v2772 = vlaneseq
    %v2773 = vshrl.u32 %v2772, 7
    %v2774 = vsub.s32 %v2771, %v2773
    %v2775 = vrot.slane %v2767, %v2774
    %2777 = vset.pattern.permute.xlu0 0
    %2778 = vperm.xlu0 %2777, %v268
    %v2779 = vpop.permute.xlu0 %2778
    %v2782 = vunpack.c.l.s4 839922192
    %v2783 = vunpack.c.0.s8 %v2782
    %v2784 = vlaneseq
    %v2785 = vshrl.u32 %v2784, 7
    %v2786 = vsub.s32 %v2783, %v2785
    %v2787 = vrot.slane %v2779, %v2786
    %2789 = vset.pattern.permute.xlu0 0
    %2790 = vperm.xlu0 %2789, %v269
    %v2791 = vpop.permute.xlu0 %2790
    %v2794 = vunpack.c.l.s4 839922192
    %v2795 = vunpack.c.0.s8 %v2794
    %v2796 = vlaneseq
    %v2797 = vshrl.u32 %v2796, 7
    %v2798 = vsub.s32 %v2795, %v2797
    %v2799 = vrot.slane %v2791, %v2798
    %2801 = vset.pattern.permute.xlu0 0
    %2802 = vperm.xlu0 %2801, %v270
    %v2803 = vpop.permute.xlu0 %2802
    %v2806 = vunpack.c.l.s4 839922192
    %v2807 = vunpack.c.0.s8 %v2806
    %v2808 = vlaneseq
    %v2809 = vshrl.u32 %v2808, 7
    %v2810 = vsub.s32 %v2807, %v2809
    %v2811 = vrot.slane %v2803, %v2810
    %2813 = vset.pattern.permute.xlu0 0
    %2814 = vperm.xlu0 %2813, %v271
    %v2815 = vpop.permute.xlu0 %2814
    %v2818 = vunpack.c.l.s4 839922192
    %v2819 = vunpack.c.0.s8 %v2818
    %v2820 = vlaneseq
    %v2821 = vshrl.u32 %v2820, 7
    %v2822 = vsub.s32 %v2819, %v2821
    %v2823 = vrot.slane %v2815, %v2822
    %2825 = vset.pattern.permute.xlu0 0
    %2826 = vperm.xlu0 %2825, %v272
    %v2827 = vpop.permute.xlu0 %2826
    %v2830 = vunpack.c.l.s4 839922192
    %v2831 = vunpack.c.0.s8 %v2830
    %v2832 = vlaneseq
    %v2833 = vshrl.u32 %v2832, 7
    %v2834 = vsub.s32 %v2831, %v2833
    %v2835 = vrot.slane %v2827, %v2834
    %2837 = vset.pattern.permute.xlu0 0
    %2838 = vperm.xlu0 %2837, %v273
    %v2839 = vpop.permute.xlu0 %2838
    %v2842 = vunpack.c.l.s4 839922192
    %v2843 = vunpack.c.0.s8 %v2842
    %v2844 = vlaneseq
    %v2845 = vshrl.u32 %v2844, 7
    %v2846 = vsub.s32 %v2843, %v2845
    %v2847 = vrot.slane %v2839, %v2846
    %2849 = vset.pattern.permute.xlu0 0
    %2850 = vperm.xlu0 %2849, %v274
    %v2851 = vpop.permute.xlu0 %2850
    %v2854 = vunpack.c.l.s4 839922192
    %v2855 = vunpack.c.0.s8 %v2854
    %v2856 = vlaneseq
    %v2857 = vshrl.u32 %v2856, 7
    %v2858 = vsub.s32 %v2855, %v2857
    %v2859 = vrot.slane %v2851, %v2858
    %2861 = vset.pattern.permute.xlu0 0
    %2862 = vperm.xlu0 %2861, %v275
    %v2863 = vpop.permute.xlu0 %2862
    %v2866 = vunpack.c.l.s4 839922192
    %v2867 = vunpack.c.0.s8 %v2866
    %v2868 = vlaneseq
    %v2869 = vshrl.u32 %v2868, 7
    %v2870 = vsub.s32 %v2867, %v2869
    %v2871 = vrot.slane %v2863, %v2870
    %2873 = vset.pattern.permute.xlu0 0
    %2874 = vperm.xlu0 %2873, %v276
    %v2875 = vpop.permute.xlu0 %2874
    %v2878 = vunpack.c.l.s4 839922192
    %v2879 = vunpack.c.0.s8 %v2878
    %v2880 = vlaneseq
    %v2881 = vshrl.u32 %v2880, 7
    %v2882 = vsub.s32 %v2879, %v2881
    %v2883 = vrot.slane %v2875, %v2882
    %2885 = vset.pattern.permute.xlu0 0
    %2886 = vperm.xlu0 %2885, %v277
    %v2887 = vpop.permute.xlu0 %2886
    %v2890 = vunpack.c.l.s4 839922192
    %v2891 = vunpack.c.0.s8 %v2890
    %v2892 = vlaneseq
    %v2893 = vshrl.u32 %v2892, 7
    %v2894 = vsub.s32 %v2891, %v2893
    %v2895 = vrot.slane %v2887, %v2894
    %2897 = vset.pattern.permute.xlu0 0
    %2898 = vperm.xlu0 %2897, %v278
    %v2899 = vpop.permute.xlu0 %2898
    %v2902 = vunpack.c.l.s4 839922192
    %v2903 = vunpack.c.0.s8 %v2902
    %v2904 = vlaneseq
    %v2905 = vshrl.u32 %v2904, 7
    %v2906 = vsub.s32 %v2903, %v2905
    %v2907 = vrot.slane %v2899, %v2906
    %2909 = vset.pattern.permute.xlu0 0
    %2910 = vperm.xlu0 %2909, %v279
    %v2911 = vpop.permute.xlu0 %2910
    %v2914 = vunpack.c.l.s4 839922192
    %v2915 = vunpack.c.0.s8 %v2914
    %v2916 = vlaneseq
    %v2917 = vshrl.u32 %v2916, 7
    %v2918 = vsub.s32 %v2915, %v2917
    %v2919 = vrot.slane %v2911, %v2918
    %2921 = vset.pattern.permute.xlu0 0
    %2922 = vperm.xlu0 %2921, %v280
    %v2923 = vpop.permute.xlu0 %2922
    %v2926 = vunpack.c.l.s4 839922192
    %v2927 = vunpack.c.0.s8 %v2926
    %v2928 = vlaneseq
    %v2929 = vshrl.u32 %v2928, 7
    %v2930 = vsub.s32 %v2927, %v2929
    %v2931 = vrot.slane %v2923, %v2930
    %2933 = vset.pattern.permute.xlu0 0
    %2934 = vperm.xlu0 %2933, %v281
    %v2935 = vpop.permute.xlu0 %2934
    %v2938 = vunpack.c.l.s4 839922192
    %v2939 = vunpack.c.0.s8 %v2938
    %v2940 = vlaneseq
    %v2941 = vshrl.u32 %v2940, 7
    %v2942 = vsub.s32 %v2939, %v2941
    %v2943 = vrot.slane %v2935, %v2942
    %v3072 = vunpack.c.l.b16 %v1419
    %v3073 = vunpack.c.l.b16 %v1431
    %v3074 = vunpack.c.l.b16 %v1443
    %v3075 = vunpack.c.l.b16 %v1455
    %v3076 = vunpack.c.l.b16 %v1467
    %v3077 = vunpack.c.l.b16 %v1479
    %v3078 = vunpack.c.l.b16 %v1491
    %v3079 = vunpack.c.l.b16 %v1503
    %v3080 = vunpack.c.l.b16 %v1515
    %v3081 = vunpack.c.l.b16 %v1527
    %v3082 = vunpack.c.l.b16 %v1539
    %v3083 = vunpack.c.l.b16 %v1551
    %v3084 = vunpack.c.l.b16 %v1563
    %v3085 = vunpack.c.l.b16 %v1575
    %v3086 = vunpack.c.l.b16 %v1587
    %v3087 = vunpack.c.l.b16 %v1599
    %v3088 = vunpack.c.l.b16 %v1611
    %v3089 = vunpack.c.l.b16 %v1623
    %v3090 = vunpack.c.l.b16 %v1635
    %v3091 = vunpack.c.l.b16 %v1647
    %v3092 = vunpack.c.l.b16 %v1659
    %v3093 = vunpack.c.l.b16 %v1671
    %v3094 = vunpack.c.l.b16 %v1683
    %v3095 = vunpack.c.l.b16 %v1695
    %v3096 = vunpack.c.l.b16 %v1707
    %v3097 = vunpack.c.l.b16 %v1719
    %v3098 = vunpack.c.l.b16 %v1731
    %v3099 = vunpack.c.l.b16 %v1743
    %v3100 = vunpack.c.l.b16 %v1755
    %v3101 = vunpack.c.l.b16 %v1767
    %v3102 = vunpack.c.l.b16 %v1779
    %v3103 = vunpack.c.l.b16 %v1791
    %v3104 = vunpack.c.l.b16 %v1803
    %v3105 = vunpack.c.l.b16 %v1815
    %v3106 = vunpack.c.l.b16 %v1827
    %v3107 = vunpack.c.l.b16 %v1839
    %v3108 = vunpack.c.l.b16 %v1851
    %v3109 = vunpack.c.l.b16 %v1863
    %v3110 = vunpack.c.l.b16 %v1875
    %v3111 = vunpack.c.l.b16 %v1887
    %v3112 = vunpack.c.l.b16 %v1899
    %v3113 = vunpack.c.l.b16 %v1911
    %v3114 = vunpack.c.l.b16 %v1923
    %v3115 = vunpack.c.l.b16 %v1935
    %v3116 = vunpack.c.l.b16 %v1947
    %v3117 = vunpack.c.l.b16 %v1959
    %v3118 = vunpack.c.l.b16 %v1971
    %v3119 = vunpack.c.l.b16 %v1983
    %v3120 = vunpack.c.l.b16 %v1995
    %v3121 = vunpack.c.l.b16 %v2007
    %v3122 = vunpack.c.l.b16 %v2019
    %v3123 = vunpack.c.l.b16 %v2031
    %v3124 = vunpack.c.l.b16 %v2043
    %v3125 = vunpack.c.l.b16 %v2055
    %v3126 = vunpack.c.l.b16 %v2067
    %v3127 = vunpack.c.l.b16 %v2079
    %v3128 = vunpack.c.l.b16 %v2091
    %v3129 = vunpack.c.l.b16 %v2103
    %v3130 = vunpack.c.l.b16 %v2115
    %v3131 = vunpack.c.l.b16 %v2127
    %v3132 = vunpack.c.l.b16 %v2139
    %v3133 = vunpack.c.l.b16 %v2151
    %v3134 = vunpack.c.l.b16 %v2163
    %v3135 = vunpack.c.l.b16 %v2175
    %v3136 = vunpack.c.l.b16 %v2187
    %v3137 = vunpack.c.l.b16 %v2199
    %v3138 = vunpack.c.l.b16 %v2211
    %v3139 = vunpack.c.l.b16 %v2223
    %v3140 = vunpack.c.l.b16 %v2235
    %v3141 = vunpack.c.l.b16 %v2247
    %v3142 = vunpack.c.l.b16 %v2259
    %v3143 = vunpack.c.l.b16 %v2271
    %v3144 = vunpack.c.l.b16 %v2283
    %v3145 = vunpack.c.l.b16 %v2295
    %v3146 = vunpack.c.l.b16 %v2307
    %v3147 = vunpack.c.l.b16 %v2319
    %v3148 = vunpack.c.l.b16 %v2331
    %v3149 = vunpack.c.l.b16 %v2343
    %v3150 = vunpack.c.l.b16 %v2355
    %v3151 = vunpack.c.l.b16 %v2367
    %v3152 = vunpack.c.l.b16 %v2379
    %v3153 = vunpack.c.l.b16 %v2391
    %v3154 = vunpack.c.l.b16 %v2403
    %v3155 = vunpack.c.l.b16 %v2415
    %v3156 = vunpack.c.l.b16 %v2427
    %v3157 = vunpack.c.l.b16 %v2439
    %v3158 = vunpack.c.l.b16 %v2451
    %v3159 = vunpack.c.l.b16 %v2463
    %v3160 = vunpack.c.l.b16 %v2475
    %v3161 = vunpack.c.l.b16 %v2487
    %v3162 = vunpack.c.l.b16 %v2499
    %v3163 = vunpack.c.l.b16 %v2511
    %v3164 = vunpack.c.l.b16 %v2523
    %v3165 = vunpack.c.l.b16 %v2535
    %v3166 = vunpack.c.l.b16 %v2547
    %v3167 = vunpack.c.l.b16 %v2559
    %v3168 = vunpack.c.l.b16 %v2571
    %v3169 = vunpack.c.l.b16 %v2583
    %v3170 = vunpack.c.l.b16 %v2595
    %v3171 = vunpack.c.l.b16 %v2607
    %v3172 = vunpack.c.l.b16 %v2619
    %v3173 = vunpack.c.l.b16 %v2631
    %v3174 = vunpack.c.l.b16 %v2643
    %v3175 = vunpack.c.l.b16 %v2655
    %v3176 = vunpack.c.l.b16 %v2667
    %v3177 = vunpack.c.l.b16 %v2679
    %v3178 = vunpack.c.l.b16 %v2691
    %v3179 = vunpack.c.l.b16 %v2703
    %v3180 = vunpack.c.l.b16 %v2715
    %v3181 = vunpack.c.l.b16 %v2727
    %v3182 = vunpack.c.l.b16 %v2739
    %v3183 = vunpack.c.l.b16 %v2751
    %v3184 = vunpack.c.l.b16 %v2763
    %v3185 = vunpack.c.l.b16 %v2775
    %v3186 = vunpack.c.l.b16 %v2787
    %v3187 = vunpack.c.l.b16 %v2799
    %v3188 = vunpack.c.l.b16 %v2811
    %v3189 = vunpack.c.l.b16 %v2823
    %v3190 = vunpack.c.l.b16 %v2835
    %v3191 = vunpack.c.l.b16 %v2847
    %v3192 = vunpack.c.l.b16 %v2859
    %v3193 = vunpack.c.l.b16 %v2871
    %v3194 = vunpack.c.l.b16 %v2883
    %v3195 = vunpack.c.l.b16 %v2895
    %v3196 = vunpack.c.l.b16 %v2907
    %v3197 = vunpack.c.l.b16 %v2919
    %v3198 = vunpack.c.l.b16 %v2931
    %v3199 = vunpack.c.l.b16 %v2943
    %v3200 = vpack.c.b16 %v3073, %v3072
    %v3201 = vpack.c.b16 %v3075, %v3074
    %v3202 = vpack.c.b16 %v3077, %v3076
    %v3203 = vpack.c.b16 %v3079, %v3078
    %v3204 = vpack.c.b16 %v3081, %v3080
    %v3205 = vpack.c.b16 %v3083, %v3082
    %v3206 = vpack.c.b16 %v3085, %v3084
    %v3207 = vpack.c.b16 %v3087, %v3086
    %v3208 = vpack.c.b16 %v3089, %v3088
    %v3209 = vpack.c.b16 %v3091, %v3090
    %v3210 = vpack.c.b16 %v3093, %v3092
    %v3211 = vpack.c.b16 %v3095, %v3094
    %v3212 = vpack.c.b16 %v3097, %v3096
    %v3213 = vpack.c.b16 %v3099, %v3098
    %v3214 = vpack.c.b16 %v3101, %v3100
    %v3215 = vpack.c.b16 %v3103, %v3102
    %v3216 = vpack.c.b16 %v3105, %v3104
    %v3217 = vpack.c.b16 %v3107, %v3106
    %v3218 = vpack.c.b16 %v3109, %v3108
    %v3219 = vpack.c.b16 %v3111, %v3110
    %v3220 = vpack.c.b16 %v3113, %v3112
    %v3221 = vpack.c.b16 %v3115, %v3114
    %v3222 = vpack.c.b16 %v3117, %v3116
    %v3223 = vpack.c.b16 %v3119, %v3118
    %v3224 = vpack.c.b16 %v3121, %v3120
    %v3225 = vpack.c.b16 %v3123, %v3122
    %v3226 = vpack.c.b16 %v3125, %v3124
    %v3227 = vpack.c.b16 %v3127, %v3126
    %v3228 = vpack.c.b16 %v3129, %v3128
    %v3229 = vpack.c.b16 %v3131, %v3130
    %v3230 = vpack.c.b16 %v3133, %v3132
    %v3231 = vpack.c.b16 %v3135, %v3134
    %v3232 = vpack.c.b16 %v3137, %v3136
    %v3233 = vpack.c.b16 %v3139, %v3138
    %v3234 = vpack.c.b16 %v3141, %v3140
    %v3235 = vpack.c.b16 %v3143, %v3142
    %v3236 = vpack.c.b16 %v3145, %v3144
    %v3237 = vpack.c.b16 %v3147, %v3146
    %v3238 = vpack.c.b16 %v3149, %v3148
    %v3239 = vpack.c.b16 %v3151, %v3150
    %v3240 = vpack.c.b16 %v3153, %v3152
    %v3241 = vpack.c.b16 %v3155, %v3154
    %v3242 = vpack.c.b16 %v3157, %v3156
    %v3243 = vpack.c.b16 %v3159, %v3158
    %v3244 = vpack.c.b16 %v3161, %v3160
    %v3245 = vpack.c.b16 %v3163, %v3162
    %v3246 = vpack.c.b16 %v3165, %v3164
    %v3247 = vpack.c.b16 %v3167, %v3166
    %v3248 = vpack.c.b16 %v3169, %v3168
    %v3249 = vpack.c.b16 %v3171, %v3170
    %v3250 = vpack.c.b16 %v3173, %v3172
    %v3251 = vpack.c.b16 %v3175, %v3174
    %v3252 = vpack.c.b16 %v3177, %v3176
    %v3253 = vpack.c.b16 %v3179, %v3178
    %v3254 = vpack.c.b16 %v3181, %v3180
    %v3255 = vpack.c.b16 %v3183, %v3182
    %v3256 = vpack.c.b16 %v3185, %v3184
    %v3257 = vpack.c.b16 %v3187, %v3186
    %v3258 = vpack.c.b16 %v3189, %v3188
    %v3259 = vpack.c.b16 %v3191, %v3190
    %v3260 = vpack.c.b16 %v3193, %v3192
    %v3261 = vpack.c.b16 %v3195, %v3194
    %v3262 = vpack.c.b16 %v3197, %v3196
    %v3263 = vpack.c.b16 %v3199, %v3198
    %v3328 = vadd.bf16 %v1344, %v3200
    %v3329 = vadd.bf16 %v1345, %v3201
    %v3330 = vadd.bf16 %v1346, %v3202
    %v3331 = vadd.bf16 %v1347, %v3203
    %v3332 = vadd.bf16 %v1348, %v3204
    %v3333 = vadd.bf16 %v1349, %v3205
    %v3334 = vadd.bf16 %v1350, %v3206
    %v3335 = vadd.bf16 %v1351, %v3207
    %v3336 = vadd.bf16 %v1352, %v3208
    %v3337 = vadd.bf16 %v1353, %v3209
    %v3338 = vadd.bf16 %v1354, %v3210
    %v3339 = vadd.bf16 %v1355, %v3211
    %v3340 = vadd.bf16 %v1356, %v3212
    %v3341 = vadd.bf16 %v1357, %v3213
    %v3342 = vadd.bf16 %v1358, %v3214
    %v3343 = vadd.bf16 %v1359, %v3215
    %v3344 = vadd.bf16 %v1360, %v3216
    %v3345 = vadd.bf16 %v1361, %v3217
    %v3346 = vadd.bf16 %v1362, %v3218
    %v3347 = vadd.bf16 %v1363, %v3219
    %v3348 = vadd.bf16 %v1364, %v3220
    %v3349 = vadd.bf16 %v1365, %v3221
    %v3350 = vadd.bf16 %v1366, %v3222
    %v3351 = vadd.bf16 %v1367, %v3223
    %v3352 = vadd.bf16 %v1368, %v3224
    %v3353 = vadd.bf16 %v1369, %v3225
    %v3354 = vadd.bf16 %v1370, %v3226
    %v3355 = vadd.bf16 %v1371, %v3227
    %v3356 = vadd.bf16 %v1372, %v3228
    %v3357 = vadd.bf16 %v1373, %v3229
    %v3358 = vadd.bf16 %v1374, %v3230
    %v3359 = vadd.bf16 %v1375, %v3231
    %v3360 = vadd.bf16 %v1376, %v3232
    %v3361 = vadd.bf16 %v1377, %v3233
    %v3362 = vadd.bf16 %v1378, %v3234
    %v3363 = vadd.bf16 %v1379, %v3235
    %v3364 = vadd.bf16 %v1380, %v3236
    %v3365 = vadd.bf16 %v1381, %v3237
    %v3366 = vadd.bf16 %v1382, %v3238
    %v3367 = vadd.bf16 %v1383, %v3239
    %v3368 = vadd.bf16 %v1384, %v3240
    %v3369 = vadd.bf16 %v1385, %v3241
    %v3370 = vadd.bf16 %v1386, %v3242
    %v3371 = vadd.bf16 %v1387, %v3243
    %v3372 = vadd.bf16 %v1388, %v3244
    %v3373 = vadd.bf16 %v1389, %v3245
    %v3374 = vadd.bf16 %v1390, %v3246
    %v3375 = vadd.bf16 %v1391, %v3247
    %v3376 = vadd.bf16 %v1392, %v3248
    %v3377 = vadd.bf16 %v1393, %v3249
    %v3378 = vadd.bf16 %v1394, %v3250
    %v3379 = vadd.bf16 %v1395, %v3251
    %v3380 = vadd.bf16 %v1396, %v3252
    %v3381 = vadd.bf16 %v1397, %v3253
    %v3382 = vadd.bf16 %v1398, %v3254
    %v3383 = vadd.bf16 %v1399, %v3255
    %v3384 = vadd.bf16 %v1400, %v3256
    %v3385 = vadd.bf16 %v1401, %v3257
    %v3386 = vadd.bf16 %v1402, %v3258
    %v3387 = vadd.bf16 %v1403, %v3259
    %v3388 = vadd.bf16 %v1404, %v3260
    %v3389 = vadd.bf16 %v1405, %v3261
    %v3390 = vadd.bf16 %v1406, %v3262
    %v3391 = vadd.bf16 %v1407, %v3263
    %vm3392 = vcmp.gt.bf16.partialorder %v3328, 0
    %vm3393 = vcmp.gt.bf16.partialorder %v3329, 0
    %vm3394 = vcmp.gt.bf16.partialorder %v3330, 0
    %vm3395 = vcmp.gt.bf16.partialorder %v3331, 0
    %vm3396 = vcmp.gt.bf16.partialorder %v3332, 0
    %vm3397 = vcmp.gt.bf16.partialorder %v3333, 0
    %vm3398 = vcmp.gt.bf16.partialorder %v3334, 0
    %vm3399 = vcmp.gt.bf16.partialorder %v3335, 0
    %vm3400 = vcmp.gt.bf16.partialorder %v3336, 0
    %vm3401 = vcmp.gt.bf16.partialorder %v3337, 0
    %vm3402 = vcmp.gt.bf16.partialorder %v3338, 0
    %vm3403 = vcmp.gt.bf16.partialorder %v3339, 0
    %vm3404 = vcmp.gt.bf16.partialorder %v3340, 0
    %vm3405 = vcmp.gt.bf16.partialorder %v3341, 0
    %vm3406 = vcmp.gt.bf16.partialorder %v3342, 0
    %vm3407 = vcmp.gt.bf16.partialorder %v3343, 0
    %vm3408 = vcmp.gt.bf16.partialorder %v3344, 0
    %vm3409 = vcmp.gt.bf16.partialorder %v3345, 0
    %vm3410 = vcmp.gt.bf16.partialorder %v3346, 0
    %vm3411 = vcmp.gt.bf16.partialorder %v3347, 0
    %vm3412 = vcmp.gt.bf16.partialorder %v3348, 0
    %vm3413 = vcmp.gt.bf16.partialorder %v3349, 0
    %vm3414 = vcmp.gt.bf16.partialorder %v3350, 0
    %vm3415 = vcmp.gt.bf16.partialorder %v3351, 0
    %vm3416 = vcmp.gt.bf16.partialorder %v3352, 0
    %vm3417 = vcmp.gt.bf16.partialorder %v3353, 0
    %vm3418 = vcmp.gt.bf16.partialorder %v3354, 0
    %vm3419 = vcmp.gt.bf16.partialorder %v3355, 0
    %vm3420 = vcmp.gt.bf16.partialorder %v3356, 0
    %vm3421 = vcmp.gt.bf16.partialorder %v3357, 0
    %vm3422 = vcmp.gt.bf16.partialorder %v3358, 0
    %vm3423 = vcmp.gt.bf16.partialorder %v3359, 0
    %vm3424 = vcmp.gt.bf16.partialorder %v3360, 0
    %vm3425 = vcmp.gt.bf16.partialorder %v3361, 0
    %vm3426 = vcmp.gt.bf16.partialorder %v3362, 0
    %vm3427 = vcmp.gt.bf16.partialorder %v3363, 0
    %vm3428 = vcmp.gt.bf16.partialorder %v3364, 0
    %vm3429 = vcmp.gt.bf16.partialorder %v3365, 0
    %vm3430 = vcmp.gt.bf16.partialorder %v3366, 0
    %vm3431 = vcmp.gt.bf16.partialorder %v3367, 0
    %vm3432 = vcmp.gt.bf16.partialorder %v3368, 0
    %vm3433 = vcmp.gt.bf16.partialorder %v3369, 0
    %vm3434 = vcmp.gt.bf16.partialorder %v3370, 0
    %vm3435 = vcmp.gt.bf16.partialorder %v3371, 0
    %vm3436 = vcmp.gt.bf16.partialorder %v3372, 0
    %vm3437 = vcmp.gt.bf16.partialorder %v3373, 0
    %vm3438 = vcmp.gt.bf16.partialorder %v3374, 0
    %vm3439 = vcmp.gt.bf16.partialorder %v3375, 0
    %vm3440 = vcmp.gt.bf16.partialorder %v3376, 0
    %vm3441 = vcmp.gt.bf16.partialorder %v3377, 0
    %vm3442 = vcmp.gt.bf16.partialorder %v3378, 0
    %vm3443 = vcmp.gt.bf16.partialorder %v3379, 0
    %vm3444 = vcmp.gt.bf16.partialorder %v3380, 0
    %vm3445 = vcmp.gt.bf16.partialorder %v3381, 0
    %vm3446 = vcmp.gt.bf16.partialorder %v3382, 0
    %vm3447 = vcmp.gt.bf16.partialorder %v3383, 0
    %vm3448 = vcmp.gt.bf16.partialorder %v3384, 0
    %vm3449 = vcmp.gt.bf16.partialorder %v3385, 0
    %vm3450 = vcmp.gt.bf16.partialorder %v3386, 0
    %vm3451 = vcmp.gt.bf16.partialorder %v3387, 0
    %vm3452 = vcmp.gt.bf16.partialorder %v3388, 0
    %vm3453 = vcmp.gt.bf16.partialorder %v3389, 0
    %vm3454 = vcmp.gt.bf16.partialorder %v3390, 0
    %vm3455 = vcmp.gt.bf16.partialorder %v3391, 0
    %v3457 = vmul.bf16 %v3328, 1069105081
    %v3458 = vpow.bf16.pop %v3457
    %v3460 = vmul.bf16 %v3329, 1069105081
    %v3461 = vpow.bf16.pop %v3460
    %v3463 = vmul.bf16 %v3330, 1069105081
    %v3464 = vpow.bf16.pop %v3463
    %v3466 = vmul.bf16 %v3331, 1069105081
    %v3467 = vpow.bf16.pop %v3466
    %v3469 = vmul.bf16 %v3332, 1069105081
    %v3470 = vpow.bf16.pop %v3469
    %v3472 = vmul.bf16 %v3333, 1069105081
    %v3473 = vpow.bf16.pop %v3472
    %v3475 = vmul.bf16 %v3334, 1069105081
    %v3476 = vpow.bf16.pop %v3475
    %v3478 = vmul.bf16 %v3335, 1069105081
    %v3479 = vpow.bf16.pop %v3478
    %v3481 = vmul.bf16 %v3336, 1069105081
    %v3482 = vpow.bf16.pop %v3481
    %v3484 = vmul.bf16 %v3337, 1069105081
    %v3485 = vpow.bf16.pop %v3484
    %v3487 = vmul.bf16 %v3338, 1069105081
    %v3488 = vpow.bf16.pop %v3487
    %v3490 = vmul.bf16 %v3339, 1069105081
    %v3491 = vpow.bf16.pop %v3490
    %v3493 = vmul.bf16 %v3340, 1069105081
    %v3494 = vpow.bf16.pop %v3493
    %v3496 = vmul.bf16 %v3341, 1069105081
    %v3497 = vpow.bf16.pop %v3496
    %v3499 = vmul.bf16 %v3342, 1069105081
    %v3500 = vpow.bf16.pop %v3499
    %v3502 = vmul.bf16 %v3343, 1069105081
    %v3503 = vpow.bf16.pop %v3502
    %v3505 = vmul.bf16 %v3344, 1069105081
    %v3506 = vpow.bf16.pop %v3505
    %v3508 = vmul.bf16 %v3345, 1069105081
    %v3509 = vpow.bf16.pop %v3508
    %v3511 = vmul.bf16 %v3346, 1069105081
    %v3512 = vpow.bf16.pop %v3511
    %v3514 = vmul.bf16 %v3347, 1069105081
    %v3515 = vpow.bf16.pop %v3514
    %v3517 = vmul.bf16 %v3348, 1069105081
    %v3518 = vpow.bf16.pop %v3517
    %v3520 = vmul.bf16 %v3349, 1069105081
    %v3521 = vpow.bf16.pop %v3520
    %v3523 = vmul.bf16 %v3350, 1069105081
    %v3524 = vpow.bf16.pop %v3523
    %v3526 = vmul.bf16 %v3351, 1069105081
    %v3527 = vpow.bf16.pop %v3526
    %v3529 = vmul.bf16 %v3352, 1069105081
    %v3530 = vpow.bf16.pop %v3529
    %v3532 = vmul.bf16 %v3353, 1069105081
    %v3533 = vpow.bf16.pop %v3532
    %v3535 = vmul.bf16 %v3354, 1069105081
    %v3536 = vpow.bf16.pop %v3535
    %v3538 = vmul.bf16 %v3355, 1069105081
    %v3539 = vpow.bf16.pop %v3538
    %v3541 = vmul.bf16 %v3356, 1069105081
    %v3542 = vpow.bf16.pop %v3541
    %v3544 = vmul.bf16 %v3357, 1069105081
    %v3545 = vpow.bf16.pop %v3544
    %v3547 = vmul.bf16 %v3358, 1069105081
    %v3548 = vpow.bf16.pop %v3547
    %v3550 = vmul.bf16 %v3359, 1069105081
    %v3551 = vpow.bf16.pop %v3550
    %v3553 = vmul.bf16 %v3360, 1069105081
    %v3554 = vpow.bf16.pop %v3553
    %v3556 = vmul.bf16 %v3361, 1069105081
    %v3557 = vpow.bf16.pop %v3556
    %v3559 = vmul.bf16 %v3362, 1069105081
    %v3560 = vpow.bf16.pop %v3559
    %v3562 = vmul.bf16 %v3363, 1069105081
    %v3563 = vpow.bf16.pop %v3562
    %v3565 = vmul.bf16 %v3364, 1069105081
    %v3566 = vpow.bf16.pop %v3565
    %v3568 = vmul.bf16 %v3365, 1069105081
    %v3569 = vpow.bf16.pop %v3568
    %v3571 = vmul.bf16 %v3366, 1069105081
    %v3572 = vpow.bf16.pop %v3571
    %v3574 = vmul.bf16 %v3367, 1069105081
    %v3575 = vpow.bf16.pop %v3574
    %v3577 = vmul.bf16 %v3368, 1069105081
    %v3578 = vpow.bf16.pop %v3577
    %v3580 = vmul.bf16 %v3369, 1069105081
    %v3581 = vpow.bf16.pop %v3580
    %v3583 = vmul.bf16 %v3370, 1069105081
    %v3584 = vpow.bf16.pop %v3583
    %v3586 = vmul.bf16 %v3371, 1069105081
    %v3587 = vpow.bf16.pop %v3586
    %v3589 = vmul.bf16 %v3372, 1069105081
    %v3590 = vpow.bf16.pop %v3589
    %v3592 = vmul.bf16 %v3373, 1069105081
    %v3593 = vpow.bf16.pop %v3592
    %v3595 = vmul.bf16 %v3374, 1069105081
    %v3596 = vpow.bf16.pop %v3595
    %v3598 = vmul.bf16 %v3375, 1069105081
    %v3599 = vpow.bf16.pop %v3598
    %v3601 = vmul.bf16 %v3376, 1069105081
    %v3602 = vpow.bf16.pop %v3601
    %v3604 = vmul.bf16 %v3377, 1069105081
    %v3605 = vpow.bf16.pop %v3604
    %v3607 = vmul.bf16 %v3378, 1069105081
    %v3608 = vpow.bf16.pop %v3607
    %v3610 = vmul.bf16 %v3379, 1069105081
    %v3611 = vpow.bf16.pop %v3610
    %v3613 = vmul.bf16 %v3380, 1069105081
    %v3614 = vpow.bf16.pop %v3613
    %v3616 = vmul.bf16 %v3381, 1069105081
    %v3617 = vpow.bf16.pop %v3616
    %v3619 = vmul.bf16 %v3382, 1069105081
    %v3620 = vpow.bf16.pop %v3619
    %v3622 = vmul.bf16 %v3383, 1069105081
    %v3623 = vpow.bf16.pop %v3622
    %v3625 = vmul.bf16 %v3384, 1069105081
    %v3626 = vpow.bf16.pop %v3625
    %v3628 = vmul.bf16 %v3385, 1069105081
    %v3629 = vpow.bf16.pop %v3628
    %v3631 = vmul.bf16 %v3386, 1069105081
    %v3632 = vpow.bf16.pop %v3631
    %v3634 = vmul.bf16 %v3387, 1069105081
    %v3635 = vpow.bf16.pop %v3634
    %v3637 = vmul.bf16 %v3388, 1069105081
    %v3638 = vpow.bf16.pop %v3637
    %v3640 = vmul.bf16 %v3389, 1069105081
    %v3641 = vpow.bf16.pop %v3640
    %v3643 = vmul.bf16 %v3390, 1069105081
    %v3644 = vpow.bf16.pop %v3643
    %v3646 = vmul.bf16 %v3391, 1069105081
    %v3647 = vpow.bf16.pop %v3646
    %v3648 = vsub.bf16 %v3458, 1065369472
    %v3649 = vsub.bf16 %v3461, 1065369472
    %v3650 = vsub.bf16 %v3464, 1065369472
    %v3651 = vsub.bf16 %v3467, 1065369472
    %v3652 = vsub.bf16 %v3470, 1065369472
    %v3653 = vsub.bf16 %v3473, 1065369472
    %v3654 = vsub.bf16 %v3476, 1065369472
    %v3655 = vsub.bf16 %v3479, 1065369472
    %v3656 = vsub.bf16 %v3482, 1065369472
    %v3657 = vsub.bf16 %v3485, 1065369472
    %v3658 = vsub.bf16 %v3488, 1065369472
    %v3659 = vsub.bf16 %v3491, 1065369472
    %v3660 = vsub.bf16 %v3494, 1065369472
    %v3661 = vsub.bf16 %v3497, 1065369472
    %v3662 = vsub.bf16 %v3500, 1065369472
    %v3663 = vsub.bf16 %v3503, 1065369472
    %v3664 = vsub.bf16 %v3506, 1065369472
    %v3665 = vsub.bf16 %v3509, 1065369472
    %v3666 = vsub.bf16 %v3512, 1065369472
    %v3667 = vsub.bf16 %v3515, 1065369472
    %v3668 = vsub.bf16 %v3518, 1065369472
    %v3669 = vsub.bf16 %v3521, 1065369472
    %v3670 = vsub.bf16 %v3524, 1065369472
    %v3671 = vsub.bf16 %v3527, 1065369472
    %v3672 = vsub.bf16 %v3530, 1065369472
    %v3673 = vsub.bf16 %v3533, 1065369472
    %v3674 = vsub.bf16 %v3536, 1065369472
    %v3675 = vsub.bf16 %v3539, 1065369472
    %v3676 = vsub.bf16 %v3542, 1065369472
    %v3677 = vsub.bf16 %v3545, 1065369472
    %v3678 = vsub.bf16 %v3548, 1065369472
    %v3679 = vsub.bf16 %v3551, 1065369472
    %v3680 = vsub.bf16 %v3554, 1065369472
    %v3681 = vsub.bf16 %v3557, 1065369472
    %v3682 = vsub.bf16 %v3560, 1065369472
    %v3683 = vsub.bf16 %v3563, 1065369472
    %v3684 = vsub.bf16 %v3566, 1065369472
    %v3685 = vsub.bf16 %v3569, 1065369472
    %v3686 = vsub.bf16 %v3572, 1065369472
    %v3687 = vsub.bf16 %v3575, 1065369472
    %v3688 = vsub.bf16 %v3578, 1065369472
    %v3689 = vsub.bf16 %v3581, 1065369472
    %v3690 = vsub.bf16 %v3584, 1065369472
    %v3691 = vsub.bf16 %v3587, 1065369472
    %v3692 = vsub.bf16 %v3590, 1065369472
    %v3693 = vsub.bf16 %v3593, 1065369472
    %v3694 = vsub.bf16 %v3596, 1065369472
    %v3695 = vsub.bf16 %v3599, 1065369472
    %v3696 = vsub.bf16 %v3602, 1065369472
    %v3697 = vsub.bf16 %v3605, 1065369472
    %v3698 = vsub.bf16 %v3608, 1065369472
    %v3699 = vsub.bf16 %v3611, 1065369472
    %v3700 = vsub.bf16 %v3614, 1065369472
    %v3701 = vsub.bf16 %v3617, 1065369472
    %v3702 = vsub.bf16 %v3620, 1065369472
    %v3703 = vsub.bf16 %v3623, 1065369472
    %v3704 = vsub.bf16 %v3626, 1065369472
    %v3705 = vsub.bf16 %v3629, 1065369472
    %v3706 = vsub.bf16 %v3632, 1065369472
    %v3707 = vsub.bf16 %v3635, 1065369472
    %v3708 = vsub.bf16 %v3638, 1065369472
    %v3709 = vsub.bf16 %v3641, 1065369472
    %v3710 = vsub.bf16 %v3644, 1065369472
    %v3711 = vsub.bf16 %v3647, 1065369472
    %v3712 = vsel %vm3392, %v3328, %v3648
    %v3713 = vsel %vm3393, %v3329, %v3649
    %v3714 = vsel %vm3394, %v3330, %v3650
    %v3715 = vsel %vm3395, %v3331, %v3651
    %v3716 = vsel %vm3396, %v3332, %v3652
    %v3717 = vsel %vm3397, %v3333, %v3653
    %v3718 = vsel %vm3398, %v3334, %v3654
    %v3719 = vsel %vm3399, %v3335, %v3655
    %v3720 = vsel %vm3400, %v3336, %v3656
    %v3721 = vsel %vm3401, %v3337, %v3657
    %v3722 = vsel %vm3402, %v3338, %v3658
    %v3723 = vsel %vm3403, %v3339, %v3659
    %v3724 = vsel %vm3404, %v3340, %v3660
    %v3725 = vsel %vm3405, %v3341, %v3661
    %v3726 = vsel %vm3406, %v3342, %v3662
    %v3727 = vsel %vm3407, %v3343, %v3663
    %v3728 = vsel %vm3408, %v3344, %v3664
    %v3729 = vsel %vm3409, %v3345, %v3665
    %v3730 = vsel %vm3410, %v3346, %v3666
    %v3731 = vsel %vm3411, %v3347, %v3667
    %v3732 = vsel %vm3412, %v3348, %v3668
    %v3733 = vsel %vm3413, %v3349, %v3669
    %v3734 = vsel %vm3414, %v3350, %v3670
    %v3735 = vsel %vm3415, %v3351, %v3671
    %v3736 = vsel %vm3416, %v3352, %v3672
    %v3737 = vsel %vm3417, %v3353, %v3673
    %v3738 = vsel %vm3418, %v3354, %v3674
    %v3739 = vsel %vm3419, %v3355, %v3675
    %v3740 = vsel %vm3420, %v3356, %v3676
    %v3741 = vsel %vm3421, %v3357, %v3677
    %v3742 = vsel %vm3422, %v3358, %v3678
    %v3743 = vsel %vm3423, %v3359, %v3679
    %v3744 = vsel %vm3424, %v3360, %v3680
    %v3745 = vsel %vm3425, %v3361, %v3681
    %v3746 = vsel %vm3426, %v3362, %v3682
    %v3747 = vsel %vm3427, %v3363, %v3683
    %v3748 = vsel %vm3428, %v3364, %v3684
    %v3749 = vsel %vm3429, %v3365, %v3685
    %v3750 = vsel %vm3430, %v3366, %v3686
    %v3751 = vsel %vm3431, %v3367, %v3687
    %v3752 = vsel %vm3432, %v3368, %v3688
    %v3753 = vsel %vm3433, %v3369, %v3689
    %v3754 = vsel %vm3434, %v3370, %v3690
    %v3755 = vsel %vm3435, %v3371, %v3691
    %v3756 = vsel %vm3436, %v3372, %v3692
    %v3757 = vsel %vm3437, %v3373, %v3693
    %v3758 = vsel %vm3438, %v3374, %v3694
    %v3759 = vsel %vm3439, %v3375, %v3695
    %v3760 = vsel %vm3440, %v3376, %v3696
    %v3761 = vsel %vm3441, %v3377, %v3697
    %v3762 = vsel %vm3442, %v3378, %v3698
    %v3763 = vsel %vm3443, %v3379, %v3699
    %v3764 = vsel %vm3444, %v3380, %v3700
    %v3765 = vsel %vm3445, %v3381, %v3701
    %v3766 = vsel %vm3446, %v3382, %v3702
    %v3767 = vsel %vm3447, %v3383, %v3703
    %v3768 = vsel %vm3448, %v3384, %v3704
    %v3769 = vsel %vm3449, %v3385, %v3705
    %v3770 = vsel %vm3450, %v3386, %v3706
    %v3771 = vsel %vm3451, %v3387, %v3707
    %v3772 = vsel %vm3452, %v3388, %v3708
    %v3773 = vsel %vm3453, %v3389, %v3709
    %v3774 = vsel %vm3454, %v3390, %v3710
    %v3775 = vsel %vm3455, %v3391, %v3711
    %v3776 = vld [vmem:[%s3] sm:$0xff]
    %v3777 = vld [vmem:[#allocation2] sm:$0x1]
    %v3779 = vcombine.high %v3776, %v3776
    %v3781 = vunpack.c.l.s4 1966171168
    %v3782 = vunpack.c.0.s8 %v3781
    %v3783 = vlaneseq
    %v3784 = vshrl.u32 %v3783, 7
    %v3785 = vsub.s32 %v3782, %v3784
    %v3786 = vrot.slane %v3776, %v3785
    %v3788 = vunpack.c.l.s4 1966171168
    %v3789 = vunpack.c.0.s8 %v3788
    %v3790 = vlaneseq
    %v3791 = vshrl.u32 %v3790, 7
    %v3792 = vsub.s32 %v3789, %v3791
    %v3793 = vrot.slane %v3779, %v3792
    %v3794 = vcombine.high %v3786, %v3786
    %v3795 = vcombine.high %v3793, %v3793
    %v3797 = vunpack.c.l.s4 1966171168
    %v3798 = vunpack.c.0.s8 %v3797
    %v3799 = vlaneseq
    %v3800 = vshrl.u32 %v3799, 7
    %v3801 = vsub.s32 %v3798, %v3800
    %v3802 = vrot.slane %v3786, %v3801
    %v3804 = vunpack.c.l.s4 1966171168
    %v3805 = vunpack.c.0.s8 %v3804
    %v3806 = vlaneseq
    %v3807 = vshrl.u32 %v3806, 7
    %v3808 = vsub.s32 %v3805, %v3807
    %v3809 = vrot.slane %v3793, %v3808
    %v3811 = vunpack.c.l.s4 1966171168
    %v3812 = vunpack.c.0.s8 %v3811
    %v3813 = vlaneseq
    %v3814 = vshrl.u32 %v3813, 7
    %v3815 = vsub.s32 %v3812, %v3814
    %v3816 = vrot.slane %v3794, %v3815
    %v3818 = vunpack.c.l.s4 1966171168
    %v3819 = vunpack.c.0.s8 %v3818
    %v3820 = vlaneseq
    %v3821 = vshrl.u32 %v3820, 7
    %v3822 = vsub.s32 %v3819, %v3821
    %v3823 = vrot.slane %v3795, %v3822
    %v3824 = vcombine.high %v3802, %v3802
    %v3825 = vcombine.high %v3809, %v3809
    %v3826 = vcombine.high %v3816, %v3816
    %v3827 = vcombine.high %v3823, %v3823
    %3836 = vmatprep.subr.bf16.mxu0 0
    %3837 = vmatpush1.bf16.msra.mxu0 %v3712
    %3838 = vmatprep.subr.bf16.mxu0 0
    %3839 = vmatpush1.bf16.msra.mxu0 %v3713
    %3840 = vmatprep.subr.bf16.mxu0 0
    %3841 = vmatpush1.bf16.msra.mxu0 %v3714
    %3842 = vmatprep.subr.bf16.mxu0 0
    %3843 = vmatpush1.bf16.msra.mxu0 %v3715
    %3844 = vmatprep.subr.bf16.mxu0 0
    %3845 = vmatpush1.bf16.msra.mxu0 %v3716
    %3846 = vmatprep.subr.bf16.mxu0 0
    %3847 = vmatpush1.bf16.msra.mxu0 %v3717
    %3848 = vmatprep.subr.bf16.mxu0 0
    %3849 = vmatpush1.bf16.msra.mxu0 %v3718
    %3850 = vmatprep.subr.bf16.mxu0 0
    %3851 = vmatpush1.bf16.msra.mxu0 %v3719
    %3852 = vmatprep.subr.bf16.mxu0 0
    %3853 = vmatpush1.bf16.msra.mxu0 %v3720
    %3854 = vmatprep.subr.bf16.mxu0 0
    %3855 = vmatpush1.bf16.msra.mxu0 %v3721
    %3856 = vmatprep.subr.bf16.mxu0 0
    %3857 = vmatpush1.bf16.msra.mxu0 %v3722
    %3858 = vmatprep.subr.bf16.mxu0 0
    %3859 = vmatpush1.bf16.msra.mxu0 %v3723
    %3860 = vmatprep.subr.bf16.mxu0 0
    %3861 = vmatpush1.bf16.msra.mxu0 %v3724
    %3862 = vmatprep.subr.bf16.mxu0 0
    %3863 = vmatpush1.bf16.msra.mxu0 %v3725
    %3864 = vmatprep.subr.bf16.mxu0 0
    %3865 = vmatpush1.bf16.msra.mxu0 %v3726
    %3866 = vmatprep.subr.bf16.mxu0 0
    %3867 = vmatpush1.bf16.msra.mxu0 %v3727
    %3868 = vmatprep.mubr.bf16.mxu0 %v3816
    %3869 = vmatmul.mubr.bf16.gmra.mrb[0].mxu0 %v3802
    %v3870 = vpop.f32.mrb[0].mxu0
    %v3871 = vadd.f32 0.0, %v3870
    %v3872 = vpop.f32.mrb[0].mxu0
    %v3873 = vpop.f32.mrb[0].mxu0
    %v3874 = vpop.f32.mrb[0].mxu0
    %3875 = vdwg.mxu0
    %3876 = vmatprep.subr.bf16.mxu0 0
    %3877 = vmatpush1.bf16.msra.mxu0 %v3728
    %3878 = vmatprep.subr.bf16.mxu0 0
    %3879 = vmatpush1.bf16.msra.mxu0 %v3729
    %3880 = vmatprep.subr.bf16.mxu0 0
    %3881 = vmatpush1.bf16.msra.mxu0 %v3730
    %3882 = vmatprep.subr.bf16.mxu0 0
    %3883 = vmatpush1.bf16.msra.mxu0 %v3731
    %3884 = vmatprep.subr.bf16.mxu0 0
    %3885 = vmatpush1.bf16.msra.mxu0 %v3732
    %3886 = vmatprep.subr.bf16.mxu0 0
    %3887 = vmatpush1.bf16.msra.mxu0 %v3733
    %3888 = vmatprep.subr.bf16.mxu0 0
    %3889 = vmatpush1.bf16.msra.mxu0 %v3734
    %3890 = vmatprep.subr.bf16.mxu0 0
    %3891 = vmatpush1.bf16.msra.mxu0 %v3735
    %3892 = vmatprep.subr.bf16.mxu0 0
    %3893 = vmatpush1.bf16.msra.mxu0 %v3736
    %3894 = vmatprep.subr.bf16.mxu0 0
    %3895 = vmatpush1.bf16.msra.mxu0 %v3737
    %3896 = vmatprep.subr.bf16.mxu0 0
    %3897 = vmatpush1.bf16.msra.mxu0 %v3738
    %3898 = vmatprep.subr.bf16.mxu0 0
    %3899 = vmatpush1.bf16.msra.mxu0 %v3739
    %3900 = vmatprep.subr.bf16.mxu0 0
    %3901 = vmatpush1.bf16.msra.mxu0 %v3740
    %3902 = vmatprep.subr.bf16.mxu0 0
    %3903 = vmatpush1.bf16.msra.mxu0 %v3741
    %3904 = vmatprep.subr.bf16.mxu0 0
    %3905 = vmatpush1.bf16.msra.mxu0 %v3742
    %3906 = vmatprep.subr.bf16.mxu0 0
    %3907 = vmatpush1.bf16.msra.mxu0 %v3743
    %3908 = vmatprep.mubr.bf16.mxu0 %v3826
    %3909 = vmatmul.mubr.bf16.gmra.mrb[0].mxu0 %v3824
    %v3910 = vpop.f32.mrb[0].mxu0
    %v3911 = vadd.f32 %v3871, %v3910
    %v3912 = vpop.f32.mrb[0].mxu0
    %v3913 = vpop.f32.mrb[0].mxu0
    %v3914 = vpop.f32.mrb[0].mxu0
    %3915 = vdwg.mxu0
    %3916 = vmatprep.subr.bf16.mxu0 0
    %3917 = vmatpush1.bf16.msra.mxu0 %v3744
    %3918 = vmatprep.subr.bf16.mxu0 0
    %3919 = vmatpush1.bf16.msra.mxu0 %v3745
    %3920 = vmatprep.subr.bf16.mxu0 0
    %3921 = vmatpush1.bf16.msra.mxu0 %v3746
    %3922 = vmatprep.subr.bf16.mxu0 0
    %3923 = vmatpush1.bf16.msra.mxu0 %v3747
    %3924 = vmatprep.subr.bf16.mxu0 0
    %3925 = vmatpush1.bf16.msra.mxu0 %v3748
    %3926 = vmatprep.subr.bf16.mxu0 0
    %3927 = vmatpush1.bf16.msra.mxu0 %v3749
    %3928 = vmatprep.subr.bf16.mxu0 0
    %3929 = vmatpush1.bf16.msra.mxu0 %v3750
    %3930 = vmatprep.subr.bf16.mxu0 0
    %3931 = vmatpush1.bf16.msra.mxu0 %v3751
    %3932 = vmatprep.subr.bf16.mxu0 0
    %3933 = vmatpush1.bf16.msra.mxu0 %v3752
    %3934 = vmatprep.subr.bf16.mxu0 0
    %3935 = vmatpush1.bf16.msra.mxu0 %v3753
    %3936 = vmatprep.subr.bf16.mxu0 0
    %3937 = vmatpush1.bf16.msra.mxu0 %v3754
    %3938 = vmatprep.subr.bf16.mxu0 0
    %3939 = vmatpush1.bf16.msra.mxu0 %v3755
    %3940 = vmatprep.subr.bf16.mxu0 0
    %3941 = vmatpush1.bf16.msra.mxu0 %v3756
    %3942 = vmatprep.subr.bf16.mxu0 0
    %3943 = vmatpush1.bf16.msra.mxu0 %v3757
    %3944 = vmatprep.subr.bf16.mxu0 0
    %3945 = vmatpush1.bf16.msra.mxu0 %v3758
    %3946 = vmatprep.subr.bf16.mxu0 0
    %3947 = vmatpush1.bf16.msra.mxu0 %v3759
    %3948 = vmatprep.mubr.bf16.mxu0 %v3823
    %3949 = vmatmul.mubr.bf16.gmra.mrb[0].mxu0 %v3809
    %v3950 = vpop.f32.mrb[0].mxu0
    %v3951 = vadd.f32 %v3911, %v3950
    %v3952 = vpop.f32.mrb[0].mxu0
    %v3953 = vpop.f32.mrb[0].mxu0
    %v3954 = vpop.f32.mrb[0].mxu0
    %3955 = vdwg.mxu0
    %3956 = vmatprep.subr.bf16.mxu0 0
    %3957 = vmatpush1.bf16.msra.mxu0 %v3760
    %3958 = vmatprep.subr.bf16.mxu0 0
    %3959 = vmatpush1.bf16.msra.mxu0 %v3761
    %3960 = vmatprep.subr.bf16.mxu0 0
    %3961 = vmatpush1.bf16.msra.mxu0 %v3762
    %3962 = vmatprep.subr.bf16.mxu0 0
    %3963 = vmatpush1.bf16.msra.mxu0 %v3763
    %3964 = vmatprep.subr.bf16.mxu0 0
    %3965 = vmatpush1.bf16.msra.mxu0 %v3764
    %3966 = vmatprep.subr.bf16.mxu0 0
    %3967 = vmatpush1.bf16.msra.mxu0 %v3765
    %3968 = vmatprep.subr.bf16.mxu0 0
    %3969 = vmatpush1.bf16.msra.mxu0 %v3766
    %3970 = vmatprep.subr.bf16.mxu0 0
    %3971 = vmatpush1.bf16.msra.mxu0 %v3767
    %3972 = vmatprep.subr.bf16.mxu0 0
    %3973 = vmatpush1.bf16.msra.mxu0 %v3768
    %3974 = vmatprep.subr.bf16.mxu0 0
    %3975 = vmatpush1.bf16.msra.mxu0 %v3769
    %3976 = vmatprep.subr.bf16.mxu0 0
    %3977 = vmatpush1.bf16.msra.mxu0 %v3770
    %3978 = vmatprep.subr.bf16.mxu0 0
    %3979 = vmatpush1.bf16.msra.mxu0 %v3771
    %3980 = vmatprep.subr.bf16.mxu0 0
    %3981 = vmatpush1.bf16.msra.mxu0 %v3772
    %3982 = vmatprep.subr.bf16.mxu0 0
    %3983 = vmatpush1.bf16.msra.mxu0 %v3773
    %3984 = vmatprep.subr.bf16.mxu0 0
    %3985 = vmatpush1.bf16.msra.mxu0 %v3774
    %3986 = vmatprep.subr.bf16.mxu0 0
    %3987 = vmatpush1.bf16.msra.mxu0 %v3775
    %3988 = vmatprep.mubr.bf16.mxu0 %v3827
    %3989 = vmatmul.mubr.bf16.gmra.mrb[0].mxu0 %v3825
    %v3990 = vpop.f32.mrb[0].mxu0
    %v3991 = vadd.f32 %v3951, %v3990
    %v3992 = vpop.f32.mrb[0].mxu0
    %v3993 = vpop.f32.mrb[0].mxu0
    %v3994 = vpop.f32.mrb[0].mxu0
    %3995 = vdwg.mxu0
    %v3996 = vpack.c.bf16 %v3991, %v3991
    %3998 = vset.pattern.permute.xlu0 0
    %3999 = vperm.xlu0 %3998, %v3777
    %v4000 = vpop.permute.xlu0 %3999
    %v4002 = vlaneseq
    %v4003 = vshrl.u32 %v4002, 7
    %v4004 = vsub.s32 0, %v4003
    %v4005 = vrot.slane %v4000, %v4004
    %v4006 = vadd.bf16 %v3996, %v4005
    %v4007 = vmax.bf16 %v4006, 0
    %v4008 = vunpack.c.l.bf16 %v4007
    %4009 = vst [vmem:[#allocation3] sm:$0x1] %v4008
    // Predicated region
    $region22: #{tpu_custom_call.1} parent=1 // pred_check
      _
    $region23: #{tpu_custom_call.1} parent=1 // pred_check_branch
      %4011 = sbr.rel (0) target = $region25
    $region24: #{tpu_custom_call.1} parent=1 // pred_region
      %s4013 = ssub.s32 16, 16
      %4014 = vsyncadd [#allocation4], %s4013
      %s4016 = sshll.u32 [#allocation3], 4
      %s4017 = int_to_ptr.vmem [resolvable:$true] %s4016
      %4019 = dma.vmem_to_hbm [thread:$0]  %s4017, 16, %s5, [#allocation4]
    $region25: #{tpu_custom_call.1} parent=1 // pred_fallthru
      _
    // Predicated region
    $region26: #{tpu_custom_call.1} parent=1 // pred_check
      _
    $region27: #{tpu_custom_call.1} parent=1 // pred_check_branch
      %4021 = sbr.rel (0) target = $region29
    $region28: #{tpu_custom_call.1} parent=1 // pred_region
      %4022 = dma.done [#allocation4], 16
    $region29: #{tpu_custom_call.1} parent=1 // pred_fallthru
      _
    %4023 = vsyncpa [#allocation4], 1

</llo_original>
